<compile_context>
chip_gen: v6e
topology: v6e:2x2x1
jax: 0.10.0
libtpu: 0.0.40
codegen_flags: <defaults>
</compile_context>

<pallas_src>
import functools

import jax
import jax.numpy as jnp
from jax.experimental import pallas as pl
from jax.experimental.pallas import tpu as pltpu

_MM_DTYPE = jnp.bfloat16  # MXU-native operand dtype; accumulation stays f32.


# ------------------------------- kernel ------------------------------------

def _branch_compute(x, w1, b1, w2m, b2, w3m, b3, n_groups, width):
    """One SingleBranch conv stack on a (n_groups*width, 1) slab of samples.

    Rows are merged (batch, height, width) positions with group = 2*b + h.
    Returns (n_groups*width - width - 6, 128) f32; row 2*b*width + w holds the
    conv3 output for (batch b, out position w).  Rows whose taps cross a group
    boundary are garbage and are skipped by the caller's stores.
    """
    R = n_groups * width
    R1, R2, R3 = R - 2, R - 4, R - width - 6

    # conv1: Cin=1, kernel (1,3)  ->  VPU broadcast-multiply-add, lanes=channels.
    y1 = (x[0:R1, :] * w1[0:1, :]
          + x[1:1 + R1, :] * w1[1:2, :]
          + x[2:2 + R1, :] * w1[2:3, :])
    y1 = jnp.maximum(y1 + b1, 0.0)                           # (R1, 256) f32

    # conv2: kernel (1,3) -> lane-concat im2col (K=768), one big-M MXU matmul.
    p2 = jnp.concatenate([y1[d:d + R2, :] for d in range(3)], axis=1)
    y2 = jnp.dot(p2.astype(_MM_DTYPE), w2m, preferred_element_type=jnp.float32)
    y2 = jnp.maximum(y2 + b2, 0.0)                           # (R2, 256) f32

    # conv3: kernel (2,3) -> 6 taps (K=1536), Cout zero-padded 80->128.
    p3 = jnp.concatenate(
        [y2[dh * width + dw: dh * width + dw + R3, :]
         for dh in range(2) for dw in range(3)], axis=1)
    y3 = jnp.dot(p3.astype(_MM_DTYPE), w3m, preferred_element_type=jnp.float32)
    return jnp.maximum(y3 + b3, 0.0)                         # (R3, 128) f32


def _mlnet_kernel(xiq_ref, xap_ref,
                  iw1, ib1, iw2, ib2, iw3, ib3,
                  aw1, ab1, aw2, ab2, aw3, ab3,
                  snr_ref, iqo_ref, apo_ref,
                  *, tile_b, width):
    groups = 2 * tile_b
    wo3 = width - 6

    yiq = _branch_compute(xiq_ref[...], iw1[...], ib1[...], iw2[...], ib2[...],
                          iw3[...], ib3[...], groups, width)
    yap = _branch_compute(xap_ref[...], aw1[...], ab1[...], aw2[...], ab2[...],
                          aw3[...], ab3[...], groups, width)
    ysnr = yiq + yap                                         # fused torch.add

    for b in range(tile_b):                                  # static unroll
        r0 = 2 * b * width                                   # rows of (b, h=0)
        iqo_ref[b, :, :] = yiq[r0:r0 + wo3, :]
        apo_ref[b, :, :] = yap[r0:r0 + wo3, :]
        snr_ref[b, :, :] = ysnr[r0:r0 + wo3, :]


# ------------------------------ parameters ----------------------------------

def _xavier_uniform_conv(key, shape):
    # MLNet.init_weights: xavier_uniform on Conv2d weights, zero bias.
    cout, cin, kh, kw = shape
    fan_in, fan_out = cin * kh * kw, cout * kh * kw
    bound = (6.0 / (fan_in + fan_out)) ** 0.5
    return jax.random.uniform(key, shape, jnp.float32, -bound, bound)


def init_branch_params(key):
    k1, k2, k3 = jax.random.split(key, 3)
    return {
        "w1": _xavier_uniform_conv(k1, (256, 1, 1, 3)),
        "b1": jnp.zeros((256,), jnp.float32),
        "w2": _xavier_uniform_conv(k2, (256, 256, 1, 3)),
        "b2": jnp.zeros((256,), jnp.float32),
        "w3": _xavier_uniform_conv(k3, (80, 256, 2, 3)),
        "b3": jnp.zeros((80,), jnp.float32),
    }


def _prep_branch(params):
    # Reorder PyTorch (Cout, Cin, kh, kw) weights into the kernel's matrices.
    w1 = jnp.asarray(params["w1"], jnp.float32)[:, 0, 0, :].T        # (3, 256)
    w2 = jnp.asarray(params["w2"], jnp.float32)[:, :, 0, :]          # (co, ci, kw)
    w2m = w2.transpose(2, 1, 0).reshape(3 * 256, 256).astype(_MM_DTYPE)
    w3 = jnp.asarray(params["w3"], jnp.float32)                      # (80,256,2,3)
    w3m = w3.transpose(2, 3, 1, 0).reshape(6 * 256, 80)              # rows=(kh,kw,ci)
    w3m = jnp.pad(w3m, ((0, 0), (0, 128 - 80))).astype(_MM_DTYPE)    # (1536, 128)
    b1 = params["b1"].reshape(1, 256).astype(jnp.float32)
    b2 = params["b2"].reshape(1, 256).astype(jnp.float32)
    b3 = jnp.pad(params["b3"], (0, 128 - 80)).reshape(1, 128).astype(jnp.float32)
    return (w1, b1, w2m, b2, w3m, b3)


# ------------------------------- forward ------------------------------------

def _pick_tile_b(batch, width):
    # Largest batch tile <= 4 that divides B and keeps the (2*tb*W, 1) input
    # block legal (second-minor dim divisible by 8 unless it is the full dim).
    for tb in (4, 2, 1):
        if batch % tb:
            continue
        if tb == batch or (2 * tb * width) % 8 == 0:
            return tb
    return batch


def mlnet_forward(iq_params, ap_params, iqs, aps):
    batch, cin, height, width = iqs.shape
    assert cin == 1 and height == 2 and width >= 7, "MLNet expects (B, 1, 2, W>=7)"
    assert aps.shape == iqs.shape
    wo3 = width - 6
    tile_b = _pick_tile_b(batch, width)
    grid = (batch // tile_b,)

    # Merged-row layout: row = (2*b + h) * W + w  (pure metadata reshape).
    x_iq = iqs.reshape(2 * batch * width, 1).astype(jnp.float32)
    x_ap = aps.reshape(2 * batch * width, 1).astype(jnp.float32)
    iq_w = _prep_branch(iq_params)
    ap_w = _prep_branch(ap_params)

    x_spec = pl.BlockSpec((2 * tile_b * width, 1), lambda i: (i, 0))

    def _const_spec(arr):
        nd = arr.ndim
        return pl.BlockSpec(arr.shape, lambda i, _nd=nd: (0,) * _nd)

    w_specs = [_const_spec(w) for w in (*iq_w, *ap_w)]
    out_spec = pl.BlockSpec((tile_b, wo3, 128), lambda i: (i, 0, 0))
    out_shape = tuple(jax.ShapeDtypeStruct((batch, wo3, 128), jnp.float32)
                      for _ in range(3))

    kernel = functools.partial(_mlnet_kernel, tile_b=tile_b, width=width)
    snr_p, iq_p, ap_p = pl.pallas_call(
        kernel,
        grid=grid,
        in_specs=[x_spec, x_spec, *w_specs],
        out_specs=(out_spec,) * 3,
        out_shape=out_shape,
        compiler_params=pltpu.CompilerParams(
            dimension_semantics=("parallel",),   # v7x: split batch tiles over 2 TCs
            vmem_limit_bytes=32 * 1024 * 1024,   # explicit budget; safe on v7x 64 MiB
        ),
    )(x_iq, x_ap, *iq_w, *ap_w)

    def _to_features(y):
        # (B, Wo3, 128) channel-last/padded -> torch reshape(B, -1) order.
        return y[:, :, :80].transpose(0, 2, 1).reshape(batch, 80 * wo3)

    return [_to_features(snr_p), _to_features(iq_p), _to_features(ap_p)]


# --------------------------- plain-JAX reference -----------------------------

def _reference_forward(iq_params, ap_params, iqs, aps):
    def conv_relu(x, w, b):
        y = jax.lax.conv_general_dilated(
            x, w, window_strides=(1, 1), padding="VALID",
            dimension_numbers=("NCHW", "OIHW", "NCHW"))
        return jnp.maximum(y + b[None, :, None, None], 0.0)

    def branch(p, x):
        x = conv_relu(x, p["w1"], p["b1"])
        x = conv_relu(x, p["w2"], p["b2"])
        x = conv_relu(x, p["w3"], p["b3"])
        return x.reshape(x.shape[0], -1)

    iq_fea = branch(iq_params, iqs)
    ap_fea = branch(ap_params, aps)
    return [iq_fea + ap_fea, iq_fea, ap_fea]


# --------------------------------- main --------------------------------------

if __name__ == "__main__":
    key = jax.random.PRNGKey(0)
    k_iq, k_ap, k_x1, k_x2 = jax.random.split(key, 4)

    iq_params = init_branch_params(k_iq)
    ap_params = init_branch_params(k_ap)

    B, W = 2, 16                                       # NCHW input: (B, 1, 2, W)
    iqs = jax.random.normal(k_x1, (B, 1, 2, W), jnp.float32)
    aps = jax.random.normal(k_x2, (B, 1, 2, W), jnp.float32)

    fwd = jax.jit(functools.partial(mlnet_forward, iq_params, ap_params))
    snr_fea, iq_fea, ap_fea = fwd(iqs, aps)
    jax.block_until_ready((snr_fea, iq_fea, ap_fea))

    assert iq_fea.shape == (B, 80 * (W - 6))
    assert ap_fea.shape == (B, 80 * (W - 6))
    assert snr_fea.shape == (B, 80 * (W - 6))

    # Sanity check against an f32 plain-JAX reference (kernel matmuls are bf16).
    ref_snr, ref_iq, ref_ap = _reference_forward(iq_params, ap_params, iqs, aps)
    for got, ref in ((snr_fea, ref_snr), (iq_fea, ref_iq), (ap_fea, ref_ap)):
        err = float(jnp.max(jnp.abs(got - ref)))
        assert err < 5e-2, f"max abs error {err}"

    print("KERNEL_OK")
</pallas_src>

<mosaic_0001>
module attributes {stable_mosaic.version = 11 : i64} {
  func.func @_mlnet_kernel(%arg0: i32, %arg1: memref<64x1xf32, #tpu.memory_space<vmem>>, %arg2: memref<64x1xf32, #tpu.memory_space<vmem>>, %arg3: memref<3x256xf32, #tpu.memory_space<vmem>>, %arg4: memref<1x256xf32, #tpu.memory_space<vmem>>, %arg5: memref<768x256xbf16, #tpu.memory_space<vmem>>, %arg6: memref<1x256xf32, #tpu.memory_space<vmem>>, %arg7: memref<1536x128xbf16, #tpu.memory_space<vmem>>, %arg8: memref<1x128xf32, #tpu.memory_space<vmem>>, %arg9: memref<3x256xf32, #tpu.memory_space<vmem>>, %arg10: memref<1x256xf32, #tpu.memory_space<vmem>>, %arg11: memref<768x256xbf16, #tpu.memory_space<vmem>>, %arg12: memref<1x256xf32, #tpu.memory_space<vmem>>, %arg13: memref<1536x128xbf16, #tpu.memory_space<vmem>>, %arg14: memref<1x128xf32, #tpu.memory_space<vmem>>, %arg15: memref<2x10x128xf32, #tpu.memory_space<vmem>>, %arg16: memref<2x10x128xf32, #tpu.memory_space<vmem>>, %arg17: memref<2x10x128xf32, #tpu.memory_space<vmem>>) attributes {dimension_semantics = [#tpu.dimension_semantics<parallel>], iteration_bounds = array<i64: 1>, scalar_prefetch = 0 : i64, scratch_operands = 0 : i64, tpu.core_type = #tpu.core_type<tc>, window_params = [{transform_indices = @transform_0, window_bounds = array<i64: 64, 1>}, {transform_indices = @transform_1, window_bounds = array<i64: 64, 1>}, {pipeline_mode = #tpu.pipeline_mode<synchronous>, transform_indices = @transform_2, window_bounds = array<i64: 3, 256>}, {pipeline_mode = #tpu.pipeline_mode<synchronous>, transform_indices = @transform_3, window_bounds = array<i64: 1, 256>}, {pipeline_mode = #tpu.pipeline_mode<synchronous>, transform_indices = @transform_4, window_bounds = array<i64: 768, 256>}, {pipeline_mode = #tpu.pipeline_mode<synchronous>, transform_indices = @transform_5, window_bounds = array<i64: 1, 256>}, {pipeline_mode = #tpu.pipeline_mode<synchronous>, transform_indices = @transform_6, window_bounds = array<i64: 1536, 128>}, {pipeline_mode = #tpu.pipeline_mode<synchronous>, transform_indices = @transform_7, window_bounds = array<i64: 1, 128>}, {pipeline_mode = #tpu.pipeline_mode<synchronous>, transform_indices = @transform_8, window_bounds = array<i64: 3, 256>}, {pipeline_mode = #tpu.pipeline_mode<synchronous>, transform_indices = @transform_9, window_bounds = array<i64: 1, 256>}, {pipeline_mode = #tpu.pipeline_mode<synchronous>, transform_indices = @transform_10, window_bounds = array<i64: 768, 256>}, {pipeline_mode = #tpu.pipeline_mode<synchronous>, transform_indices = @transform_11, window_bounds = array<i64: 1, 256>}, {pipeline_mode = #tpu.pipeline_mode<synchronous>, transform_indices = @transform_12, window_bounds = array<i64: 1536, 128>}, {pipeline_mode = #tpu.pipeline_mode<synchronous>, transform_indices = @transform_13, window_bounds = array<i64: 1, 128>}, {transform_indices = @transform_14, window_bounds = array<i64: 2, 10, 128>}, {transform_indices = @transform_15, window_bounds = array<i64: 2, 10, 128>}, {transform_indices = @transform_16, window_bounds = array<i64: 2, 10, 128>}]} {
    %c0 = arith.constant 0 : index
    %c0_0 = arith.constant 0 : index
    %0 = vector.load %arg1[%c0, %c0_0] : memref<64x1xf32, #tpu.memory_space<vmem>>, vector<64x1xf32>
    %c0_1 = arith.constant 0 : index
    %c0_2 = arith.constant 0 : index
    %1 = vector.load %arg3[%c0_1, %c0_2] : memref<3x256xf32, #tpu.memory_space<vmem>>, vector<3x256xf32>
    %c0_3 = arith.constant 0 : index
    %c0_4 = arith.constant 0 : index
    %2 = vector.load %arg4[%c0_3, %c0_4] : memref<1x256xf32, #tpu.memory_space<vmem>>, vector<1x256xf32>
    %c0_5 = arith.constant 0 : index
    %c0_6 = arith.constant 0 : index
    %3 = vector.load %arg5[%c0_5, %c0_6] : memref<768x256xbf16, #tpu.memory_space<vmem>>, vector<768x256xbf16>
    %c0_7 = arith.constant 0 : index
    %c0_8 = arith.constant 0 : index
    %4 = vector.load %arg6[%c0_7, %c0_8] : memref<1x256xf32, #tpu.memory_space<vmem>>, vector<1x256xf32>
    %c0_9 = arith.constant 0 : index
    %c0_10 = arith.constant 0 : index
    %5 = vector.load %arg7[%c0_9, %c0_10] : memref<1536x128xbf16, #tpu.memory_space<vmem>>, vector<1536x128xbf16>
    %c0_11 = arith.constant 0 : index
    %c0_12 = arith.constant 0 : index
    %6 = vector.load %arg8[%c0_11, %c0_12] : memref<1x128xf32, #tpu.memory_space<vmem>>, vector<1x128xf32>
    %7 = vector.extract_strided_slice %0 {offsets = [0, 0], sizes = [62, 1], strides = [1, 1]} : vector<64x1xf32> to vector<62x1xf32>
    %8 = vector.extract_strided_slice %1 {offsets = [0, 0], sizes = [1, 256], strides = [1, 1]} : vector<3x256xf32> to vector<1x256xf32>
    %9 = vector.broadcast %7 : vector<62x1xf32> to vector<62x256xf32>
    %10 = vector.broadcast %8 : vector<1x256xf32> to vector<62x256xf32>
    %11 = arith.mulf %9, %10 : vector<62x256xf32>
    %12 = vector.extract_strided_slice %0 {offsets = [1, 0], sizes = [62, 1], strides = [1, 1]} : vector<64x1xf32> to vector<62x1xf32>
    %13 = vector.extract_strided_slice %1 {offsets = [1, 0], sizes = [1, 256], strides = [1, 1]} : vector<3x256xf32> to vector<1x256xf32>
    %14 = vector.broadcast %12 : vector<62x1xf32> to vector<62x256xf32>
    %15 = vector.broadcast %13 : vector<1x256xf32> to vector<62x256xf32>
    %16 = arith.mulf %14, %15 : vector<62x256xf32>
    %17 = arith.addf %11, %16 : vector<62x256xf32>
    %18 = vector.extract_strided_slice %0 {offsets = [2, 0], sizes = [62, 1], strides = [1, 1]} : vector<64x1xf32> to vector<62x1xf32>
    %19 = vector.extract_strided_slice %1 {offsets = [2, 0], sizes = [1, 256], strides = [1, 1]} : vector<3x256xf32> to vector<1x256xf32>
    %20 = vector.broadcast %18 : vector<62x1xf32> to vector<62x256xf32>
    %21 = vector.broadcast %19 : vector<1x256xf32> to vector<62x256xf32>
    %22 = arith.mulf %20, %21 : vector<62x256xf32>
    %23 = arith.addf %17, %22 : vector<62x256xf32>
    %24 = vector.broadcast %2 : vector<1x256xf32> to vector<62x256xf32>
    %25 = arith.addf %23, %24 : vector<62x256xf32>
    %cst = arith.constant 0.000000e+00 : f32
    %26 = vector.broadcast %cst : f32 to vector<62x256xf32>
    %27 = arith.maximumf %25, %26 : vector<62x256xf32>
    %28 = vector.extract_strided_slice %27 {offsets = [0, 0], sizes = [60, 256], strides = [1, 1]} : vector<62x256xf32> to vector<60x256xf32>
    %29 = vector.extract_strided_slice %27 {offsets = [1, 0], sizes = [60, 256], strides = [1, 1]} : vector<62x256xf32> to vector<60x256xf32>
    %30 = vector.extract_strided_slice %27 {offsets = [2, 0], sizes = [60, 256], strides = [1, 1]} : vector<62x256xf32> to vector<60x256xf32>
    %31 = tpu.concatenate %28, %29, %30 in 1 : vector<60x256xf32>, vector<60x256xf32>, vector<60x256xf32> -> vector<60x768xf32>
    %32 = arith.truncf %31 : vector<60x768xf32> to vector<60x768xbf16>
    %cst_13 = arith.constant dense<0.000000e+00> : vector<60x256xf32>
    %33 = tpu.matmul %32, %3, %cst_13 {dimension_numbers = #tpu.dot_dimension_numbers<[1], [0], [0], [1], [0, 0, 1, 1], [], []>} : vector<60x768xbf16>, vector<768x256xbf16>, vector<60x256xf32> -> vector<60x256xf32>
    %34 = vector.broadcast %4 : vector<1x256xf32> to vector<60x256xf32>
    %35 = arith.addf %33, %34 : vector<60x256xf32>
    %cst_14 = arith.constant 0.000000e+00 : f32
    %36 = vector.broadcast %cst_14 : f32 to vector<60x256xf32>
    %37 = arith.maximumf %35, %36 : vector<60x256xf32>
    %38 = vector.extract_strided_slice %37 {offsets = [0, 0], sizes = [42, 256], strides = [1, 1]} : vector<60x256xf32> to vector<42x256xf32>
    %39 = vector.extract_strided_slice %37 {offsets = [1, 0], sizes = [42, 256], strides = [1, 1]} : vector<60x256xf32> to vector<42x256xf32>
    %40 = vector.extract_strided_slice %37 {offsets = [2, 0], sizes = [42, 256], strides = [1, 1]} : vector<60x256xf32> to vector<42x256xf32>
    %41 = vector.extract_strided_slice %37 {offsets = [16, 0], sizes = [42, 256], strides = [1, 1]} : vector<60x256xf32> to vector<42x256xf32>
    %42 = vector.extract_strided_slice %37 {offsets = [17, 0], sizes = [42, 256], strides = [1, 1]} : vector<60x256xf32> to vector<42x256xf32>
    %43 = vector.extract_strided_slice %37 {offsets = [18, 0], sizes = [42, 256], strides = [1, 1]} : vector<60x256xf32> to vector<42x256xf32>
    %44 = tpu.concatenate %38, %39, %40, %41, %42, %43 in 1 : vector<42x256xf32>, vector<42x256xf32>, vector<42x256xf32>, vector<42x256xf32>, vector<42x256xf32>, vector<42x256xf32> -> vector<42x1536xf32>
    %45 = arith.truncf %44 : vector<42x1536xf32> to vector<42x1536xbf16>
    %cst_15 = arith.constant dense<0.000000e+00> : vector<42x128xf32>
    %46 = tpu.matmul %45, %5, %cst_15 {dimension_numbers = #tpu.dot_dimension_numbers<[1], [0], [0], [1], [0, 0, 1, 1], [], []>} : vector<42x1536xbf16>, vector<1536x128xbf16>, vector<42x128xf32> -> vector<42x128xf32>
    %47 = vector.broadcast %6 : vector<1x128xf32> to vector<42x128xf32>
    %48 = arith.addf %46, %47 : vector<42x128xf32>
    %cst_16 = arith.constant 0.000000e+00 : f32
    %49 = vector.broadcast %cst_16 : f32 to vector<42x128xf32>
    %50 = arith.maximumf %48, %49 : vector<42x128xf32>
    %c0_17 = arith.constant 0 : index
    %c0_18 = arith.constant 0 : index
    %51 = vector.load %arg2[%c0_17, %c0_18] : memref<64x1xf32, #tpu.memory_space<vmem>>, vector<64x1xf32>
    %c0_19 = arith.constant 0 : index
    %c0_20 = arith.constant 0 : index
    %52 = vector.load %arg9[%c0_19, %c0_20] : memref<3x256xf32, #tpu.memory_space<vmem>>, vector<3x256xf32>
    %c0_21 = arith.constant 0 : index
    %c0_22 = arith.constant 0 : index
    %53 = vector.load %arg10[%c0_21, %c0_22] : memref<1x256xf32, #tpu.memory_space<vmem>>, vector<1x256xf32>
    %c0_23 = arith.constant 0 : index
    %c0_24 = arith.constant 0 : index
    %54 = vector.load %arg11[%c0_23, %c0_24] : memref<768x256xbf16, #tpu.memory_space<vmem>>, vector<768x256xbf16>
    %c0_25 = arith.constant 0 : index
    %c0_26 = arith.constant 0 : index
    %55 = vector.load %arg12[%c0_25, %c0_26] : memref<1x256xf32, #tpu.memory_space<vmem>>, vector<1x256xf32>
    %c0_27 = arith.constant 0 : index
    %c0_28 = arith.constant 0 : index
    %56 = vector.load %arg13[%c0_27, %c0_28] : memref<1536x128xbf16, #tpu.memory_space<vmem>>, vector<1536x128xbf16>
    %c0_29 = arith.constant 0 : index
    %c0_30 = arith.constant 0 : index
    %57 = vector.load %arg14[%c0_29, %c0_30] : memref<1x128xf32, #tpu.memory_space<vmem>>, vector<1x128xf32>
    %58 = vector.extract_strided_slice %51 {offsets = [0, 0], sizes = [62, 1], strides = [1, 1]} : vector<64x1xf32> to vector<62x1xf32>
    %59 = vector.extract_strided_slice %52 {offsets = [0, 0], sizes = [1, 256], strides = [1, 1]} : vector<3x256xf32> to vector<1x256xf32>
    %60 = vector.broadcast %58 : vector<62x1xf32> to vector<62x256xf32>
    %61 = vector.broadcast %59 : vector<1x256xf32> to vector<62x256xf32>
    %62 = arith.mulf %60, %61 : vector<62x256xf32>
    %63 = vector.extract_strided_slice %51 {offsets = [1, 0], sizes = [62, 1], strides = [1, 1]} : vector<64x1xf32> to vector<62x1xf32>
    %64 = vector.extract_strided_slice %52 {offsets = [1, 0], sizes = [1, 256], strides = [1, 1]} : vector<3x256xf32> to vector<1x256xf32>
    %65 = vector.broadcast %63 : vector<62x1xf32> to vector<62x256xf32>
    %66 = vector.broadcast %64 : vector<1x256xf32> to vector<62x256xf32>
    %67 = arith.mulf %65, %66 : vector<62x256xf32>
    %68 = arith.addf %62, %67 : vector<62x256xf32>
    %69 = vector.extract_strided_slice %51 {offsets = [2, 0], sizes = [62, 1], strides = [1, 1]} : vector<64x1xf32> to vector<62x1xf32>
    %70 = vector.extract_strided_slice %52 {offsets = [2, 0], sizes = [1, 256], strides = [1, 1]} : vector<3x256xf32> to vector<1x256xf32>
    %71 = vector.broadcast %69 : vector<62x1xf32> to vector<62x256xf32>
    %72 = vector.broadcast %70 : vector<1x256xf32> to vector<62x256xf32>
    %73 = arith.mulf %71, %72 : vector<62x256xf32>
    %74 = arith.addf %68, %73 : vector<62x256xf32>
    %75 = vector.broadcast %53 : vector<1x256xf32> to vector<62x256xf32>
    %76 = arith.addf %74, %75 : vector<62x256xf32>
    %cst_31 = arith.constant 0.000000e+00 : f32
    %77 = vector.broadcast %cst_31 : f32 to vector<62x256xf32>
    %78 = arith.maximumf %76, %77 : vector<62x256xf32>
    %79 = vector.extract_strided_slice %78 {offsets = [0, 0], sizes = [60, 256], strides = [1, 1]} : vector<62x256xf32> to vector<60x256xf32>
    %80 = vector.extract_strided_slice %78 {offsets = [1, 0], sizes = [60, 256], strides = [1, 1]} : vector<62x256xf32> to vector<60x256xf32>
    %81 = vector.extract_strided_slice %78 {offsets = [2, 0], sizes = [60, 256], strides = [1, 1]} : vector<62x256xf32> to vector<60x256xf32>
    %82 = tpu.concatenate %79, %80, %81 in 1 : vector<60x256xf32>, vector<60x256xf32>, vector<60x256xf32> -> vector<60x768xf32>
    %83 = arith.truncf %82 : vector<60x768xf32> to vector<60x768xbf16>
    %cst_32 = arith.constant dense<0.000000e+00> : vector<60x256xf32>
    %84 = tpu.matmul %83, %54, %cst_32 {dimension_numbers = #tpu.dot_dimension_numbers<[1], [0], [0], [1], [0, 0, 1, 1], [], []>} : vector<60x768xbf16>, vector<768x256xbf16>, vector<60x256xf32> -> vector<60x256xf32>
    %85 = vector.broadcast %55 : vector<1x256xf32> to vector<60x256xf32>
    %86 = arith.addf %84, %85 : vector<60x256xf32>
    %cst_33 = arith.constant 0.000000e+00 : f32
    %87 = vector.broadcast %cst_33 : f32 to vector<60x256xf32>
    %88 = arith.maximumf %86, %87 : vector<60x256xf32>
    %89 = vector.extract_strided_slice %88 {offsets = [0, 0], sizes = [42, 256], strides = [1, 1]} : vector<60x256xf32> to vector<42x256xf32>
    %90 = vector.extract_strided_slice %88 {offsets = [1, 0], sizes = [42, 256], strides = [1, 1]} : vector<60x256xf32> to vector<42x256xf32>
    %91 = vector.extract_strided_slice %88 {offsets = [2, 0], sizes = [42, 256], strides = [1, 1]} : vector<60x256xf32> to vector<42x256xf32>
    %92 = vector.extract_strided_slice %88 {offsets = [16, 0], sizes = [42, 256], strides = [1, 1]} : vector<60x256xf32> to vector<42x256xf32>
    %93 = vector.extract_strided_slice %88 {offsets = [17, 0], sizes = [42, 256], strides = [1, 1]} : vector<60x256xf32> to vector<42x256xf32>
    %94 = vector.extract_strided_slice %88 {offsets = [18, 0], sizes = [42, 256], strides = [1, 1]} : vector<60x256xf32> to vector<42x256xf32>
    %95 = tpu.concatenate %89, %90, %91, %92, %93, %94 in 1 : vector<42x256xf32>, vector<42x256xf32>, vector<42x256xf32>, vector<42x256xf32>, vector<42x256xf32>, vector<42x256xf32> -> vector<42x1536xf32>
    %96 = arith.truncf %95 : vector<42x1536xf32> to vector<42x1536xbf16>
    %cst_34 = arith.constant dense<0.000000e+00> : vector<42x128xf32>
    %97 = tpu.matmul %96, %56, %cst_34 {dimension_numbers = #tpu.dot_dimension_numbers<[1], [0], [0], [1], [0, 0, 1, 1], [], []>} : vector<42x1536xbf16>, vector<1536x128xbf16>, vector<42x128xf32> -> vector<42x128xf32>
    %98 = vector.broadcast %57 : vector<1x128xf32> to vector<42x128xf32>
    %99 = arith.addf %97, %98 : vector<42x128xf32>
    %cst_35 = arith.constant 0.000000e+00 : f32
    %100 = vector.broadcast %cst_35 : f32 to vector<42x128xf32>
    %101 = arith.maximumf %99, %100 : vector<42x128xf32>
    %102 = arith.addf %50, %101 : vector<42x128xf32>
    %103 = vector.extract_strided_slice %50 {offsets = [0, 0], sizes = [10, 128], strides = [1, 1]} : vector<42x128xf32> to vector<10x128xf32>
    %c0_36 = arith.constant 0 : index
    %c0_37 = arith.constant 0 : index
    %c0_38 = arith.constant 0 : index
    %104 = vector.load %arg16[%c0_36, %c0_37, %c0_38] : memref<2x10x128xf32, #tpu.memory_space<vmem>>, vector<1x10x128xf32>
    %105 = vector.shape_cast %104 : vector<1x10x128xf32> to vector<10x128xf32>
    %106 = vector.shape_cast %103 : vector<10x128xf32> to vector<1x10x128xf32>
    tpu.vector_store %arg16[%c0_36, %c0_37, %c0_38], %106 {strides = array<i32>} : memref<2x10x128xf32, #tpu.memory_space<vmem>>, vector<1x10x128xf32>,
    %107 = vector.extract_strided_slice %101 {offsets = [0, 0], sizes = [10, 128], strides = [1, 1]} : vector<42x128xf32> to vector<10x128xf32>
    %c0_39 = arith.constant 0 : index
    %c0_40 = arith.constant 0 : index
    %c0_41 = arith.constant 0 : index
    %108 = vector.load %arg17[%c0_39, %c0_40, %c0_41] : memref<2x10x128xf32, #tpu.memory_space<vmem>>, vector<1x10x128xf32>
    %109 = vector.shape_cast %108 : vector<1x10x128xf32> to vector<10x128xf32>
    %110 = vector.shape_cast %107 : vector<10x128xf32> to vector<1x10x128xf32>
    tpu.vector_store %arg17[%c0_39, %c0_40, %c0_41], %110 {strides = array<i32>} : memref<2x10x128xf32, #tpu.memory_space<vmem>>, vector<1x10x128xf32>,
    %111 = vector.extract_strided_slice %102 {offsets = [0, 0], sizes = [10, 128], strides = [1, 1]} : vector<42x128xf32> to vector<10x128xf32>
    %c0_42 = arith.constant 0 : index
    %c0_43 = arith.constant 0 : index
    %c0_44 = arith.constant 0 : index
    %112 = vector.load %arg15[%c0_42, %c0_43, %c0_44] : memref<2x10x128xf32, #tpu.memory_space<vmem>>, vector<1x10x128xf32>
    %113 = vector.shape_cast %112 : vector<1x10x128xf32> to vector<10x128xf32>
    %114 = vector.shape_cast %111 : vector<10x128xf32> to vector<1x10x128xf32>
    tpu.vector_store %arg15[%c0_42, %c0_43, %c0_44], %114 {strides = array<i32>} : memref<2x10x128xf32, #tpu.memory_space<vmem>>, vector<1x10x128xf32>,
    %115 = vector.extract_strided_slice %50 {offsets = [32, 0], sizes = [10, 128], strides = [1, 1]} : vector<42x128xf32> to vector<10x128xf32>
    %c1 = arith.constant 1 : index
    %c0_45 = arith.constant 0 : index
    %c0_46 = arith.constant 0 : index
    %116 = vector.load %arg16[%c1, %c0_45, %c0_46] : memref<2x10x128xf32, #tpu.memory_space<vmem>>, vector<1x10x128xf32>
    %117 = vector.shape_cast %116 : vector<1x10x128xf32> to vector<10x128xf32>
    %118 = vector.shape_cast %115 : vector<10x128xf32> to vector<1x10x128xf32>
    tpu.vector_store %arg16[%c1, %c0_45, %c0_46], %118 {strides = array<i32>} : memref<2x10x128xf32, #tpu.memory_space<vmem>>, vector<1x10x128xf32>,
    %119 = vector.extract_strided_slice %101 {offsets = [32, 0], sizes = [10, 128], strides = [1, 1]} : vector<42x128xf32> to vector<10x128xf32>
    %c1_47 = arith.constant 1 : index
    %c0_48 = arith.constant 0 : index
    %c0_49 = arith.constant 0 : index
    %120 = vector.load %arg17[%c1_47, %c0_48, %c0_49] : memref<2x10x128xf32, #tpu.memory_space<vmem>>, vector<1x10x128xf32>
    %121 = vector.shape_cast %120 : vector<1x10x128xf32> to vector<10x128xf32>
    %122 = vector.shape_cast %119 : vector<10x128xf32> to vector<1x10x128xf32>
    tpu.vector_store %arg17[%c1_47, %c0_48, %c0_49], %122 {strides = array<i32>} : memref<2x10x128xf32, #tpu.memory_space<vmem>>, vector<1x10x128xf32>,
    %123 = vector.extract_strided_slice %102 {offsets = [32, 0], sizes = [10, 128], strides = [1, 1]} : vector<42x128xf32> to vector<10x128xf32>
    %c1_50 = arith.constant 1 : index
    %c0_51 = arith.constant 0 : index
    %c0_52 = arith.constant 0 : index
    %124 = vector.load %arg15[%c1_50, %c0_51, %c0_52] : memref<2x10x128xf32, #tpu.memory_space<vmem>>, vector<1x10x128xf32>
    %125 = vector.shape_cast %124 : vector<1x10x128xf32> to vector<10x128xf32>
    %126 = vector.shape_cast %123 : vector<10x128xf32> to vector<1x10x128xf32>
    tpu.vector_store %arg15[%c1_50, %c0_51, %c0_52], %126 {strides = array<i32>} : memref<2x10x128xf32, #tpu.memory_space<vmem>>, vector<1x10x128xf32>,
    return
  }
  func.func @transform_0(%arg0: i32) -> (i32, i32) {
    %c0_i32 = arith.constant 0 : i32
    %c0_i32_0 = arith.constant 0 : i32
    return %arg0, %c0_i32 : i32, i32
  }
  func.func @transform_1(%arg0: i32) -> (i32, i32) {
    %c0_i32 = arith.constant 0 : i32
    %c0_i32_0 = arith.constant 0 : i32
    return %arg0, %c0_i32 : i32, i32
  }
  func.func @transform_2(%arg0: i32) -> (i32, i32) {
    %c0_i32 = arith.constant 0 : i32
    %c0_i32_0 = arith.constant 0 : i32
    %c0_i32_1 = arith.constant 0 : i32
    return %c0_i32, %c0_i32_0 : i32, i32
  }
  func.func @transform_3(%arg0: i32) -> (i32, i32) {
    %c0_i32 = arith.constant 0 : i32
    %c0_i32_0 = arith.constant 0 : i32
    %c0_i32_1 = arith.constant 0 : i32
    return %c0_i32, %c0_i32_0 : i32, i32
  }
  func.func @transform_4(%arg0: i32) -> (i32, i32) {
    %c0_i32 = arith.constant 0 : i32
    %c0_i32_0 = arith.constant 0 : i32
    %c0_i32_1 = arith.constant 0 : i32
    return %c0_i32, %c0_i32_0 : i32, i32
  }
  func.func @transform_5(%arg0: i32) -> (i32, i32) {
    %c0_i32 = arith.constant 0 : i32
    %c0_i32_0 = arith.constant 0 : i32
    %c0_i32_1 = arith.constant 0 : i32
    return %c0_i32, %c0_i32_0 : i32, i32
  }
  func.func @transform_6(%arg0: i32) -> (i32, i32) {
    %c0_i32 = arith.constant 0 : i32
    %c0_i32_0 = arith.constant 0 : i32
    %c0_i32_1 = arith.constant 0 : i32
    return %c0_i32, %c0_i32_0 : i32, i32
  }
  func.func @transform_7(%arg0: i32) -> (i32, i32) {
    %c0_i32 = arith.constant 0 : i32
    %c0_i32_0 = arith.constant 0 : i32
    %c0_i32_1 = arith.constant 0 : i32
    return %c0_i32, %c0_i32_0 : i32, i32
  }
  func.func @transform_8(%arg0: i32) -> (i32, i32) {
    %c0_i32 = arith.constant 0 : i32
    %c0_i32_0 = arith.constant 0 : i32
    %c0_i32_1 = arith.constant 0 : i32
    return %c0_i32, %c0_i32_0 : i32, i32
  }
  func.func @transform_9(%arg0: i32) -> (i32, i32) {
    %c0_i32 = arith.constant 0 : i32
    %c0_i32_0 = arith.constant 0 : i32
    %c0_i32_1 = arith.constant 0 : i32
    return %c0_i32, %c0_i32_0 : i32, i32
  }
  func.func @transform_10(%arg0: i32) -> (i32, i32) {
    %c0_i32 = arith.constant 0 : i32
    %c0_i32_0 = arith.constant 0 : i32
    %c0_i32_1 = arith.constant 0 : i32
    return %c0_i32, %c0_i32_0 : i32, i32
  }
  func.func @transform_11(%arg0: i32) -> (i32, i32) {
    %c0_i32 = arith.constant 0 : i32
    %c0_i32_0 = arith.constant 0 : i32
    %c0_i32_1 = arith.constant 0 : i32
    return %c0_i32, %c0_i32_0 : i32, i32
  }
  func.func @transform_12(%arg0: i32) -> (i32, i32) {
    %c0_i32 = arith.constant 0 : i32
    %c0_i32_0 = arith.constant 0 : i32
    %c0_i32_1 = arith.constant 0 : i32
    return %c0_i32, %c0_i32_0 : i32, i32
  }
  func.func @transform_13(%arg0: i32) -> (i32, i32) {
    %c0_i32 = arith.constant 0 : i32
    %c0_i32_0 = arith.constant 0 : i32
    %c0_i32_1 = arith.constant 0 : i32
    return %c0_i32, %c0_i32_0 : i32, i32
  }
  func.func @transform_14(%arg0: i32) -> (i32, i32, i32) {
    %c0_i32 = arith.constant 0 : i32
    %c0_i32_0 = arith.constant 0 : i32
    %c0_i32_1 = arith.constant 0 : i32
    return %arg0, %c0_i32, %c0_i32_0 : i32, i32, i32
  }
  func.func @transform_15(%arg0: i32) -> (i32, i32, i32) {
    %c0_i32 = arith.constant 0 : i32
    %c0_i32_0 = arith.constant 0 : i32
    %c0_i32_1 = arith.constant 0 : i32
    return %arg0, %c0_i32, %c0_i32_0 : i32, i32, i32
  }
  func.func @transform_16(%arg0: i32) -> (i32, i32, i32) {
    %c0_i32 = arith.constant 0 : i32
    %c0_i32_0 = arith.constant 0 : i32
    %c0_i32_1 = arith.constant 0 : i32
    return %arg0, %c0_i32, %c0_i32_0 : i32, i32, i32
  }
}

</mosaic_0001>

<llo_original>
// kernel: mlnet_forward.1
$region0: #{mlnet_forward.1}
  #allocation0 [shape = 'u32[]', space=smem, size = 0x4, offset = 0x4, fixed_abs, tag = 'smem constant byte address 0x4 - core index']
  #allocation1 [shape = 'u32[144,128]{1,0:T(1,128)}', space=vmem, size = 0x12000, scoped, tag = 'internal scratch']
  %s0 = inlined_call_operand.vmem [shape: f32[64,1], index: 0, kind: input, shape index: {}]
  %s1 = inlined_call_operand.vmem [shape: f32[64,1], index: 1, kind: input, shape index: {}]
  %s2 = inlined_call_operand.vmem [shape: f32[3,256], index: 2, kind: input, shape index: {}]
  %s3 = inlined_call_operand.vmem [shape: f32[1,256], index: 3, kind: input, shape index: {}, may-alias: {3,5,9,11}]
  %s4 = inlined_call_operand.hbm [shape: bf16[768,256], index: 4, kind: input, shape index: {}]
  %s5 = inlined_call_operand.vmem [shape: f32[1,256], index: 5, kind: input, shape index: {}, may-alias: {3,5,9,11}]
  %s6 = inlined_call_operand.hbm [shape: bf16[1536,128], index: 6, kind: input, shape index: {}]
  %s7 = inlined_call_operand.vmem [shape: f32[1,128], index: 7, kind: input, shape index: {}, may-alias: {7,13}]
  %s8 = inlined_call_operand.vmem [shape: f32[3,256], index: 8, kind: input, shape index: {}]
  %s9 = inlined_call_operand.vmem [shape: f32[1,256], index: 9, kind: input, shape index: {}, may-alias: {3,5,9,11}]
  %s10 = inlined_call_operand.hbm [shape: bf16[768,256], index: 10, kind: input, shape index: {}]
  %s11 = inlined_call_operand.vmem [shape: f32[1,256], index: 11, kind: input, shape index: {}, may-alias: {3,5,9,11}]
  %s12 = inlined_call_operand.hbm [shape: bf16[1536,128], index: 12, kind: input, shape index: {}]
  %s13 = inlined_call_operand.vmem [shape: f32[1,128], index: 13, kind: input, shape index: {}, may-alias: {7,13}]
  %s14 = inlined_call_operand.vmem [shape: f32[2,10,128], index: 14, kind: output, shape index: {0}]
  %s15 = inlined_call_operand.vmem [shape: f32[2,10,128], index: 15, kind: output, shape index: {1}]
  %s16 = inlined_call_operand.vmem [shape: f32[2,10,128], index: 16, kind: output, shape index: {2}]
  %17 = xla_tuple %s14, %s15, %s16
  %s18 = sld [smem:[#allocation0]]
  $region98: #{mlnet_forward.1} parent=0
    _
  %s20 = ssub.s32 1, %s18
  %s21 = scalar_select 0, %s20, %s18
  $region1: #{mlnet_forward.1} parent=0
    #allocation2 [shape = 'u8[393216]{0}', space=vmem, size = 0x60000, scoped, tag = 'input window, operand 4, single buffered']
    #allocation3 [shape = 's32[1]{0}', space=sflag, size = 0x4, scoped, tag = 'scoped memory for mlnet_forward.1']
    #allocation4 [shape = 'u8[393216]{0}', space=vmem, size = 0x60000, scoped, tag = 'input window, operand 6, single buffered']
    #allocation5 [shape = 's32[1]{0}', space=sflag, size = 0x4, scoped, tag = 'scoped memory for mlnet_forward.1']
    #allocation6 [shape = 'u8[393216]{0}', space=vmem, size = 0x60000, scoped, tag = 'input window, operand 10, single buffered']
    #allocation7 [shape = 'u8[393216]{0}', space=vmem, size = 0x60000, scoped, tag = 'input window, operand 12, single buffered']
    #allocation8 [shape = 's32[1]{0}', space=sflag, size = 0x4, scoped, tag = 'scoped memory for mlnet_forward.1']
    %22 = vsyncpa [#allocation3], 0
    %23 = vsyncpa [#allocation5], 0
    %24 = vsyncpa [#allocation8], 0
    // Predicated region
    $region2: #{mlnet_forward.1} parent=1 // pred_check
      _
    $region3: #{mlnet_forward.1} parent=1 // pred_check_branch
      %26 = sbr.rel (0) target = $region5
    $region4: #{mlnet_forward.1} parent=1 // pred_region
      _
    $region5: #{mlnet_forward.1} parent=1 // pred_fallthru
      _
    // Predicated region
    $region6: #{mlnet_forward.1} parent=1 // pred_check
      _
    $region7: #{mlnet_forward.1} parent=1 // pred_check_branch
      %28 = sbr.rel (0) target = $region9
    $region8: #{mlnet_forward.1} parent=1 // pred_region
      _
    $region9: #{mlnet_forward.1} parent=1 // pred_fallthru
      _
    // Predicated region
    $region10: #{mlnet_forward.1} parent=1 // pred_check
      _
    $region11: #{mlnet_forward.1} parent=1 // pred_check_branch
      %30 = sbr.rel (0) target = $region13
    $region12: #{mlnet_forward.1} parent=1 // pred_region
      _
    $region13: #{mlnet_forward.1} parent=1 // pred_fallthru
      _
    // Predicated region
    $region14: #{mlnet_forward.1} parent=1 // pred_check
      _
    $region15: #{mlnet_forward.1} parent=1 // pred_check_branch
      %32 = sbr.rel (0) target = $region17
    $region16: #{mlnet_forward.1} parent=1 // pred_region
      _
    $region17: #{mlnet_forward.1} parent=1 // pred_fallthru
      _
    // Predicated region
    $region18: #{mlnet_forward.1} parent=1 // pred_check
      _
    $region19: #{mlnet_forward.1} parent=1 // pred_check_branch
      %34 = sbr.rel (0) target = $region21
    $region20: #{mlnet_forward.1} parent=1 // pred_region
      %s36 = ssub.s32 12288, 12288
      %37 = vsyncadd [#allocation3], %s36
      %s38 = sshll.u32 [#allocation2], 4
      %s39 = int_to_ptr.vmem [resolvable:$true] %s38
      %44 = dma.hbm_to_vmem [thread:$0]  %s4, 12288, %s39, [#allocation3], 128, 128, 8
    $region21: #{mlnet_forward.1} parent=1 // pred_fallthru
      _
    // Predicated region
    $region22: #{mlnet_forward.1} parent=1 // pred_check
      _
    $region23: #{mlnet_forward.1} parent=1 // pred_check_branch
      %46 = sbr.rel (0) target = $region25
    $region24: #{mlnet_forward.1} parent=1 // pred_region
      _
    $region25: #{mlnet_forward.1} parent=1 // pred_fallthru
      _
    // Predicated region
    $region26: #{mlnet_forward.1} parent=1 // pred_check
      _
    $region27: #{mlnet_forward.1} parent=1 // pred_check_branch
      %48 = sbr.rel (0) target = $region29
    $region28: #{mlnet_forward.1} parent=1 // pred_region
      %s50 = ssub.s32 12288, 12288
      %51 = vsyncadd [#allocation5], %s50
      %s52 = sshll.u32 [#allocation4], 4
      %s53 = int_to_ptr.vmem [resolvable:$true] %s52
      %58 = dma.hbm_to_vmem [thread:$0]  %s6, 12288, %s53, [#allocation5], 64, 64, 4
    $region29: #{mlnet_forward.1} parent=1 // pred_fallthru
      _
    // Predicated region
    $region30: #{mlnet_forward.1} parent=1 // pred_check
      _
    $region31: #{mlnet_forward.1} parent=1 // pred_check_branch
      %60 = sbr.rel (0) target = $region33
    $region32: #{mlnet_forward.1} parent=1 // pred_region
      _
    $region33: #{mlnet_forward.1} parent=1 // pred_fallthru
      _
    // Predicated region
    $region34: #{mlnet_forward.1} parent=1 // pred_check
      _
    $region35: #{mlnet_forward.1} parent=1 // pred_check_branch
      %62 = sbr.rel (0) target = $region37
    $region36: #{mlnet_forward.1} parent=1 // pred_region
      _
    $region37: #{mlnet_forward.1} parent=1 // pred_fallthru
      _
    // Predicated region
    $region38: #{mlnet_forward.1} parent=1 // pred_check
      _
    $region39: #{mlnet_forward.1} parent=1 // pred_check_branch
      %64 = sbr.rel (0) target = $region41
    $region40: #{mlnet_forward.1} parent=1 // pred_region
      _
    $region41: #{mlnet_forward.1} parent=1 // pred_fallthru
      _
    // Predicated region
    $region42: #{mlnet_forward.1} parent=1 // pred_check
      _
    $region43: #{mlnet_forward.1} parent=1 // pred_check_branch
      %66 = sbr.rel (0) target = $region45
    $region44: #{mlnet_forward.1} parent=1 // pred_region
      %s68 = ssub.s32 12288, 12288
      %69 = vsyncadd [#allocation5], %s68
      %s70 = sshll.u32 [#allocation6], 4
      %s71 = int_to_ptr.vmem [resolvable:$true] %s70
      %76 = dma.hbm_to_vmem [thread:$0]  %s10, 12288, %s71, [#allocation5], 128, 128, 8
    $region45: #{mlnet_forward.1} parent=1 // pred_fallthru
      _
    // Predicated region
    $region46: #{mlnet_forward.1} parent=1 // pred_check
      _
    $region47: #{mlnet_forward.1} parent=1 // pred_check_branch
      %78 = sbr.rel (0) target = $region49
    $region48: #{mlnet_forward.1} parent=1 // pred_region
      _
    $region49: #{mlnet_forward.1} parent=1 // pred_fallthru
      _
    // Predicated region
    $region50: #{mlnet_forward.1} parent=1 // pred_check
      _
    $region51: #{mlnet_forward.1} parent=1 // pred_check_branch
      %80 = sbr.rel (0) target = $region53
    $region52: #{mlnet_forward.1} parent=1 // pred_region
      %s82 = ssub.s32 12288, 12288
      %83 = vsyncadd [#allocation8], %s82
      %s84 = sshll.u32 [#allocation7], 4
      %s85 = int_to_ptr.vmem [resolvable:$true] %s84
      %90 = dma.hbm_to_vmem [thread:$0]  %s12, 12288, %s85, [#allocation8], 64, 64, 4
    $region53: #{mlnet_forward.1} parent=1 // pred_fallthru
      _
    // Predicated region
    $region54: #{mlnet_forward.1} parent=1 // pred_check
      _
    $region55: #{mlnet_forward.1} parent=1 // pred_check_branch
      %92 = sbr.rel (0) target = $region57
    $region56: #{mlnet_forward.1} parent=1 // pred_region
      _
    $region57: #{mlnet_forward.1} parent=1 // pred_fallthru
      _
    // Predicated region
    $region58: #{mlnet_forward.1} parent=1 // pred_check
      _
    $region59: #{mlnet_forward.1} parent=1 // pred_check_branch
      %94 = sbr.rel (0) target = $region61
    $region60: #{mlnet_forward.1} parent=1 // pred_region
      %95 = dma.done [#allocation3], 12288
    $region61: #{mlnet_forward.1} parent=1 // pred_fallthru
      _
    // Predicated region
    $region62: #{mlnet_forward.1} parent=1 // pred_check
      _
    $region63: #{mlnet_forward.1} parent=1 // pred_check_branch
      %97 = sbr.rel (0) target = $region65
    $region64: #{mlnet_forward.1} parent=1 // pred_region
      %98 = dma.done [#allocation5], 12288
    $region65: #{mlnet_forward.1} parent=1 // pred_fallthru
      _
    // Predicated region
    $region66: #{mlnet_forward.1} parent=1 // pred_check
      _
    $region67: #{mlnet_forward.1} parent=1 // pred_check_branch
      %100 = sbr.rel (0) target = $region69
    $region68: #{mlnet_forward.1} parent=1 // pred_region
      %101 = dma.done [#allocation5], 12288
    $region69: #{mlnet_forward.1} parent=1 // pred_fallthru
      _
    // Predicated region
    $region70: #{mlnet_forward.1} parent=1 // pred_check
      _
    $region71: #{mlnet_forward.1} parent=1 // pred_check_branch
      %103 = sbr.rel (0) target = $region73
    $region72: #{mlnet_forward.1} parent=1 // pred_region
      %104 = dma.done [#allocation8], 12288
    $region73: #{mlnet_forward.1} parent=1 // pred_fallthru
      _
    %v106 = vld [vmem:[%s0] sm:$0xff]
    %v107 = vld [vmem:[%s0 + $0x8] sm:$0xff]
    %v108 = vld [vmem:[%s0 + $0x10] sm:$0xff]
    %v109 = vld [vmem:[%s0 + $0x18] sm:$0xff]
    %v110 = vld [vmem:[%s0 + $0x20] sm:$0xff]
    %v111 = vld [vmem:[%s0 + $0x28] sm:$0xff]
    %v112 = vld [vmem:[%s0 + $0x30] sm:$0xff]
    %v113 = vld [vmem:[%s0 + $0x38] sm:$0xff]
    %v114 = vld [vmem:[%s2] sm:$0x77]
    %v115 = vld [vmem:[%s3] sm:$0x3]
    %v116 = vld [vmem:[#allocation2] sm:$0xff]
    %v117 = vld [vmem:[#allocation2 + $0x8] sm:$0xff]
    %v118 = vld [vmem:[#allocation2 + $0x10] sm:$0xff]
    %v119 = vld [vmem:[#allocation2 + $0x18] sm:$0xff]
    %v120 = vld [vmem:[#allocation2 + $0x20] sm:$0xff]
    %v121 = vld [vmem:[#allocation2 + $0x28] sm:$0xff]
    %v122 = vld [vmem:[#allocation2 + $0x30] sm:$0xff]
    %v123 = vld [vmem:[#allocation2 + $0x38] sm:$0xff]
    %v124 = vld [vmem:[#allocation2 + $0x40] sm:$0xff]
    %v125 = vld [vmem:[#allocation2 + $0x48] sm:$0xff]
    %v126 = vld [vmem:[#allocation2 + $0x50] sm:$0xff]
    %v127 = vld [vmem:[#allocation2 + $0x58] sm:$0xff]
    %v128 = vld [vmem:[#allocation2 + $0x60] sm:$0xff]
    %v129 = vld [vmem:[#allocation2 + $0x68] sm:$0xff]
    %v130 = vld [vmem:[#allocation2 + $0x70] sm:$0xff]
    %v131 = vld [vmem:[#allocation2 + $0x78] sm:$0xff]
    %v132 = vld [vmem:[#allocation2 + $0x80] sm:$0xff]
    %v133 = vld [vmem:[#allocation2 + $0x88] sm:$0xff]
    %v134 = vld [vmem:[#allocation2 + $0x90] sm:$0xff]
    %v135 = vld [vmem:[#allocation2 + $0x98] sm:$0xff]
    %v136 = vld [vmem:[#allocation2 + $0xa0] sm:$0xff]
    %v137 = vld [vmem:[#allocation2 + $0xa8] sm:$0xff]
    %v138 = vld [vmem:[#allocation2 + $0xb0] sm:$0xff]
    %v139 = vld [vmem:[#allocation2 + $0xb8] sm:$0xff]
    %v140 = vld [vmem:[#allocation2 + $0xc0] sm:$0xff]
    %v141 = vld [vmem:[#allocation2 + $0xc8] sm:$0xff]
    %v142 = vld [vmem:[#allocation2 + $0xd0] sm:$0xff]
    %v143 = vld [vmem:[#allocation2 + $0xd8] sm:$0xff]
    %v144 = vld [vmem:[#allocation2 + $0xe0] sm:$0xff]
    %v145 = vld [vmem:[#allocation2 + $0xe8] sm:$0xff]
    %v146 = vld [vmem:[#allocation2 + $0xf0] sm:$0xff]
    %v147 = vld [vmem:[#allocation2 + $0xf8] sm:$0xff]
    %v148 = vld [vmem:[#allocation2 + $0x100] sm:$0xff]
    %v149 = vld [vmem:[#allocation2 + $0x108] sm:$0xff]
    %v150 = vld [vmem:[#allocation2 + $0x110] sm:$0xff]
    %v151 = vld [vmem:[#allocation2 + $0x118] sm:$0xff]
    %v152 = vld [vmem:[#allocation2 + $0x120] sm:$0xff]
    %v153 = vld [vmem:[#allocation2 + $0x128] sm:$0xff]
    %v154 = vld [vmem:[#allocation2 + $0x130] sm:$0xff]
    %v155 = vld [vmem:[#allocation2 + $0x138] sm:$0xff]
    %v156 = vld [vmem:[#allocation2 + $0x140] sm:$0xff]
    %v157 = vld [vmem:[#allocation2 + $0x148] sm:$0xff]
    %v158 = vld [vmem:[#allocation2 + $0x150] sm:$0xff]
    %v159 = vld [vmem:[#allocation2 + $0x158] sm:$0xff]
    %v160 = vld [vmem:[#allocation2 + $0x160] sm:$0xff]
    %v161 = vld [vmem:[#allocation2 + $0x168] sm:$0xff]
    %v162 = vld [vmem:[#allocation2 + $0x170] sm:$0xff]
    %v163 = vld [vmem:[#allocation2 + $0x178] sm:$0xff]
    %v164 = vld [vmem:[#allocation2 + $0x180] sm:$0xff]
    %v165 = vld [vmem:[#allocation2 + $0x188] sm:$0xff]
    %v166 = vld [vmem:[#allocation2 + $0x190] sm:$0xff]
    %v167 = vld [vmem:[#allocation2 + $0x198] sm:$0xff]
    %v168 = vld [vmem:[#allocation2 + $0x1a0] sm:$0xff]
    %v169 = vld [vmem:[#allocation2 + $0x1a8] sm:$0xff]
    %v170 = vld [vmem:[#allocation2 + $0x1b0] sm:$0xff]
    %v171 = vld [vmem:[#allocation2 + $0x1b8] sm:$0xff]
    %v172 = vld [vmem:[#allocation2 + $0x1c0] sm:$0xff]
    %v173 = vld [vmem:[#allocation2 + $0x1c8] sm:$0xff]
    %v174 = vld [vmem:[#allocation2 + $0x1d0] sm:$0xff]
    %v175 = vld [vmem:[#allocation2 + $0x1d8] sm:$0xff]
    %v176 = vld [vmem:[#allocation2 + $0x1e0] sm:$0xff]
    %v177 = vld [vmem:[#allocation2 + $0x1e8] sm:$0xff]
    %v178 = vld [vmem:[#allocation2 + $0x1f0] sm:$0xff]
    %v179 = vld [vmem:[#allocation2 + $0x1f8] sm:$0xff]
    %v180 = vld [vmem:[#allocation2 + $0x200] sm:$0xff]
    %v181 = vld [vmem:[#allocation2 + $0x208] sm:$0xff]
    %v182 = vld [vmem:[#allocation2 + $0x210] sm:$0xff]
    %v183 = vld [vmem:[#allocation2 + $0x218] sm:$0xff]
    %v184 = vld [vmem:[#allocation2 + $0x220] sm:$0xff]
    %v185 = vld [vmem:[#allocation2 + $0x228] sm:$0xff]
    %v186 = vld [vmem:[#allocation2 + $0x230] sm:$0xff]
    %v187 = vld [vmem:[#allocation2 + $0x238] sm:$0xff]
    %v188 = vld [vmem:[#allocation2 + $0x240] sm:$0xff]
    %v189 = vld [vmem:[#allocation2 + $0x248] sm:$0xff]
    %v190 = vld [vmem:[#allocation2 + $0x250] sm:$0xff]
    %v191 = vld [vmem:[#allocation2 + $0x258] sm:$0xff]
    %v192 = vld [vmem:[#allocation2 + $0x260] sm:$0xff]
    %v193 = vld [vmem:[#allocation2 + $0x268] sm:$0xff]
    %v194 = vld [vmem:[#allocation2 + $0x270] sm:$0xff]
    %v195 = vld [vmem:[#allocation2 + $0x278] sm:$0xff]
    %v196 = vld [vmem:[#allocation2 + $0x280] sm:$0xff]
    %v197 = vld [vmem:[#allocation2 + $0x288] sm:$0xff]
    %v198 = vld [vmem:[#allocation2 + $0x290] sm:$0xff]
    %v199 = vld [vmem:[#allocation2 + $0x298] sm:$0xff]
    %v200 = vld [vmem:[#allocation2 + $0x2a0] sm:$0xff]
    %v201 = vld [vmem:[#allocation2 + $0x2a8] sm:$0xff]
    %v202 = vld [vmem:[#allocation2 + $0x2b0] sm:$0xff]
    %v203 = vld [vmem:[#allocation2 + $0x2b8] sm:$0xff]
    %v204 = vld [vmem:[#allocation2 + $0x2c0] sm:$0xff]
    %v205 = vld [vmem:[#allocation2 + $0x2c8] sm:$0xff]
    %v206 = vld [vmem:[#allocation2 + $0x2d0] sm:$0xff]
    %v207 = vld [vmem:[#allocation2 + $0x2d8] sm:$0xff]
    %v208 = vld [vmem:[#allocation2 + $0x2e0] sm:$0xff]
    %v209 = vld [vmem:[#allocation2 + $0x2e8] sm:$0xff]
    %v210 = vld [vmem:[#allocation2 + $0x2f0] sm:$0xff]
    %v211 = vld [vmem:[#allocation2 + $0x2f8] sm:$0xff]
    %v212 = vld [vmem:[%s5] sm:$0x3]
    %v213 = vld [vmem:[#allocation4] sm:$0xf]
    %v214 = vld [vmem:[#allocation4 + $0x4] sm:$0xf]
    %v215 = vld [vmem:[#allocation4 + $0x8] sm:$0xf]
    %v216 = vld [vmem:[#allocation4 + $0xc] sm:$0xf]
    %v217 = vld [vmem:[#allocation4 + $0x10] sm:$0xf]
    %v218 = vld [vmem:[#allocation4 + $0x14] sm:$0xf]
    %v219 = vld [vmem:[#allocation4 + $0x18] sm:$0xf]
    %v220 = vld [vmem:[#allocation4 + $0x1c] sm:$0xf]
    %v221 = vld [vmem:[#allocation4 + $0x20] sm:$0xf]
    %v222 = vld [vmem:[#allocation4 + $0x24] sm:$0xf]
    %v223 = vld [vmem:[#allocation4 + $0x28] sm:$0xf]
    %v224 = vld [vmem:[#allocation4 + $0x2c] sm:$0xf]
    %v225 = vld [vmem:[#allocation4 + $0x30] sm:$0xf]
    %v226 = vld [vmem:[#allocation4 + $0x34] sm:$0xf]
    %v227 = vld [vmem:[#allocation4 + $0x38] sm:$0xf]
    %v228 = vld [vmem:[#allocation4 + $0x3c] sm:$0xf]
    %v229 = vld [vmem:[#allocation4 + $0x40] sm:$0xf]
    %v230 = vld [vmem:[#allocation4 + $0x44] sm:$0xf]
    %v231 = vld [vmem:[#allocation4 + $0x48] sm:$0xf]
    %v232 = vld [vmem:[#allocation4 + $0x4c] sm:$0xf]
    %v233 = vld [vmem:[#allocation4 + $0x50] sm:$0xf]
    %v234 = vld [vmem:[#allocation4 + $0x54] sm:$0xf]
    %v235 = vld [vmem:[#allocation4 + $0x58] sm:$0xf]
    %v236 = vld [vmem:[#allocation4 + $0x5c] sm:$0xf]
    %v237 = vld [vmem:[#allocation4 + $0x60] sm:$0xf]
    %v238 = vld [vmem:[#allocation4 + $0x64] sm:$0xf]
    %v239 = vld [vmem:[#allocation4 + $0x68] sm:$0xf]
    %v240 = vld [vmem:[#allocation4 + $0x6c] sm:$0xf]
    %v241 = vld [vmem:[#allocation4 + $0x70] sm:$0xf]
    %v242 = vld [vmem:[#allocation4 + $0x74] sm:$0xf]
    %v243 = vld [vmem:[#allocation4 + $0x78] sm:$0xf]
    %v244 = vld [vmem:[#allocation4 + $0x7c] sm:$0xf]
    %v245 = vld [vmem:[#allocation4 + $0x80] sm:$0xf]
    %v246 = vld [vmem:[#allocation4 + $0x84] sm:$0xf]
    %v247 = vld [vmem:[#allocation4 + $0x88] sm:$0xf]
    %v248 = vld [vmem:[#allocation4 + $0x8c] sm:$0xf]
    %v249 = vld [vmem:[#allocation4 + $0x90] sm:$0xf]
    %v250 = vld [vmem:[#allocation4 + $0x94] sm:$0xf]
    %v251 = vld [vmem:[#allocation4 + $0x98] sm:$0xf]
    %v252 = vld [vmem:[#allocation4 + $0x9c] sm:$0xf]
    %v253 = vld [vmem:[#allocation4 + $0xa0] sm:$0xf]
    %v254 = vld [vmem:[#allocation4 + $0xa4] sm:$0xf]
    %v255 = vld [vmem:[#allocation4 + $0xa8] sm:$0xf]
    %v256 = vld [vmem:[#allocation4 + $0xac] sm:$0xf]
    %v257 = vld [vmem:[#allocation4 + $0xb0] sm:$0xf]
    %v258 = vld [vmem:[#allocation4 + $0xb4] sm:$0xf]
    %v259 = vld [vmem:[#allocation4 + $0xb8] sm:$0xf]
    %v260 = vld [vmem:[#allocation4 + $0xbc] sm:$0xf]
    %v261 = vld [vmem:[#allocation4 + $0xc0] sm:$0xf]
    %v262 = vld [vmem:[#allocation4 + $0xc4] sm:$0xf]
    %v263 = vld [vmem:[#allocation4 + $0xc8] sm:$0xf]
    %v264 = vld [vmem:[#allocation4 + $0xcc] sm:$0xf]
    %v265 = vld [vmem:[#allocation4 + $0xd0] sm:$0xf]
    %v266 = vld [vmem:[#allocation4 + $0xd4] sm:$0xf]
    %v267 = vld [vmem:[#allocation4 + $0xd8] sm:$0xf]
    %v268 = vld [vmem:[#allocation4 + $0xdc] sm:$0xf]
    %v269 = vld [vmem:[#allocation4 + $0xe0] sm:$0xf]
    %v270 = vld [vmem:[#allocation4 + $0xe4] sm:$0xf]
    %v271 = vld [vmem:[#allocation4 + $0xe8] sm:$0xf]
    %v272 = vld [vmem:[#allocation4 + $0xec] sm:$0xf]
    %v273 = vld [vmem:[#allocation4 + $0xf0] sm:$0xf]
    %v274 = vld [vmem:[#allocation4 + $0xf4] sm:$0xf]
    %v275 = vld [vmem:[#allocation4 + $0xf8] sm:$0xf]
    %v276 = vld [vmem:[#allocation4 + $0xfc] sm:$0xf]
    %v277 = vld [vmem:[#allocation4 + $0x100] sm:$0xf]
    %v278 = vld [vmem:[#allocation4 + $0x104] sm:$0xf]
    %v279 = vld [vmem:[#allocation4 + $0x108] sm:$0xf]
    %v280 = vld [vmem:[#allocation4 + $0x10c] sm:$0xf]
    %v281 = vld [vmem:[#allocation4 + $0x110] sm:$0xf]
    %v282 = vld [vmem:[#allocation4 + $0x114] sm:$0xf]
    %v283 = vld [vmem:[#allocation4 + $0x118] sm:$0xf]
    %v284 = vld [vmem:[#allocation4 + $0x11c] sm:$0xf]
    %v285 = vld [vmem:[#allocation4 + $0x120] sm:$0xf]
    %v286 = vld [vmem:[#allocation4 + $0x124] sm:$0xf]
    %v287 = vld [vmem:[#allocation4 + $0x128] sm:$0xf]
    %v288 = vld [vmem:[#allocation4 + $0x12c] sm:$0xf]
    %v289 = vld [vmem:[#allocation4 + $0x130] sm:$0xf]
    %v290 = vld [vmem:[#allocation4 + $0x134] sm:$0xf]
    %v291 = vld [vmem:[#allocation4 + $0x138] sm:$0xf]
    %v292 = vld [vmem:[#allocation4 + $0x13c] sm:$0xf]
    %v293 = vld [vmem:[#allocation4 + $0x140] sm:$0xf]
    %v294 = vld [vmem:[#allocation4 + $0x144] sm:$0xf]
    %v295 = vld [vmem:[#allocation4 + $0x148] sm:$0xf]
    %v296 = vld [vmem:[#allocation4 + $0x14c] sm:$0xf]
    %v297 = vld [vmem:[#allocation4 + $0x150] sm:$0xf]
    %v298 = vld [vmem:[#allocation4 + $0x154] sm:$0xf]
    %v299 = vld [vmem:[#allocation4 + $0x158] sm:$0xf]
    %v300 = vld [vmem:[#allocation4 + $0x15c] sm:$0xf]
    %v301 = vld [vmem:[#allocation4 + $0x160] sm:$0xf]
    %v302 = vld [vmem:[#allocation4 + $0x164] sm:$0xf]
    %v303 = vld [vmem:[#allocation4 + $0x168] sm:$0xf]
    %v304 = vld [vmem:[#allocation4 + $0x16c] sm:$0xf]
    %v305 = vld [vmem:[#allocation4 + $0x170] sm:$0xf]
    %v306 = vld [vmem:[#allocation4 + $0x174] sm:$0xf]
    %v307 = vld [vmem:[#allocation4 + $0x178] sm:$0xf]
    %v308 = vld [vmem:[#allocation4 + $0x17c] sm:$0xf]
    %v309 = vld [vmem:[#allocation4 + $0x180] sm:$0xf]
    %v310 = vld [vmem:[#allocation4 + $0x184] sm:$0xf]
    %v311 = vld [vmem:[#allocation4 + $0x188] sm:$0xf]
    %v312 = vld [vmem:[#allocation4 + $0x18c] sm:$0xf]
    %v313 = vld [vmem:[#allocation4 + $0x190] sm:$0xf]
    %v314 = vld [vmem:[#allocation4 + $0x194] sm:$0xf]
    %v315 = vld [vmem:[#allocation4 + $0x198] sm:$0xf]
    %v316 = vld [vmem:[#allocation4 + $0x19c] sm:$0xf]
    %v317 = vld [vmem:[#allocation4 + $0x1a0] sm:$0xf]
    %v318 = vld [vmem:[#allocation4 + $0x1a4] sm:$0xf]
    %v319 = vld [vmem:[#allocation4 + $0x1a8] sm:$0xf]
    %v320 = vld [vmem:[#allocation4 + $0x1ac] sm:$0xf]
    %v321 = vld [vmem:[#allocation4 + $0x1b0] sm:$0xf]
    %v322 = vld [vmem:[#allocation4 + $0x1b4] sm:$0xf]
    %v323 = vld [vmem:[#allocation4 + $0x1b8] sm:$0xf]
    %v324 = vld [vmem:[#allocation4 + $0x1bc] sm:$0xf]
    %v325 = vld [vmem:[#allocation4 + $0x1c0] sm:$0xf]
    %v326 = vld [vmem:[#allocation4 + $0x1c4] sm:$0xf]
    %v327 = vld [vmem:[#allocation4 + $0x1c8] sm:$0xf]
    %v328 = vld [vmem:[#allocation4 + $0x1cc] sm:$0xf]
    %v329 = vld [vmem:[#allocation4 + $0x1d0] sm:$0xf]
    %v330 = vld [vmem:[#allocation4 + $0x1d4] sm:$0xf]
    %v331 = vld [vmem:[#allocation4 + $0x1d8] sm:$0xf]
    %v332 = vld [vmem:[#allocation4 + $0x1dc] sm:$0xf]
    %v333 = vld [vmem:[#allocation4 + $0x1e0] sm:$0xf]
    %v334 = vld [vmem:[#allocation4 + $0x1e4] sm:$0xf]
    %v335 = vld [vmem:[#allocation4 + $0x1e8] sm:$0xf]
    %v336 = vld [vmem:[#allocation4 + $0x1ec] sm:$0xf]
    %v337 = vld [vmem:[#allocation4 + $0x1f0] sm:$0xf]
    %v338 = vld [vmem:[#allocation4 + $0x1f4] sm:$0xf]
    %v339 = vld [vmem:[#allocation4 + $0x1f8] sm:$0xf]
    %v340 = vld [vmem:[#allocation4 + $0x1fc] sm:$0xf]
    %v341 = vld [vmem:[#allocation4 + $0x200] sm:$0xf]
    %v342 = vld [vmem:[#allocation4 + $0x204] sm:$0xf]
    %v343 = vld [vmem:[#allocation4 + $0x208] sm:$0xf]
    %v344 = vld [vmem:[#allocation4 + $0x20c] sm:$0xf]
    %v345 = vld [vmem:[#allocation4 + $0x210] sm:$0xf]
    %v346 = vld [vmem:[#allocation4 + $0x214] sm:$0xf]
    %v347 = vld [vmem:[#allocation4 + $0x218] sm:$0xf]
    %v348 = vld [vmem:[#allocation4 + $0x21c] sm:$0xf]
    %v349 = vld [vmem:[#allocation4 + $0x220] sm:$0xf]
    %v350 = vld [vmem:[#allocation4 + $0x224] sm:$0xf]
    %v351 = vld [vmem:[#allocation4 + $0x228] sm:$0xf]
    %v352 = vld [vmem:[#allocation4 + $0x22c] sm:$0xf]
    %v353 = vld [vmem:[#allocation4 + $0x230] sm:$0xf]
    %v354 = vld [vmem:[#allocation4 + $0x234] sm:$0xf]
    %v355 = vld [vmem:[#allocation4 + $0x238] sm:$0xf]
    %v356 = vld [vmem:[#allocation4 + $0x23c] sm:$0xf]
    %v357 = vld [vmem:[#allocation4 + $0x240] sm:$0xf]
    %v358 = vld [vmem:[#allocation4 + $0x244] sm:$0xf]
    %v359 = vld [vmem:[#allocation4 + $0x248] sm:$0xf]
    %v360 = vld [vmem:[#allocation4 + $0x24c] sm:$0xf]
    %v361 = vld [vmem:[#allocation4 + $0x250] sm:$0xf]
    %v362 = vld [vmem:[#allocation4 + $0x254] sm:$0xf]
    %v363 = vld [vmem:[#allocation4 + $0x258] sm:$0xf]
    %v364 = vld [vmem:[#allocation4 + $0x25c] sm:$0xf]
    %v365 = vld [vmem:[#allocation4 + $0x260] sm:$0xf]
    %v366 = vld [vmem:[#allocation4 + $0x264] sm:$0xf]
    %v367 = vld [vmem:[#allocation4 + $0x268] sm:$0xf]
    %v368 = vld [vmem:[#allocation4 + $0x26c] sm:$0xf]
    %v369 = vld [vmem:[#allocation4 + $0x270] sm:$0xf]
    %v370 = vld [vmem:[#allocation4 + $0x274] sm:$0xf]
    %v371 = vld [vmem:[#allocation4 + $0x278] sm:$0xf]
    %v372 = vld [vmem:[#allocation4 + $0x27c] sm:$0xf]
    %v373 = vld [vmem:[#allocation4 + $0x280] sm:$0xf]
    %v374 = vld [vmem:[#allocation4 + $0x284] sm:$0xf]
    %v375 = vld [vmem:[#allocation4 + $0x288] sm:$0xf]
    %v376 = vld [vmem:[#allocation4 + $0x28c] sm:$0xf]
    %v377 = vld [vmem:[#allocation4 + $0x290] sm:$0xf]
    %v378 = vld [vmem:[#allocation4 + $0x294] sm:$0xf]
    %v379 = vld [vmem:[#allocation4 + $0x298] sm:$0xf]
    %v380 = vld [vmem:[#allocation4 + $0x29c] sm:$0xf]
    %v381 = vld [vmem:[#allocation4 + $0x2a0] sm:$0xf]
    %v382 = vld [vmem:[#allocation4 + $0x2a4] sm:$0xf]
    %v383 = vld [vmem:[#allocation4 + $0x2a8] sm:$0xf]
    %v384 = vld [vmem:[#allocation4 + $0x2ac] sm:$0xf]
    %v385 = vld [vmem:[#allocation4 + $0x2b0] sm:$0xf]
    %v386 = vld [vmem:[#allocation4 + $0x2b4] sm:$0xf]
    %v387 = vld [vmem:[#allocation4 + $0x2b8] sm:$0xf]
    %v388 = vld [vmem:[#allocation4 + $0x2bc] sm:$0xf]
    %v389 = vld [vmem:[#allocation4 + $0x2c0] sm:$0xf]
    %v390 = vld [vmem:[#allocation4 + $0x2c4] sm:$0xf]
    %v391 = vld [vmem:[#allocation4 + $0x2c8] sm:$0xf]
    %v392 = vld [vmem:[#allocation4 + $0x2cc] sm:$0xf]
    %v393 = vld [vmem:[#allocation4 + $0x2d0] sm:$0xf]
    %v394 = vld [vmem:[#allocation4 + $0x2d4] sm:$0xf]
    %v395 = vld [vmem:[#allocation4 + $0x2d8] sm:$0xf]
    %v396 = vld [vmem:[#allocation4 + $0x2dc] sm:$0xf]
    %v397 = vld [vmem:[#allocation4 + $0x2e0] sm:$0xf]
    %v398 = vld [vmem:[#allocation4 + $0x2e4] sm:$0xf]
    %v399 = vld [vmem:[#allocation4 + $0x2e8] sm:$0xf]
    %v400 = vld [vmem:[#allocation4 + $0x2ec] sm:$0xf]
    %v401 = vld [vmem:[#allocation4 + $0x2f0] sm:$0xf]
    %v402 = vld [vmem:[#allocation4 + $0x2f4] sm:$0xf]
    %v403 = vld [vmem:[#allocation4 + $0x2f8] sm:$0xf]
    %v404 = vld [vmem:[#allocation4 + $0x2fc] sm:$0xf]
    %v405 = vld [vmem:[%s7] sm:$0x1]
    %407 = vset.pattern.permute.xlu0 0
    %408 = vperm.xlu0 %407, %v106
    %v409 = vpop.permute.xlu0 %408
    %412 = vset.pattern.permute.xlu0 0
    %413 = vperm.xlu0 %412, %v107
    %v414 = vpop.permute.xlu0 %413
    %417 = vset.pattern.permute.xlu0 0
    %418 = vperm.xlu0 %417, %v108
    %v419 = vpop.permute.xlu0 %418
    %422 = vset.pattern.permute.xlu0 0
    %423 = vperm.xlu0 %422, %v109
    %v424 = vpop.permute.xlu0 %423
    %427 = vset.pattern.permute.xlu0 0
    %428 = vperm.xlu0 %427, %v110
    %v429 = vpop.permute.xlu0 %428
    %432 = vset.pattern.permute.xlu0 0
    %433 = vperm.xlu0 %432, %v111
    %v434 = vpop.permute.xlu0 %433
    %437 = vset.pattern.permute.xlu0 0
    %438 = vperm.xlu0 %437, %v112
    %v439 = vpop.permute.xlu0 %438
    %442 = vset.pattern.permute.xlu0 0
    %443 = vperm.xlu0 %442, %v113
    %v444 = vpop.permute.xlu0 %443
    %v447 = vlaneseq
    %v448 = vshrl.u32 %v447, 7
    %v449 = vsub.s32 0, %v448
    %v450 = vrot.slane %v114, %v449
    %v451 = vlaneseq
    %v452 = vshrl.u32 %v451, 7
    %v453 = vsub.s32 4, %v452
    %v454 = vrot.slane %v114, %v453
    %v457 = vlaneseq
    %v458 = vshrl.u32 %v457, 7
    %v459 = vsub.s32 0, %v458
    %v460 = vrot.slane %v450, %v459
    %v461 = vlaneseq
    %v462 = vshrl.u32 %v461, 7
    %v463 = vsub.s32 0, %v462
    %v464 = vrot.slane %v454, %v463
    %v465 = vmul.f32 %v409, %v460
    %v466 = vmul.f32 %v409, %v464
    %v467 = vmul.f32 %v414, %v460
    %v468 = vmul.f32 %v414, %v464
    %v469 = vmul.f32 %v419, %v460
    %v470 = vmul.f32 %v419, %v464
    %v471 = vmul.f32 %v424, %v460
    %v472 = vmul.f32 %v424, %v464
    %v473 = vmul.f32 %v429, %v460
    %v474 = vmul.f32 %v429, %v464
    %v475 = vmul.f32 %v434, %v460
    %v476 = vmul.f32 %v434, %v464
    %v477 = vmul.f32 %v439, %v460
    %v478 = vmul.f32 %v439, %v464
    %v479 = vmul.f32 %v444, %v460
    %v480 = vmul.f32 %v444, %v464
    %v481 = vlaneseq
    %v482 = vshrl.u32 %v481, 7
    %v483 = vsub.s32 1, %v482
    %v484 = vrot.slane %v114, %v483
    %v485 = vlaneseq
    %v486 = vshrl.u32 %v485, 7
    %v487 = vsub.s32 5, %v486
    %v488 = vrot.slane %v114, %v487
    %v491 = vlaneseq
    %v492 = vshrl.u32 %v491, 7
    %v493 = vsub.s32 1, %v492
    %v494 = vrot.slane %v484, %v493
    %v495 = vlaneseq
    %v496 = vshrl.u32 %v495, 7
    %v497 = vsub.s32 1, %v496
    %v498 = vrot.slane %v488, %v497
    %v499 = vmul.f32 %v409, %v494
    %v500 = vmul.f32 %v409, %v498
    %v501 = vmul.f32 %v414, %v494
    %v502 = vmul.f32 %v414, %v498
    %v503 = vmul.f32 %v419, %v494
    %v504 = vmul.f32 %v419, %v498
    %v505 = vmul.f32 %v424, %v494
    %v506 = vmul.f32 %v424, %v498
    %v507 = vmul.f32 %v429, %v494
    %v508 = vmul.f32 %v429, %v498
    %v509 = vmul.f32 %v434, %v494
    %v510 = vmul.f32 %v434, %v498
    %v511 = vmul.f32 %v439, %v494
    %v512 = vmul.f32 %v439, %v498
    %v513 = vmul.f32 %v444, %v494
    %v514 = vmul.f32 %v444, %v498
    %vm531 = vcmask 1046528
    %v532 = vrot.slane %v499, 1
    %v533 = vrot.slane %v501, 1
    %v534 = vsel %vm531, %v532, %v533
    %v535 = vrot.slane %v500, 1
    %v536 = vrot.slane %v502, 1
    %v537 = vsel %vm531, %v535, %v536
    %v538 = vrot.slane %v503, 1
    %v539 = vsel %vm531, %v533, %v538
    %v540 = vrot.slane %v504, 1
    %v541 = vsel %vm531, %v536, %v540
    %v542 = vrot.slane %v505, 1
    %v543 = vsel %vm531, %v538, %v542
    %v544 = vrot.slane %v506, 1
    %v545 = vsel %vm531, %v540, %v544
    %v546 = vrot.slane %v507, 1
    %v547 = vsel %vm531, %v542, %v546
    %v548 = vrot.slane %v508, 1
    %v549 = vsel %vm531, %v544, %v548
    %v550 = vrot.slane %v509, 1
    %v551 = vsel %vm531, %v546, %v550
    %v552 = vrot.slane %v510, 1
    %v553 = vsel %vm531, %v548, %v552
    %v554 = vrot.slane %v511, 1
    %v555 = vsel %vm531, %v550, %v554
    %v556 = vrot.slane %v512, 1
    %v557 = vsel %vm531, %v552, %v556
    %v558 = vrot.slane %v513, 1
    %v559 = vsel %vm531, %v554, %v558
    %v560 = vrot.slane %v514, 1
    %v561 = vsel %vm531, %v556, %v560
    %v578 = vadd.f32 %v465, %v534
    %v579 = vadd.f32 %v466, %v537
    %v580 = vadd.f32 %v467, %v539
    %v581 = vadd.f32 %v468, %v541
    %v582 = vadd.f32 %v469, %v543
    %v583 = vadd.f32 %v470, %v545
    %v584 = vadd.f32 %v471, %v547
    %v585 = vadd.f32 %v472, %v549
    %v586 = vadd.f32 %v473, %v551
    %v587 = vadd.f32 %v474, %v553
    %v588 = vadd.f32 %v475, %v555
    %v589 = vadd.f32 %v476, %v557
    %v590 = vadd.f32 %v477, %v559
    %v591 = vadd.f32 %v478, %v561
    %v592 = vadd.f32 %v479, %v558
    %v593 = vadd.f32 %v480, %v560
    %v594 = vlaneseq
    %v595 = vshrl.u32 %v594, 7
    %v596 = vsub.s32 2, %v595
    %v597 = vrot.slane %v114, %v596
    %v598 = vlaneseq
    %v599 = vshrl.u32 %v598, 7
    %v600 = vsub.s32 6, %v599
    %v601 = vrot.slane %v114, %v600
    %v604 = vlaneseq
    %v605 = vshrl.u32 %v604, 7
    %v606 = vsub.s32 2, %v605
    %v607 = vrot.slane %v597, %v606
    %v608 = vlaneseq
    %v609 = vshrl.u32 %v608, 7
    %v610 = vsub.s32 2, %v609
    %v611 = vrot.slane %v601, %v610
    %v612 = vmul.f32 %v409, %v607
    %v613 = vmul.f32 %v409, %v611
    %v614 = vmul.f32 %v414, %v607
    %v615 = vmul.f32 %v414, %v611
    %v616 = vmul.f32 %v419, %v607
    %v617 = vmul.f32 %v419, %v611
    %v618 = vmul.f32 %v424, %v607
    %v619 = vmul.f32 %v424, %v611
    %v620 = vmul.f32 %v429, %v607
    %v621 = vmul.f32 %v429, %v611
    %v622 = vmul.f32 %v434, %v607
    %v623 = vmul.f32 %v434, %v611
    %v624 = vmul.f32 %v439, %v607
    %v625 = vmul.f32 %v439, %v611
    %v626 = vmul.f32 %v444, %v607
    %v627 = vmul.f32 %v444, %v611
    %vm644 = vcmask 1045504
    %v645 = vrot.slane %v612, 2
    %v646 = vrot.slane %v614, 2
    %v647 = vsel %vm644, %v645, %v646
    %v648 = vrot.slane %v613, 2
    %v649 = vrot.slane %v615, 2
    %v650 = vsel %vm644, %v648, %v649
    %v651 = vrot.slane %v616, 2
    %v652 = vsel %vm644, %v646, %v651
    %v653 = vrot.slane %v617, 2
    %v654 = vsel %vm644, %v649, %v653
    %v655 = vrot.slane %v618, 2
    %v656 = vsel %vm644, %v651, %v655
    %v657 = vrot.slane %v619, 2
    %v658 = vsel %vm644, %v653, %v657
    %v659 = vrot.slane %v620, 2
    %v660 = vsel %vm644, %v655, %v659
    %v661 = vrot.slane %v621, 2
    %v662 = vsel %vm644, %v657, %v661
    %v663 = vrot.slane %v622, 2
    %v664 = vsel %vm644, %v659, %v663
    %v665 = vrot.slane %v623, 2
    %v666 = vsel %vm644, %v661, %v665
    %v667 = vrot.slane %v624, 2
    %v668 = vsel %vm644, %v663, %v667
    %v669 = vrot.slane %v625, 2
    %v670 = vsel %vm644, %v665, %v669
    %v671 = vrot.slane %v626, 2
    %v672 = vsel %vm644, %v667, %v671
    %v673 = vrot.slane %v627, 2
    %v674 = vsel %vm644, %v669, %v673
    %v691 = vadd.f32 %v578, %v647
    %v692 = vadd.f32 %v579, %v650
    %v693 = vadd.f32 %v580, %v652
    %v694 = vadd.f32 %v581, %v654
    %v695 = vadd.f32 %v582, %v656
    %v696 = vadd.f32 %v583, %v658
    %v697 = vadd.f32 %v584, %v660
    %v698 = vadd.f32 %v585, %v662
    %v699 = vadd.f32 %v586, %v664
    %v700 = vadd.f32 %v587, %v666
    %v701 = vadd.f32 %v588, %v668
    %v702 = vadd.f32 %v589, %v670
    %v703 = vadd.f32 %v590, %v672
    %v704 = vadd.f32 %v591, %v674
    %v705 = vadd.f32 %v592, %v671
    %v706 = vadd.f32 %v593, %v673
    %v708 = vlaneseq
    %v709 = vshrl.u32 %v708, 7
    %v710 = vsub.s32 0, %v709
    %v711 = vrot.slane %v115, %v710
    %v712 = vlaneseq
    %v713 = vshrl.u32 %v712, 7
    %v714 = vsub.s32 1, %v713
    %v715 = vrot.slane %v115, %v714
    %v718 = vadd.f32 %v691, %v711
    %v719 = vadd.f32 %v692, %v715
    %v720 = vadd.f32 %v693, %v711
    %v721 = vadd.f32 %v694, %v715
    %v722 = vadd.f32 %v695, %v711
    %v723 = vadd.f32 %v696, %v715
    %v724 = vadd.f32 %v697, %v711
    %v725 = vadd.f32 %v698, %v715
    %v726 = vadd.f32 %v699, %v711
    %v727 = vadd.f32 %v700, %v715
    %v728 = vadd.f32 %v701, %v711
    %v729 = vadd.f32 %v702, %v715
    %v730 = vadd.f32 %v703, %v711
    %v731 = vadd.f32 %v704, %v715
    %v732 = vadd.f32 %v705, %v711
    %v733 = vadd.f32 %v706, %v715
    %v734 = vmax.f32 %v718, 0.0
    %v735 = vmax.f32 %v719, 0.0
    %v736 = vmax.f32 %v720, 0.0
    %v737 = vmax.f32 %v721, 0.0
    %v738 = vmax.f32 %v722, 0.0
    %v739 = vmax.f32 %v723, 0.0
    %v740 = vmax.f32 %v724, 0.0
    %v741 = vmax.f32 %v725, 0.0
    %v742 = vmax.f32 %v726, 0.0
    %v743 = vmax.f32 %v727, 0.0
    %v744 = vmax.f32 %v728, 0.0
    %v745 = vmax.f32 %v729, 0.0
    %v746 = vmax.f32 %v730, 0.0
    %v747 = vmax.f32 %v731, 0.0
    %v748 = vmax.f32 %v732, 0.0
    %v749 = vmax.f32 %v733, 0.0
    %v766 = vrot.slane %v734, 1
    %v767 = vrot.slane %v736, 1
    %v768 = vsel %vm531, %v766, %v767
    %v769 = vrot.slane %v735, 1
    %v770 = vrot.slane %v737, 1
    %v771 = vsel %vm531, %v769, %v770
    %v772 = vrot.slane %v738, 1
    %v773 = vsel %vm531, %v767, %v772
    %v774 = vrot.slane %v739, 1
    %v775 = vsel %vm531, %v770, %v774
    %v776 = vrot.slane %v740, 1
    %v777 = vsel %vm531, %v772, %v776
    %v778 = vrot.slane %v741, 1
    %v779 = vsel %vm531, %v774, %v778
    %v780 = vrot.slane %v742, 1
    %v781 = vsel %vm531, %v776, %v780
    %v782 = vrot.slane %v743, 1
    %v783 = vsel %vm531, %v778, %v782
    %v784 = vrot.slane %v744, 1
    %v785 = vsel %vm531, %v780, %v784
    %v786 = vrot.slane %v745, 1
    %v787 = vsel %vm531, %v782, %v786
    %v788 = vrot.slane %v746, 1
    %v789 = vsel %vm531, %v784, %v788
    %v790 = vrot.slane %v747, 1
    %v791 = vsel %vm531, %v786, %v790
    %v792 = vrot.slane %v748, 1
    %v793 = vsel %vm531, %v788, %v792
    %v794 = vrot.slane %v749, 1
    %v795 = vsel %vm531, %v790, %v794
    %v812 = vrot.slane %v734, 2
    %v813 = vrot.slane %v736, 2
    %v814 = vsel %vm644, %v812, %v813
    %v815 = vrot.slane %v735, 2
    %v816 = vrot.slane %v737, 2
    %v817 = vsel %vm644, %v815, %v816
    %v818 = vrot.slane %v738, 2
    %v819 = vsel %vm644, %v813, %v818
    %v820 = vrot.slane %v739, 2
    %v821 = vsel %vm644, %v816, %v820
    %v822 = vrot.slane %v740, 2
    %v823 = vsel %vm644, %v818, %v822
    %v824 = vrot.slane %v741, 2
    %v825 = vsel %vm644, %v820, %v824
    %v826 = vrot.slane %v742, 2
    %v827 = vsel %vm644, %v822, %v826
    %v828 = vrot.slane %v743, 2
    %v829 = vsel %vm644, %v824, %v828
    %v830 = vrot.slane %v744, 2
    %v831 = vsel %vm644, %v826, %v830
    %v832 = vrot.slane %v745, 2
    %v833 = vsel %vm644, %v828, %v832
    %v834 = vrot.slane %v746, 2
    %v835 = vsel %vm644, %v830, %v834
    %v836 = vrot.slane %v747, 2
    %v837 = vsel %vm644, %v832, %v836
    %v838 = vrot.slane %v748, 2
    %v839 = vsel %vm644, %v834, %v838
    %v840 = vrot.slane %v749, 2
    %v841 = vsel %vm644, %v836, %v840
    %v858 = vpack.c.bf16 %v736, %v734
    %v859 = vpack.c.bf16 %v737, %v735
    %v860 = vpack.c.bf16 %v773, %v768
    %v861 = vpack.c.bf16 %v775, %v771
    %v862 = vpack.c.bf16 %v819, %v814
    %v863 = vpack.c.bf16 %v821, %v817
    %v864 = vpack.c.bf16 %v740, %v738
    %v865 = vpack.c.bf16 %v741, %v739
    %v866 = vpack.c.bf16 %v781, %v777
    %v867 = vpack.c.bf16 %v783, %v779
    %v868 = vpack.c.bf16 %v827, %v823
    %v869 = vpack.c.bf16 %v829, %v825
    %v870 = vpack.c.bf16 %v744, %v742
    %v871 = vpack.c.bf16 %v745, %v743
    %v872 = vpack.c.bf16 %v789, %v785
    %v873 = vpack.c.bf16 %v791, %v787
    %v874 = vpack.c.bf16 %v835, %v831
    %v875 = vpack.c.bf16 %v837, %v833
    %v876 = vpack.c.bf16 %v748, %v746
    %v877 = vpack.c.bf16 %v749, %v747
    %v878 = vpack.c.bf16 %v792, %v793
    %v879 = vpack.c.bf16 %v794, %v795
    %v880 = vpack.c.bf16 %v838, %v839
    %v881 = vpack.c.bf16 %v840, %v841
    %v883 = vlaneseq
    %v884 = vshrl.u32 %v883, 7
    %v885 = vsub.s32 0, %v884
    %v886 = vrot.slane %v212, %v885
    %v887 = vlaneseq
    %v888 = vshrl.u32 %v887, 7
    %v889 = vsub.s32 1, %v888
    %v890 = vrot.slane %v212, %v889
    %v989 = vunpack.c.l.b16 %v116
    %v990 = vunpack.c.h.b16 %v116
    %v991 = vunpack.c.l.b16 %v117
    %v992 = vunpack.c.h.b16 %v117
    %v993 = vunpack.c.l.b16 %v118
    %v994 = vunpack.c.h.b16 %v118
    %v995 = vunpack.c.l.b16 %v119
    %v996 = vunpack.c.h.b16 %v119
    %v997 = vunpack.c.l.b16 %v120
    %v998 = vunpack.c.h.b16 %v120
    %v999 = vunpack.c.l.b16 %v121
    %v1000 = vunpack.c.h.b16 %v121
    %v1001 = vunpack.c.l.b16 %v122
    %v1002 = vunpack.c.h.b16 %v122
    %v1003 = vunpack.c.l.b16 %v123
    %v1004 = vunpack.c.h.b16 %v123
    %v1005 = vunpack.c.l.b16 %v124
    %v1006 = vunpack.c.h.b16 %v124
    %v1007 = vunpack.c.l.b16 %v125
    %v1008 = vunpack.c.h.b16 %v125
    %v1009 = vunpack.c.l.b16 %v126
    %v1010 = vunpack.c.h.b16 %v126
    %v1011 = vunpack.c.l.b16 %v127
    %v1012 = vunpack.c.h.b16 %v127
    %v1013 = vunpack.c.l.b16 %v128
    %v1014 = vunpack.c.h.b16 %v128
    %v1015 = vunpack.c.l.b16 %v129
    %v1016 = vunpack.c.h.b16 %v129
    %v1017 = vunpack.c.l.b16 %v130
    %v1018 = vunpack.c.h.b16 %v130
    %v1019 = vunpack.c.l.b16 %v131
    %v1020 = vunpack.c.h.b16 %v131
    %v1021 = vunpack.c.l.b16 %v132
    %v1022 = vunpack.c.h.b16 %v132
    %v1023 = vunpack.c.l.b16 %v133
    %v1024 = vunpack.c.h.b16 %v133
    %v1025 = vunpack.c.l.b16 %v134
    %v1026 = vunpack.c.h.b16 %v134
    %v1027 = vunpack.c.l.b16 %v135
    %v1028 = vunpack.c.h.b16 %v135
    %v1029 = vunpack.c.l.b16 %v136
    %v1030 = vunpack.c.h.b16 %v136
    %v1031 = vunpack.c.l.b16 %v137
    %v1032 = vunpack.c.h.b16 %v137
    %v1033 = vunpack.c.l.b16 %v138
    %v1034 = vunpack.c.h.b16 %v138
    %v1035 = vunpack.c.l.b16 %v139
    %v1036 = vunpack.c.h.b16 %v139
    %v1037 = vunpack.c.l.b16 %v140
    %v1038 = vunpack.c.h.b16 %v140
    %v1039 = vunpack.c.l.b16 %v141
    %v1040 = vunpack.c.h.b16 %v141
    %v1041 = vunpack.c.l.b16 %v142
    %v1042 = vunpack.c.h.b16 %v142
    %v1043 = vunpack.c.l.b16 %v143
    %v1044 = vunpack.c.h.b16 %v143
    %v1045 = vunpack.c.l.b16 %v144
    %v1046 = vunpack.c.h.b16 %v144
    %v1047 = vunpack.c.l.b16 %v145
    %v1048 = vunpack.c.h.b16 %v145
    %v1049 = vunpack.c.l.b16 %v146
    %v1050 = vunpack.c.h.b16 %v146
    %v1051 = vunpack.c.l.b16 %v147
    %v1052 = vunpack.c.h.b16 %v147
    %v1053 = vunpack.c.l.b16 %v148
    %v1054 = vunpack.c.h.b16 %v148
    %v1055 = vunpack.c.l.b16 %v149
    %v1056 = vunpack.c.h.b16 %v149
    %v1057 = vunpack.c.l.b16 %v150
    %v1058 = vunpack.c.h.b16 %v150
    %v1059 = vunpack.c.l.b16 %v151
    %v1060 = vunpack.c.h.b16 %v151
    %v1061 = vunpack.c.l.b16 %v152
    %v1062 = vunpack.c.h.b16 %v152
    %v1063 = vunpack.c.l.b16 %v153
    %v1064 = vunpack.c.h.b16 %v153
    %v1065 = vunpack.c.l.b16 %v154
    %v1066 = vunpack.c.h.b16 %v154
    %v1067 = vunpack.c.l.b16 %v155
    %v1068 = vunpack.c.h.b16 %v155
    %v1069 = vunpack.c.l.b16 %v156
    %v1070 = vunpack.c.h.b16 %v156
    %v1071 = vunpack.c.l.b16 %v157
    %v1072 = vunpack.c.h.b16 %v157
    %v1073 = vunpack.c.l.b16 %v158
    %v1074 = vunpack.c.h.b16 %v158
    %v1075 = vunpack.c.l.b16 %v159
    %v1076 = vunpack.c.h.b16 %v159
    %v1077 = vunpack.c.l.b16 %v160
    %v1078 = vunpack.c.h.b16 %v160
    %v1079 = vunpack.c.l.b16 %v161
    %v1080 = vunpack.c.h.b16 %v161
    %v1081 = vunpack.c.l.b16 %v162
    %v1082 = vunpack.c.h.b16 %v162
    %v1083 = vunpack.c.l.b16 %v163
    %v1084 = vunpack.c.h.b16 %v163
    %v1085 = vunpack.c.l.b16 %v164
    %v1086 = vunpack.c.h.b16 %v164
    %v1087 = vunpack.c.l.b16 %v165
    %v1088 = vunpack.c.h.b16 %v165
    %v1089 = vunpack.c.l.b16 %v166
    %v1090 = vunpack.c.h.b16 %v166
    %v1091 = vunpack.c.l.b16 %v167
    %v1092 = vunpack.c.h.b16 %v167
    %v1093 = vunpack.c.l.b16 %v168
    %v1094 = vunpack.c.h.b16 %v168
    %v1095 = vunpack.c.l.b16 %v169
    %v1096 = vunpack.c.h.b16 %v169
    %v1097 = vunpack.c.l.b16 %v170
    %v1098 = vunpack.c.h.b16 %v170
    %v1099 = vunpack.c.l.b16 %v171
    %v1100 = vunpack.c.h.b16 %v171
    %v1101 = vunpack.c.l.b16 %v172
    %v1102 = vunpack.c.h.b16 %v172
    %v1103 = vunpack.c.l.b16 %v173
    %v1104 = vunpack.c.h.b16 %v173
    %v1105 = vunpack.c.l.b16 %v174
    %v1106 = vunpack.c.h.b16 %v174
    %v1107 = vunpack.c.l.b16 %v175
    %v1108 = vunpack.c.h.b16 %v175
    %v1109 = vunpack.c.l.b16 %v176
    %v1110 = vunpack.c.h.b16 %v176
    %v1111 = vunpack.c.l.b16 %v177
    %v1112 = vunpack.c.h.b16 %v177
    %v1113 = vunpack.c.l.b16 %v178
    %v1114 = vunpack.c.h.b16 %v178
    %v1115 = vunpack.c.l.b16 %v179
    %v1116 = vunpack.c.h.b16 %v179
    %v1117 = vunpack.c.l.b16 %v180
    %v1118 = vunpack.c.h.b16 %v180
    %v1119 = vunpack.c.l.b16 %v181
    %v1120 = vunpack.c.h.b16 %v181
    %v1121 = vunpack.c.l.b16 %v182
    %v1122 = vunpack.c.h.b16 %v182
    %v1123 = vunpack.c.l.b16 %v183
    %v1124 = vunpack.c.h.b16 %v183
    %v1125 = vunpack.c.l.b16 %v184
    %v1126 = vunpack.c.h.b16 %v184
    %v1127 = vunpack.c.l.b16 %v185
    %v1128 = vunpack.c.h.b16 %v185
    %v1129 = vunpack.c.l.b16 %v186
    %v1130 = vunpack.c.h.b16 %v186
    %v1131 = vunpack.c.l.b16 %v187
    %v1132 = vunpack.c.h.b16 %v187
    %v1133 = vunpack.c.l.b16 %v188
    %v1134 = vunpack.c.h.b16 %v188
    %v1135 = vunpack.c.l.b16 %v189
    %v1136 = vunpack.c.h.b16 %v189
    %v1137 = vunpack.c.l.b16 %v190
    %v1138 = vunpack.c.h.b16 %v190
    %v1139 = vunpack.c.l.b16 %v191
    %v1140 = vunpack.c.h.b16 %v191
    %v1141 = vunpack.c.l.b16 %v192
    %v1142 = vunpack.c.h.b16 %v192
    %v1143 = vunpack.c.l.b16 %v193
    %v1144 = vunpack.c.h.b16 %v193
    %v1145 = vunpack.c.l.b16 %v194
    %v1146 = vunpack.c.h.b16 %v194
    %v1147 = vunpack.c.l.b16 %v195
    %v1148 = vunpack.c.h.b16 %v195
    %v1149 = vunpack.c.l.b16 %v196
    %v1150 = vunpack.c.h.b16 %v196
    %v1151 = vunpack.c.l.b16 %v197
    %v1152 = vunpack.c.h.b16 %v197
    %v1153 = vunpack.c.l.b16 %v198
    %v1154 = vunpack.c.h.b16 %v198
    %v1155 = vunpack.c.l.b16 %v199
    %v1156 = vunpack.c.h.b16 %v199
    %v1157 = vunpack.c.l.b16 %v200
    %v1158 = vunpack.c.h.b16 %v200
    %v1159 = vunpack.c.l.b16 %v201
    %v1160 = vunpack.c.h.b16 %v201
    %v1161 = vunpack.c.l.b16 %v202
    %v1162 = vunpack.c.h.b16 %v202
    %v1163 = vunpack.c.l.b16 %v203
    %v1164 = vunpack.c.h.b16 %v203
    %v1165 = vunpack.c.l.b16 %v204
    %v1166 = vunpack.c.h.b16 %v204
    %v1167 = vunpack.c.l.b16 %v205
    %v1168 = vunpack.c.h.b16 %v205
    %v1169 = vunpack.c.l.b16 %v206
    %v1170 = vunpack.c.h.b16 %v206
    %v1171 = vunpack.c.l.b16 %v207
    %v1172 = vunpack.c.h.b16 %v207
    %v1173 = vunpack.c.l.b16 %v208
    %v1174 = vunpack.c.h.b16 %v208
    %v1175 = vunpack.c.l.b16 %v209
    %v1176 = vunpack.c.h.b16 %v209
    %v1177 = vunpack.c.l.b16 %v210
    %v1178 = vunpack.c.h.b16 %v210
    %v1179 = vunpack.c.l.b16 %v211
    %v1180 = vunpack.c.h.b16 %v211
    %v1181 = vpack.c.b16 %v991, %v989
    %v1182 = vpack.c.b16 %v992, %v990
    %v1183 = vpack.c.b16 %v995, %v993
    %v1184 = vpack.c.b16 %v996, %v994
    %v1185 = vpack.c.b16 %v999, %v997
    %v1186 = vpack.c.b16 %v1000, %v998
    %v1187 = vpack.c.b16 %v1003, %v1001
    %v1188 = vpack.c.b16 %v1004, %v1002
    %v1189 = vpack.c.b16 %v1007, %v1005
    %v1190 = vpack.c.b16 %v1008, %v1006
    %v1191 = vpack.c.b16 %v1011, %v1009
    %v1192 = vpack.c.b16 %v1012, %v1010
    %v1193 = vpack.c.b16 %v1015, %v1013
    %v1194 = vpack.c.b16 %v1016, %v1014
    %v1195 = vpack.c.b16 %v1019, %v1017
    %v1196 = vpack.c.b16 %v1020, %v1018
    %v1197 = vpack.c.b16 %v1023, %v1021
    %v1198 = vpack.c.b16 %v1024, %v1022
    %v1199 = vpack.c.b16 %v1027, %v1025
    %v1200 = vpack.c.b16 %v1028, %v1026
    %v1201 = vpack.c.b16 %v1031, %v1029
    %v1202 = vpack.c.b16 %v1032, %v1030
    %v1203 = vpack.c.b16 %v1035, %v1033
    %v1204 = vpack.c.b16 %v1036, %v1034
    %v1205 = vpack.c.b16 %v1039, %v1037
    %v1206 = vpack.c.b16 %v1040, %v1038
    %v1207 = vpack.c.b16 %v1043, %v1041
    %v1208 = vpack.c.b16 %v1044, %v1042
    %v1209 = vpack.c.b16 %v1047, %v1045
    %v1210 = vpack.c.b16 %v1048, %v1046
    %v1211 = vpack.c.b16 %v1051, %v1049
    %v1212 = vpack.c.b16 %v1052, %v1050
    %v1213 = vpack.c.b16 %v1055, %v1053
    %v1214 = vpack.c.b16 %v1056, %v1054
    %v1215 = vpack.c.b16 %v1059, %v1057
    %v1216 = vpack.c.b16 %v1060, %v1058
    %v1217 = vpack.c.b16 %v1063, %v1061
    %v1218 = vpack.c.b16 %v1064, %v1062
    %v1219 = vpack.c.b16 %v1067, %v1065
    %v1220 = vpack.c.b16 %v1068, %v1066
    %v1221 = vpack.c.b16 %v1071, %v1069
    %v1222 = vpack.c.b16 %v1072, %v1070
    %v1223 = vpack.c.b16 %v1075, %v1073
    %v1224 = vpack.c.b16 %v1076, %v1074
    %v1225 = vpack.c.b16 %v1079, %v1077
    %v1226 = vpack.c.b16 %v1080, %v1078
    %v1227 = vpack.c.b16 %v1083, %v1081
    %v1228 = vpack.c.b16 %v1084, %v1082
    %v1229 = vpack.c.b16 %v1087, %v1085
    %v1230 = vpack.c.b16 %v1088, %v1086
    %v1231 = vpack.c.b16 %v1091, %v1089
    %v1232 = vpack.c.b16 %v1092, %v1090
    %v1233 = vpack.c.b16 %v1095, %v1093
    %v1234 = vpack.c.b16 %v1096, %v1094
    %v1235 = vpack.c.b16 %v1099, %v1097
    %v1236 = vpack.c.b16 %v1100, %v1098
    %v1237 = vpack.c.b16 %v1103, %v1101
    %v1238 = vpack.c.b16 %v1104, %v1102
    %v1239 = vpack.c.b16 %v1107, %v1105
    %v1240 = vpack.c.b16 %v1108, %v1106
    %v1241 = vpack.c.b16 %v1111, %v1109
    %v1242 = vpack.c.b16 %v1112, %v1110
    %v1243 = vpack.c.b16 %v1115, %v1113
    %v1244 = vpack.c.b16 %v1116, %v1114
    %v1245 = vpack.c.b16 %v1119, %v1117
    %v1246 = vpack.c.b16 %v1120, %v1118
    %v1247 = vpack.c.b16 %v1123, %v1121
    %v1248 = vpack.c.b16 %v1124, %v1122
    %v1249 = vpack.c.b16 %v1127, %v1125
    %v1250 = vpack.c.b16 %v1128, %v1126
    %v1251 = vpack.c.b16 %v1131, %v1129
    %v1252 = vpack.c.b16 %v1132, %v1130
    %v1253 = vpack.c.b16 %v1135, %v1133
    %v1254 = vpack.c.b16 %v1136, %v1134
    %v1255 = vpack.c.b16 %v1139, %v1137
    %v1256 = vpack.c.b16 %v1140, %v1138
    %v1257 = vpack.c.b16 %v1143, %v1141
    %v1258 = vpack.c.b16 %v1144, %v1142
    %v1259 = vpack.c.b16 %v1147, %v1145
    %v1260 = vpack.c.b16 %v1148, %v1146
    %v1261 = vpack.c.b16 %v1151, %v1149
    %v1262 = vpack.c.b16 %v1152, %v1150
    %v1263 = vpack.c.b16 %v1155, %v1153
    %v1264 = vpack.c.b16 %v1156, %v1154
    %v1265 = vpack.c.b16 %v1159, %v1157
    %v1266 = vpack.c.b16 %v1160, %v1158
    %v1267 = vpack.c.b16 %v1163, %v1161
    %v1268 = vpack.c.b16 %v1164, %v1162
    %v1269 = vpack.c.b16 %v1167, %v1165
    %v1270 = vpack.c.b16 %v1168, %v1166
    %v1271 = vpack.c.b16 %v1171, %v1169
    %v1272 = vpack.c.b16 %v1172, %v1170
    %v1273 = vpack.c.b16 %v1175, %v1173
    %v1274 = vpack.c.b16 %v1176, %v1174
    %v1275 = vpack.c.b16 %v1179, %v1177
    %v1276 = vpack.c.b16 %v1180, %v1178
    %1373 = vmatprep.subr.bf16.mxu0 %v1196
    %1374 = vmatpush1.bf16.msra.mxu0 %v1195
    %1375 = vmatprep.subr.bf16.mxu0 %v1194
    %1376 = vmatpush1.bf16.msra.mxu0 %v1193
    %1377 = vmatprep.subr.bf16.mxu0 %v1192
    %1378 = vmatpush1.bf16.msra.mxu0 %v1191
    %1379 = vmatprep.subr.bf16.mxu0 %v1190
    %1380 = vmatpush1.bf16.msra.mxu0 %v1189
    %1381 = vmatprep.subr.bf16.mxu0 %v1188
    %1382 = vmatpush1.bf16.msra.mxu0 %v1187
    %1383 = vmatprep.subr.bf16.mxu0 %v1186
    %1384 = vmatpush1.bf16.msra.mxu0 %v1185
    %1385 = vmatprep.subr.bf16.mxu0 %v1184
    %1386 = vmatpush1.bf16.msra.mxu0 %v1183
    %1387 = vmatprep.subr.bf16.mxu0 %v1182
    %1388 = vmatpush1.bf16.msra.mxu0 %v1181
    %1389 = vmatprep.subr.bf16.mxu0 %v1212
    %1390 = vmatpush2.bf16.msra.mxu0 %v1211
    %1391 = vmatprep.subr.bf16.mxu0 %v1210
    %1392 = vmatpush2.bf16.msra.mxu0 %v1209
    %1393 = vmatprep.subr.bf16.mxu0 %v1208
    %1394 = vmatpush2.bf16.msra.mxu0 %v1207
    %1395 = vmatprep.subr.bf16.mxu0 %v1206
    %1396 = vmatpush2.bf16.msra.mxu0 %v1205
    %1397 = vmatprep.subr.bf16.mxu0 %v1204
    %1398 = vmatpush2.bf16.msra.mxu0 %v1203
    %1399 = vmatprep.subr.bf16.mxu0 %v1202
    %1400 = vmatpush2.bf16.msra.mxu0 %v1201
    %1401 = vmatprep.subr.bf16.mxu0 %v1200
    %1402 = vmatpush2.bf16.msra.mxu0 %v1199
    %1403 = vmatprep.subr.bf16.mxu0 %v1198
    %1404 = vmatpush2.bf16.msra.mxu0 %v1197
    %1405 = vmatprep.mubr.bf16.mxu0 %v859
    %1406 = vmatmul.mubr.bf16.gmra.mxu0 %v858
    %v1407 = vpop.f32.mrf.mxu0
    %v1408 = vadd.f32 %v886, %v1407
    %v1409 = vpop.f32.mrf.mxu0
    %v1410 = vadd.f32 %v890, %v1409
    %v1411 = vpop.f32.mrf.mxu0
    %v1412 = vadd.f32 %v886, %v1411
    %v1413 = vpop.f32.mrf.mxu0
    %v1414 = vadd.f32 %v890, %v1413
    %1415 = vmatprep.mubr.bf16.mxu0 %v865
    %1416 = vmatmul.mubr.bf16.gmra.mxu0 %v864
    %v1417 = vpop.f32.mrf.mxu0
    %v1418 = vadd.f32 %v886, %v1417
    %v1419 = vpop.f32.mrf.mxu0
    %v1420 = vadd.f32 %v890, %v1419
    %v1421 = vpop.f32.mrf.mxu0
    %v1422 = vadd.f32 %v886, %v1421
    %v1423 = vpop.f32.mrf.mxu0
    %v1424 = vadd.f32 %v890, %v1423
    %1425 = vmatprep.mubr.bf16.mxu0 %v871
    %1426 = vmatmul.mubr.bf16.gmra.mxu0 %v870
    %v1427 = vpop.f32.mrf.mxu0
    %v1428 = vadd.f32 %v886, %v1427
    %v1429 = vpop.f32.mrf.mxu0
    %v1430 = vadd.f32 %v890, %v1429
    %v1431 = vpop.f32.mrf.mxu0
    %v1432 = vadd.f32 %v886, %v1431
    %v1433 = vpop.f32.mrf.mxu0
    %v1434 = vadd.f32 %v890, %v1433
    %1435 = vmatprep.mubr.bf16.mxu0 %v877
    %1436 = vmatmul.mubr.bf16.gmra.mxu0 %v876
    %v1437 = vpop.f32.mrf.mxu0
    %v1438 = vadd.f32 %v886, %v1437
    %v1439 = vpop.f32.mrf.mxu0
    %v1440 = vadd.f32 %v890, %v1439
    %v1441 = vpop.f32.mrf.mxu0
    %v1442 = vadd.f32 %v886, %v1441
    %v1443 = vpop.f32.mrf.mxu0
    %v1444 = vadd.f32 %v890, %v1443
    %1445 = vdwg.mxu0
    %1446 = vmatprep.subr.bf16.mxu0 %v1228
    %1447 = vmatpush1.bf16.msra.mxu0 %v1227
    %1448 = vmatprep.subr.bf16.mxu0 %v1226
    %1449 = vmatpush1.bf16.msra.mxu0 %v1225
    %1450 = vmatprep.subr.bf16.mxu0 %v1224
    %1451 = vmatpush1.bf16.msra.mxu0 %v1223
    %1452 = vmatprep.subr.bf16.mxu0 %v1222
    %1453 = vmatpush1.bf16.msra.mxu0 %v1221
    %1454 = vmatprep.subr.bf16.mxu0 %v1220
    %1455 = vmatpush1.bf16.msra.mxu0 %v1219
    %1456 = vmatprep.subr.bf16.mxu0 %v1218
    %1457 = vmatpush1.bf16.msra.mxu0 %v1217
    %1458 = vmatprep.subr.bf16.mxu0 %v1216
    %1459 = vmatpush1.bf16.msra.mxu0 %v1215
    %1460 = vmatprep.subr.bf16.mxu0 %v1214
    %1461 = vmatpush1.bf16.msra.mxu0 %v1213
    %1462 = vmatprep.subr.bf16.mxu0 %v1244
    %1463 = vmatpush2.bf16.msra.mxu0 %v1243
    %1464 = vmatprep.subr.bf16.mxu0 %v1242
    %1465 = vmatpush2.bf16.msra.mxu0 %v1241
    %1466 = vmatprep.subr.bf16.mxu0 %v1240
    %1467 = vmatpush2.bf16.msra.mxu0 %v1239
    %1468 = vmatprep.subr.bf16.mxu0 %v1238
    %1469 = vmatpush2.bf16.msra.mxu0 %v1237
    %1470 = vmatprep.subr.bf16.mxu0 %v1236
    %1471 = vmatpush2.bf16.msra.mxu0 %v1235
    %1472 = vmatprep.subr.bf16.mxu0 %v1234
    %1473 = vmatpush2.bf16.msra.mxu0 %v1233
    %1474 = vmatprep.subr.bf16.mxu0 %v1232
    %1475 = vmatpush2.bf16.msra.mxu0 %v1231
    %1476 = vmatprep.subr.bf16.mxu0 %v1230
    %1477 = vmatpush2.bf16.msra.mxu0 %v1229
    %1478 = vmatprep.mubr.bf16.mxu0 %v861
    %1479 = vmatmul.mubr.bf16.gmra.mxu0 %v860
    %v1480 = vpop.f32.mrf.mxu0
    %v1481 = vadd.f32 %v1408, %v1480
    %v1482 = vpop.f32.mrf.mxu0
    %v1483 = vadd.f32 %v1410, %v1482
    %v1484 = vpop.f32.mrf.mxu0
    %v1485 = vadd.f32 %v1412, %v1484
    %v1486 = vpop.f32.mrf.mxu0
    %v1487 = vadd.f32 %v1414, %v1486
    %1488 = vmatprep.mubr.bf16.mxu0 %v867
    %1489 = vmatmul.mubr.bf16.gmra.mxu0 %v866
    %v1490 = vpop.f32.mrf.mxu0
    %v1491 = vadd.f32 %v1418, %v1490
    %v1492 = vpop.f32.mrf.mxu0
    %v1493 = vadd.f32 %v1420, %v1492
    %v1494 = vpop.f32.mrf.mxu0
    %v1495 = vadd.f32 %v1422, %v1494
    %v1496 = vpop.f32.mrf.mxu0
    %v1497 = vadd.f32 %v1424, %v1496
    %1498 = vmatprep.mubr.bf16.mxu0 %v873
    %1499 = vmatmul.mubr.bf16.gmra.mxu0 %v872
    %v1500 = vpop.f32.mrf.mxu0
    %v1501 = vadd.f32 %v1428, %v1500
    %v1502 = vpop.f32.mrf.mxu0
    %v1503 = vadd.f32 %v1430, %v1502
    %v1504 = vpop.f32.mrf.mxu0
    %v1505 = vadd.f32 %v1432, %v1504
    %v1506 = vpop.f32.mrf.mxu0
    %v1507 = vadd.f32 %v1434, %v1506
    %1508 = vmatprep.mubr.bf16.mxu0 %v879
    %1509 = vmatmul.mubr.bf16.gmra.mxu0 %v878
    %v1510 = vpop.f32.mrf.mxu0
    %v1511 = vadd.f32 %v1438, %v1510
    %v1512 = vpop.f32.mrf.mxu0
    %v1513 = vadd.f32 %v1440, %v1512
    %v1514 = vpop.f32.mrf.mxu0
    %v1515 = vadd.f32 %v1442, %v1514
    %v1516 = vpop.f32.mrf.mxu0
    %v1517 = vadd.f32 %v1444, %v1516
    %1518 = vdwg.mxu0
    %1519 = vmatprep.subr.bf16.mxu0 %v1260
    %1520 = vmatpush1.bf16.msra.mxu0 %v1259
    %1521 = vmatprep.subr.bf16.mxu0 %v1258
    %1522 = vmatpush1.bf16.msra.mxu0 %v1257
    %1523 = vmatprep.subr.bf16.mxu0 %v1256
    %1524 = vmatpush1.bf16.msra.mxu0 %v1255
    %1525 = vmatprep.subr.bf16.mxu0 %v1254
    %1526 = vmatpush1.bf16.msra.mxu0 %v1253
    %1527 = vmatprep.subr.bf16.mxu0 %v1252
    %1528 = vmatpush1.bf16.msra.mxu0 %v1251
    %1529 = vmatprep.subr.bf16.mxu0 %v1250
    %1530 = vmatpush1.bf16.msra.mxu0 %v1249
    %1531 = vmatprep.subr.bf16.mxu0 %v1248
    %1532 = vmatpush1.bf16.msra.mxu0 %v1247
    %1533 = vmatprep.subr.bf16.mxu0 %v1246
    %1534 = vmatpush1.bf16.msra.mxu0 %v1245
    %1535 = vmatprep.subr.bf16.mxu0 %v1276
    %1536 = vmatpush2.bf16.msra.mxu0 %v1275
    %1537 = vmatprep.subr.bf16.mxu0 %v1274
    %1538 = vmatpush2.bf16.msra.mxu0 %v1273
    %1539 = vmatprep.subr.bf16.mxu0 %v1272
    %1540 = vmatpush2.bf16.msra.mxu0 %v1271
    %1541 = vmatprep.subr.bf16.mxu0 %v1270
    %1542 = vmatpush2.bf16.msra.mxu0 %v1269
    %1543 = vmatprep.subr.bf16.mxu0 %v1268
    %1544 = vmatpush2.bf16.msra.mxu0 %v1267
    %1545 = vmatprep.subr.bf16.mxu0 %v1266
    %1546 = vmatpush2.bf16.msra.mxu0 %v1265
    %1547 = vmatprep.subr.bf16.mxu0 %v1264
    %1548 = vmatpush2.bf16.msra.mxu0 %v1263
    %1549 = vmatprep.subr.bf16.mxu0 %v1262
    %1550 = vmatpush2.bf16.msra.mxu0 %v1261
    %1551 = vmatprep.mubr.bf16.mxu0 %v863
    %1552 = vmatmul.mubr.bf16.gmra.mxu0 %v862
    %v1553 = vpop.f32.mrf.mxu0
    %v1554 = vadd.f32 %v1481, %v1553
    %v1555 = vpop.f32.mrf.mxu0
    %v1556 = vadd.f32 %v1483, %v1555
    %v1557 = vpop.f32.mrf.mxu0
    %v1558 = vadd.f32 %v1485, %v1557
    %v1559 = vpop.f32.mrf.mxu0
    %v1560 = vadd.f32 %v1487, %v1559
    %1561 = vmatprep.mubr.bf16.mxu0 %v869
    %1562 = vmatmul.mubr.bf16.gmra.mxu0 %v868
    %v1563 = vpop.f32.mrf.mxu0
    %v1564 = vadd.f32 %v1491, %v1563
    %v1565 = vpop.f32.mrf.mxu0
    %v1566 = vadd.f32 %v1493, %v1565
    %v1567 = vpop.f32.mrf.mxu0
    %v1568 = vadd.f32 %v1495, %v1567
    %v1569 = vpop.f32.mrf.mxu0
    %v1570 = vadd.f32 %v1497, %v1569
    %1571 = vmatprep.mubr.bf16.mxu0 %v875
    %1572 = vmatmul.mubr.bf16.gmra.mxu0 %v874
    %v1573 = vpop.f32.mrf.mxu0
    %v1574 = vadd.f32 %v1501, %v1573
    %v1575 = vpop.f32.mrf.mxu0
    %v1576 = vadd.f32 %v1503, %v1575
    %v1577 = vpop.f32.mrf.mxu0
    %v1578 = vadd.f32 %v1505, %v1577
    %v1579 = vpop.f32.mrf.mxu0
    %v1580 = vadd.f32 %v1507, %v1579
    %1581 = vmatprep.mubr.bf16.mxu0 %v881
    %1582 = vmatmul.mubr.bf16.gmra.mxu0 %v880
    %v1583 = vpop.f32.mrf.mxu0
    %v1584 = vadd.f32 %v1511, %v1583
    %v1585 = vpop.f32.mrf.mxu0
    %v1586 = vadd.f32 %v1513, %v1585
    %v1587 = vpop.f32.mrf.mxu0
    %v1588 = vadd.f32 %v1515, %v1587
    %v1589 = vpop.f32.mrf.mxu0
    %v1590 = vadd.f32 %v1517, %v1589
    %1591 = vdwg.mxu0
    %v1592 = vmax.f32 %v1554, 0.0
    %v1593 = vmax.f32 %v1556, 0.0
    %v1594 = vmax.f32 %v1558, 0.0
    %v1595 = vmax.f32 %v1560, 0.0
    %v1596 = vmax.f32 %v1564, 0.0
    %v1597 = vmax.f32 %v1566, 0.0
    %v1598 = vmax.f32 %v1568, 0.0
    %v1599 = vmax.f32 %v1570, 0.0
    %v1600 = vmax.f32 %v1574, 0.0
    %v1601 = vmax.f32 %v1576, 0.0
    %v1602 = vmax.f32 %v1578, 0.0
    %v1603 = vmax.f32 %v1580, 0.0
    %v1604 = vmax.f32 %v1584, 0.0
    %v1605 = vmax.f32 %v1586, 0.0
    %v1606 = vmax.f32 %v1588, 0.0
    %v1607 = vmax.f32 %v1590, 0.0
    %v1620 = vrot.slane %v1592, 1
    %v1621 = vrot.slane %v1594, 1
    %v1622 = vsel %vm531, %v1620, %v1621
    %v1623 = vrot.slane %v1593, 1
    %v1624 = vrot.slane %v1595, 1
    %v1625 = vsel %vm531, %v1623, %v1624
    %v1626 = vrot.slane %v1596, 1
    %v1627 = vsel %vm531, %v1621, %v1626
    %v1628 = vrot.slane %v1597, 1
    %v1629 = vsel %vm531, %v1624, %v1628
    %v1630 = vrot.slane %v1598, 1
    %v1631 = vsel %vm531, %v1626, %v1630
    %v1632 = vrot.slane %v1599, 1
    %v1633 = vsel %vm531, %v1628, %v1632
    %v1634 = vrot.slane %v1600, 1
    %v1635 = vsel %vm531, %v1630, %v1634
    %v1636 = vrot.slane %v1601, 1
    %v1637 = vsel %vm531, %v1632, %v1636
    %v1638 = vrot.slane %v1602, 1
    %v1639 = vsel %vm531, %v1634, %v1638
    %v1640 = vrot.slane %v1603, 1
    %v1641 = vsel %vm531, %v1636, %v1640
    %v1654 = vrot.slane %v1592, 2
    %v1655 = vrot.slane %v1594, 2
    %v1656 = vsel %vm644, %v1654, %v1655
    %v1657 = vrot.slane %v1593, 2
    %v1658 = vrot.slane %v1595, 2
    %v1659 = vsel %vm644, %v1657, %v1658
    %v1660 = vrot.slane %v1596, 2
    %v1661 = vsel %vm644, %v1655, %v1660
    %v1662 = vrot.slane %v1597, 2
    %v1663 = vsel %vm644, %v1658, %v1662
    %v1664 = vrot.slane %v1598, 2
    %v1665 = vsel %vm644, %v1660, %v1664
    %v1666 = vrot.slane %v1599, 2
    %v1667 = vsel %vm644, %v1662, %v1666
    %v1668 = vrot.slane %v1600, 2
    %v1669 = vsel %vm644, %v1664, %v1668
    %v1670 = vrot.slane %v1601, 2
    %v1671 = vsel %vm644, %v1666, %v1670
    %v1672 = vrot.slane %v1602, 2
    %v1673 = vsel %vm644, %v1668, %v1672
    %v1674 = vrot.slane %v1603, 2
    %v1675 = vsel %vm644, %v1670, %v1674
    %v1692 = vrot.slane %v1604, 1
    %v1693 = vsel %vm531, %v1638, %v1692
    %v1694 = vrot.slane %v1605, 1
    %v1695 = vsel %vm531, %v1640, %v1694
    %v1696 = vrot.slane %v1606, 1
    %v1697 = vsel %vm531, %v1692, %v1696
    %v1698 = vrot.slane %v1607, 1
    %v1699 = vsel %vm531, %v1694, %v1698
    %v1706 = vrot.slane %v1604, 2
    %v1707 = vsel %vm644, %v1672, %v1706
    %v1708 = vrot.slane %v1605, 2
    %v1709 = vsel %vm644, %v1674, %v1708
    %v1710 = vrot.slane %v1606, 2
    %v1711 = vsel %vm644, %v1706, %v1710
    %v1712 = vrot.slane %v1607, 2
    %v1713 = vsel %vm644, %v1708, %v1712
    %v1720 = vpack.c.bf16 %v1594, %v1592
    %v1721 = vpack.c.bf16 %v1595, %v1593
    %v1722 = vpack.c.bf16 %v1627, %v1622
    %v1723 = vpack.c.bf16 %v1629, %v1625
    %v1724 = vpack.c.bf16 %v1661, %v1656
    %v1725 = vpack.c.bf16 %v1663, %v1659
    %v1726 = vpack.c.bf16 %v1598, %v1596
    %v1727 = vpack.c.bf16 %v1599, %v1597
    %v1728 = vpack.c.bf16 %v1635, %v1631
    %v1729 = vpack.c.bf16 %v1637, %v1633
    %v1730 = vpack.c.bf16 %v1669, %v1665
    %v1731 = vpack.c.bf16 %v1671, %v1667
    %v1732 = vpack.c.bf16 %v1602, %v1600
    %v1733 = vpack.c.bf16 %v1603, %v1601
    %v1734 = vpack.c.bf16 %v1693, %v1639
    %v1735 = vpack.c.bf16 %v1695, %v1641
    %v1736 = vpack.c.bf16 %v1707, %v1673
    %v1737 = vpack.c.bf16 %v1709, %v1675
    %v1738 = vpack.c.bf16 %v1638, %v1639
    %v1739 = vpack.c.bf16 %v1640, %v1641
    %v1740 = vpack.c.bf16 %v1672, %v1673
    %v1741 = vpack.c.bf16 %v1674, %v1675
    %v1742 = vpack.c.bf16 %v1606, %v1604
    %v1743 = vpack.c.bf16 %v1607, %v1605
    %v1744 = vpack.c.bf16 %v1696, %v1697
    %v1745 = vpack.c.bf16 %v1698, %v1699
    %v1746 = vpack.c.bf16 %v1710, %v1711
    %v1747 = vpack.c.bf16 %v1712, %v1713
    %v1749 = vlaneseq
    %v1750 = vshrl.u32 %v1749, 7
    %v1751 = vsub.s32 0, %v1750
    %v1752 = vrot.slane %v405, %v1751
    %v1946 = vunpack.c.l.b16 %v213
    %v1947 = vunpack.c.l.b16 %v214
    %v1948 = vunpack.c.l.b16 %v215
    %v1949 = vunpack.c.l.b16 %v216
    %v1950 = vunpack.c.l.b16 %v217
    %v1951 = vunpack.c.l.b16 %v218
    %v1952 = vunpack.c.l.b16 %v219
    %v1953 = vunpack.c.l.b16 %v220
    %v1954 = vunpack.c.l.b16 %v221
    %v1955 = vunpack.c.l.b16 %v222
    %v1956 = vunpack.c.l.b16 %v223
    %v1957 = vunpack.c.l.b16 %v224
    %v1958 = vunpack.c.l.b16 %v225
    %v1959 = vunpack.c.l.b16 %v226
    %v1960 = vunpack.c.l.b16 %v227
    %v1961 = vunpack.c.l.b16 %v228
    %v1962 = vunpack.c.l.b16 %v229
    %v1963 = vunpack.c.l.b16 %v230
    %v1964 = vunpack.c.l.b16 %v231
    %v1965 = vunpack.c.l.b16 %v232
    %v1966 = vunpack.c.l.b16 %v233
    %v1967 = vunpack.c.l.b16 %v234
    %v1968 = vunpack.c.l.b16 %v235
    %v1969 = vunpack.c.l.b16 %v236
    %v1970 = vunpack.c.l.b16 %v237
    %v1971 = vunpack.c.l.b16 %v238
    %v1972 = vunpack.c.l.b16 %v239
    %v1973 = vunpack.c.l.b16 %v240
    %v1974 = vunpack.c.l.b16 %v241
    %v1975 = vunpack.c.l.b16 %v242
    %v1976 = vunpack.c.l.b16 %v243
    %v1977 = vunpack.c.l.b16 %v244
    %v1978 = vunpack.c.l.b16 %v245
    %v1979 = vunpack.c.l.b16 %v246
    %v1980 = vunpack.c.l.b16 %v247
    %v1981 = vunpack.c.l.b16 %v248
    %v1982 = vunpack.c.l.b16 %v249
    %v1983 = vunpack.c.l.b16 %v250
    %v1984 = vunpack.c.l.b16 %v251
    %v1985 = vunpack.c.l.b16 %v252
    %v1986 = vunpack.c.l.b16 %v253
    %v1987 = vunpack.c.l.b16 %v254
    %v1988 = vunpack.c.l.b16 %v255
    %v1989 = vunpack.c.l.b16 %v256
    %v1990 = vunpack.c.l.b16 %v257
    %v1991 = vunpack.c.l.b16 %v258
    %v1992 = vunpack.c.l.b16 %v259
    %v1993 = vunpack.c.l.b16 %v260
    %v1994 = vunpack.c.l.b16 %v261
    %v1995 = vunpack.c.l.b16 %v262
    %v1996 = vunpack.c.l.b16 %v263
    %v1997 = vunpack.c.l.b16 %v264
    %v1998 = vunpack.c.l.b16 %v265
    %v1999 = vunpack.c.l.b16 %v266
    %v2000 = vunpack.c.l.b16 %v267
    %v2001 = vunpack.c.l.b16 %v268
    %v2002 = vunpack.c.l.b16 %v269
    %v2003 = vunpack.c.l.b16 %v270
    %v2004 = vunpack.c.l.b16 %v271
    %v2005 = vunpack.c.l.b16 %v272
    %v2006 = vunpack.c.l.b16 %v273
    %v2007 = vunpack.c.l.b16 %v274
    %v2008 = vunpack.c.l.b16 %v275
    %v2009 = vunpack.c.l.b16 %v276
    %v2010 = vunpack.c.l.b16 %v277
    %v2011 = vunpack.c.l.b16 %v278
    %v2012 = vunpack.c.l.b16 %v279
    %v2013 = vunpack.c.l.b16 %v280
    %v2014 = vunpack.c.l.b16 %v281
    %v2015 = vunpack.c.l.b16 %v282
    %v2016 = vunpack.c.l.b16 %v283
    %v2017 = vunpack.c.l.b16 %v284
    %v2018 = vunpack.c.l.b16 %v285
    %v2019 = vunpack.c.l.b16 %v286
    %v2020 = vunpack.c.l.b16 %v287
    %v2021 = vunpack.c.l.b16 %v288
    %v2022 = vunpack.c.l.b16 %v289
    %v2023 = vunpack.c.l.b16 %v290
    %v2024 = vunpack.c.l.b16 %v291
    %v2025 = vunpack.c.l.b16 %v292
    %v2026 = vunpack.c.l.b16 %v293
    %v2027 = vunpack.c.l.b16 %v294
    %v2028 = vunpack.c.l.b16 %v295
    %v2029 = vunpack.c.l.b16 %v296
    %v2030 = vunpack.c.l.b16 %v297
    %v2031 = vunpack.c.l.b16 %v298
    %v2032 = vunpack.c.l.b16 %v299
    %v2033 = vunpack.c.l.b16 %v300
    %v2034 = vunpack.c.l.b16 %v301
    %v2035 = vunpack.c.l.b16 %v302
    %v2036 = vunpack.c.l.b16 %v303
    %v2037 = vunpack.c.l.b16 %v304
    %v2038 = vunpack.c.l.b16 %v305
    %v2039 = vunpack.c.l.b16 %v306
    %v2040 = vunpack.c.l.b16 %v307
    %v2041 = vunpack.c.l.b16 %v308
    %v2042 = vunpack.c.l.b16 %v309
    %v2043 = vunpack.c.l.b16 %v310
    %v2044 = vunpack.c.l.b16 %v311
    %v2045 = vunpack.c.l.b16 %v312
    %v2046 = vunpack.c.l.b16 %v313
    %v2047 = vunpack.c.l.b16 %v314
    %v2048 = vunpack.c.l.b16 %v315
    %v2049 = vunpack.c.l.b16 %v316
    %v2050 = vunpack.c.l.b16 %v317
    %v2051 = vunpack.c.l.b16 %v318
    %v2052 = vunpack.c.l.b16 %v319
    %v2053 = vunpack.c.l.b16 %v320
    %v2054 = vunpack.c.l.b16 %v321
    %v2055 = vunpack.c.l.b16 %v322
    %v2056 = vunpack.c.l.b16 %v323
    %v2057 = vunpack.c.l.b16 %v324
    %v2058 = vunpack.c.l.b16 %v325
    %v2059 = vunpack.c.l.b16 %v326
    %v2060 = vunpack.c.l.b16 %v327
    %v2061 = vunpack.c.l.b16 %v328
    %v2062 = vunpack.c.l.b16 %v329
    %v2063 = vunpack.c.l.b16 %v330
    %v2064 = vunpack.c.l.b16 %v331
    %v2065 = vunpack.c.l.b16 %v332
    %v2066 = vunpack.c.l.b16 %v333
    %v2067 = vunpack.c.l.b16 %v334
    %v2068 = vunpack.c.l.b16 %v335
    %v2069 = vunpack.c.l.b16 %v336
    %v2070 = vunpack.c.l.b16 %v337
    %v2071 = vunpack.c.l.b16 %v338
    %v2072 = vunpack.c.l.b16 %v339
    %v2073 = vunpack.c.l.b16 %v340
    %v2074 = vunpack.c.l.b16 %v341
    %v2075 = vunpack.c.l.b16 %v342
    %v2076 = vunpack.c.l.b16 %v343
    %v2077 = vunpack.c.l.b16 %v344
    %v2078 = vunpack.c.l.b16 %v345
    %v2079 = vunpack.c.l.b16 %v346
    %v2080 = vunpack.c.l.b16 %v347
    %v2081 = vunpack.c.l.b16 %v348
    %v2082 = vunpack.c.l.b16 %v349
    %v2083 = vunpack.c.l.b16 %v350
    %v2084 = vunpack.c.l.b16 %v351
    %v2085 = vunpack.c.l.b16 %v352
    %v2086 = vunpack.c.l.b16 %v353
    %v2087 = vunpack.c.l.b16 %v354
    %v2088 = vunpack.c.l.b16 %v355
    %v2089 = vunpack.c.l.b16 %v356
    %v2090 = vunpack.c.l.b16 %v357
    %v2091 = vunpack.c.l.b16 %v358
    %v2092 = vunpack.c.l.b16 %v359
    %v2093 = vunpack.c.l.b16 %v360
    %v2094 = vunpack.c.l.b16 %v361
    %v2095 = vunpack.c.l.b16 %v362
    %v2096 = vunpack.c.l.b16 %v363
    %v2097 = vunpack.c.l.b16 %v364
    %v2098 = vunpack.c.l.b16 %v365
    %v2099 = vunpack.c.l.b16 %v366
    %v2100 = vunpack.c.l.b16 %v367
    %v2101 = vunpack.c.l.b16 %v368
    %v2102 = vunpack.c.l.b16 %v369
    %v2103 = vunpack.c.l.b16 %v370
    %v2104 = vunpack.c.l.b16 %v371
    %v2105 = vunpack.c.l.b16 %v372
    %v2106 = vunpack.c.l.b16 %v373
    %v2107 = vunpack.c.l.b16 %v374
    %v2108 = vunpack.c.l.b16 %v375
    %v2109 = vunpack.c.l.b16 %v376
    %v2110 = vunpack.c.l.b16 %v377
    %v2111 = vunpack.c.l.b16 %v378
    %v2112 = vunpack.c.l.b16 %v379
    %v2113 = vunpack.c.l.b16 %v380
    %v2114 = vunpack.c.l.b16 %v381
    %v2115 = vunpack.c.l.b16 %v382
    %v2116 = vunpack.c.l.b16 %v383
    %v2117 = vunpack.c.l.b16 %v384
    %v2118 = vunpack.c.l.b16 %v385
    %v2119 = vunpack.c.l.b16 %v386
    %v2120 = vunpack.c.l.b16 %v387
    %v2121 = vunpack.c.l.b16 %v388
    %v2122 = vunpack.c.l.b16 %v389
    %v2123 = vunpack.c.l.b16 %v390
    %v2124 = vunpack.c.l.b16 %v391
    %v2125 = vunpack.c.l.b16 %v392
    %v2126 = vunpack.c.l.b16 %v393
    %v2127 = vunpack.c.l.b16 %v394
    %v2128 = vunpack.c.l.b16 %v395
    %v2129 = vunpack.c.l.b16 %v396
    %v2130 = vunpack.c.l.b16 %v397
    %v2131 = vunpack.c.l.b16 %v398
    %v2132 = vunpack.c.l.b16 %v399
    %v2133 = vunpack.c.l.b16 %v400
    %v2134 = vunpack.c.l.b16 %v401
    %v2135 = vunpack.c.l.b16 %v402
    %v2136 = vunpack.c.l.b16 %v403
    %v2137 = vunpack.c.l.b16 %v404
    %v2138 = vpack.c.b16 %v1947, %v1946
    %v2139 = vpack.c.b16 %v1949, %v1948
    %v2140 = vpack.c.b16 %v1951, %v1950
    %v2141 = vpack.c.b16 %v1953, %v1952
    %v2142 = vpack.c.b16 %v1955, %v1954
    %v2143 = vpack.c.b16 %v1957, %v1956
    %v2144 = vpack.c.b16 %v1959, %v1958
    %v2145 = vpack.c.b16 %v1961, %v1960
    %v2146 = vpack.c.b16 %v1963, %v1962
    %v2147 = vpack.c.b16 %v1965, %v1964
    %v2148 = vpack.c.b16 %v1967, %v1966
    %v2149 = vpack.c.b16 %v1969, %v1968
    %v2150 = vpack.c.b16 %v1971, %v1970
    %v2151 = vpack.c.b16 %v1973, %v1972
    %v2152 = vpack.c.b16 %v1975, %v1974
    %v2153 = vpack.c.b16 %v1977, %v1976
    %v2154 = vpack.c.b16 %v1979, %v1978
    %v2155 = vpack.c.b16 %v1981, %v1980
    %v2156 = vpack.c.b16 %v1983, %v1982
    %v2157 = vpack.c.b16 %v1985, %v1984
    %v2158 = vpack.c.b16 %v1987, %v1986
    %v2159 = vpack.c.b16 %v1989, %v1988
    %v2160 = vpack.c.b16 %v1991, %v1990
    %v2161 = vpack.c.b16 %v1993, %v1992
    %v2162 = vpack.c.b16 %v1995, %v1994
    %v2163 = vpack.c.b16 %v1997, %v1996
    %v2164 = vpack.c.b16 %v1999, %v1998
    %v2165 = vpack.c.b16 %v2001, %v2000
    %v2166 = vpack.c.b16 %v2003, %v2002
    %v2167 = vpack.c.b16 %v2005, %v2004
    %v2168 = vpack.c.b16 %v2007, %v2006
    %v2169 = vpack.c.b16 %v2009, %v2008
    %v2170 = vpack.c.b16 %v2011, %v2010
    %v2171 = vpack.c.b16 %v2013, %v2012
    %v2172 = vpack.c.b16 %v2015, %v2014
    %v2173 = vpack.c.b16 %v2017, %v2016
    %v2174 = vpack.c.b16 %v2019, %v2018
    %v2175 = vpack.c.b16 %v2021, %v2020
    %v2176 = vpack.c.b16 %v2023, %v2022
    %v2177 = vpack.c.b16 %v2025, %v2024
    %v2178 = vpack.c.b16 %v2027, %v2026
    %v2179 = vpack.c.b16 %v2029, %v2028
    %v2180 = vpack.c.b16 %v2031, %v2030
    %v2181 = vpack.c.b16 %v2033, %v2032
    %v2182 = vpack.c.b16 %v2035, %v2034
    %v2183 = vpack.c.b16 %v2037, %v2036
    %v2184 = vpack.c.b16 %v2039, %v2038
    %v2185 = vpack.c.b16 %v2041, %v2040
    %v2186 = vpack.c.b16 %v2043, %v2042
    %v2187 = vpack.c.b16 %v2045, %v2044
    %v2188 = vpack.c.b16 %v2047, %v2046
    %v2189 = vpack.c.b16 %v2049, %v2048
    %v2190 = vpack.c.b16 %v2051, %v2050
    %v2191 = vpack.c.b16 %v2053, %v2052
    %v2192 = vpack.c.b16 %v2055, %v2054
    %v2193 = vpack.c.b16 %v2057, %v2056
    %v2194 = vpack.c.b16 %v2059, %v2058
    %v2195 = vpack.c.b16 %v2061, %v2060
    %v2196 = vpack.c.b16 %v2063, %v2062
    %v2197 = vpack.c.b16 %v2065, %v2064
    %v2198 = vpack.c.b16 %v2067, %v2066
    %v2199 = vpack.c.b16 %v2069, %v2068
    %v2200 = vpack.c.b16 %v2071, %v2070
    %v2201 = vpack.c.b16 %v2073, %v2072
    %v2202 = vpack.c.b16 %v2075, %v2074
    %v2203 = vpack.c.b16 %v2077, %v2076
    %v2204 = vpack.c.b16 %v2079, %v2078
    %v2205 = vpack.c.b16 %v2081, %v2080
    %v2206 = vpack.c.b16 %v2083, %v2082
    %v2207 = vpack.c.b16 %v2085, %v2084
    %v2208 = vpack.c.b16 %v2087, %v2086
    %v2209 = vpack.c.b16 %v2089, %v2088
    %v2210 = vpack.c.b16 %v2091, %v2090
    %v2211 = vpack.c.b16 %v2093, %v2092
    %v2212 = vpack.c.b16 %v2095, %v2094
    %v2213 = vpack.c.b16 %v2097, %v2096
    %v2214 = vpack.c.b16 %v2099, %v2098
    %v2215 = vpack.c.b16 %v2101, %v2100
    %v2216 = vpack.c.b16 %v2103, %v2102
    %v2217 = vpack.c.b16 %v2105, %v2104
    %v2218 = vpack.c.b16 %v2107, %v2106
    %v2219 = vpack.c.b16 %v2109, %v2108
    %v2220 = vpack.c.b16 %v2111, %v2110
    %v2221 = vpack.c.b16 %v2113, %v2112
    %v2222 = vpack.c.b16 %v2115, %v2114
    %v2223 = vpack.c.b16 %v2117, %v2116
    %v2224 = vpack.c.b16 %v2119, %v2118
    %v2225 = vpack.c.b16 %v2121, %v2120
    %v2226 = vpack.c.b16 %v2123, %v2122
    %v2227 = vpack.c.b16 %v2125, %v2124
    %v2228 = vpack.c.b16 %v2127, %v2126
    %v2229 = vpack.c.b16 %v2129, %v2128
    %v2230 = vpack.c.b16 %v2131, %v2130
    %v2231 = vpack.c.b16 %v2133, %v2132
    %v2232 = vpack.c.b16 %v2135, %v2134
    %v2233 = vpack.c.b16 %v2137, %v2136
    %2330 = vmatprep.subr.bf16.mxu0 0
    %2331 = vmatpush1.bf16.msra.mxu0 %v2145
    %2332 = vmatprep.subr.bf16.mxu0 0
    %2333 = vmatpush1.bf16.msra.mxu0 %v2144
    %2334 = vmatprep.subr.bf16.mxu0 0
    %2335 = vmatpush1.bf16.msra.mxu0 %v2143
    %2336 = vmatprep.subr.bf16.mxu0 0
    %2337 = vmatpush1.bf16.msra.mxu0 %v2142
    %2338 = vmatprep.subr.bf16.mxu0 0
    %2339 = vmatpush1.bf16.msra.mxu0 %v2141
    %2340 = vmatprep.subr.bf16.mxu0 0
    %2341 = vmatpush1.bf16.msra.mxu0 %v2140
    %2342 = vmatprep.subr.bf16.mxu0 0
    %2343 = vmatpush1.bf16.msra.mxu0 %v2139
    %2344 = vmatprep.subr.bf16.mxu0 0
    %2345 = vmatpush1.bf16.msra.mxu0 %v2138
    %2346 = vmatprep.subr.bf16.mxu0 0
    %2347 = vmatpush2.bf16.msra.mxu0 %v2153
    %2348 = vmatprep.subr.bf16.mxu0 0
    %2349 = vmatpush2.bf16.msra.mxu0 %v2152
    %2350 = vmatprep.subr.bf16.mxu0 0
    %2351 = vmatpush2.bf16.msra.mxu0 %v2151
    %2352 = vmatprep.subr.bf16.mxu0 0
    %2353 = vmatpush2.bf16.msra.mxu0 %v2150
    %2354 = vmatprep.subr.bf16.mxu0 0
    %2355 = vmatpush2.bf16.msra.mxu0 %v2149
    %2356 = vmatprep.subr.bf16.mxu0 0
    %2357 = vmatpush2.bf16.msra.mxu0 %v2148
    %2358 = vmatprep.subr.bf16.mxu0 0
    %2359 = vmatpush2.bf16.msra.mxu0 %v2147
    %2360 = vmatprep.subr.bf16.mxu0 0
    %2361 = vmatpush2.bf16.msra.mxu0 %v2146
    %2362 = vmatprep.mubr.bf16.mxu0 %v1721
    %2363 = vmatmul.mubr.bf16.gmra.mxu0 %v1720
    %v2364 = vpop.f32.mrf.mxu0
    %v2365 = vadd.f32 %v1752, %v2364
    %v2366 = vpop.f32.mrf.mxu0
    %v2367 = vpop.f32.mrf.mxu0
    %v2368 = vadd.f32 %v1752, %v2367
    %v2369 = vpop.f32.mrf.mxu0
    %2370 = vmatprep.mubr.bf16.mxu0 %v1727
    %2371 = vmatmul.mubr.bf16.gmra.mxu0 %v1726
    %v2372 = vpop.f32.mrf.mxu0
    %v2373 = vpop.f32.mrf.mxu0
    %v2374 = vpop.f32.mrf.mxu0
    %v2375 = vpop.f32.mrf.mxu0
    %2376 = vmatprep.mubr.bf16.mxu0 %v1733
    %2377 = vmatmul.mubr.bf16.gmra.mxu0 %v1732
    %v2378 = vpop.f32.mrf.mxu0
    %v2379 = vadd.f32 %v1752, %v2378
    %v2380 = vpop.f32.mrf.mxu0
    %v2381 = vpop.f32.mrf.mxu0
    %v2382 = vadd.f32 %v1752, %v2381
    %v2383 = vpop.f32.mrf.mxu0
    %2384 = vdwg.mxu0
    %2385 = vmatprep.subr.bf16.mxu0 0
    %2386 = vmatpush1.bf16.msra.mxu0 %v2161
    %2387 = vmatprep.subr.bf16.mxu0 0
    %2388 = vmatpush1.bf16.msra.mxu0 %v2160
    %2389 = vmatprep.subr.bf16.mxu0 0
    %2390 = vmatpush1.bf16.msra.mxu0 %v2159
    %2391 = vmatprep.subr.bf16.mxu0 0
    %2392 = vmatpush1.bf16.msra.mxu0 %v2158
    %2393 = vmatprep.subr.bf16.mxu0 0
    %2394 = vmatpush1.bf16.msra.mxu0 %v2157
    %2395 = vmatprep.subr.bf16.mxu0 0
    %2396 = vmatpush1.bf16.msra.mxu0 %v2156
    %2397 = vmatprep.subr.bf16.mxu0 0
    %2398 = vmatpush1.bf16.msra.mxu0 %v2155
    %2399 = vmatprep.subr.bf16.mxu0 0
    %2400 = vmatpush1.bf16.msra.mxu0 %v2154
    %2401 = vmatprep.subr.bf16.mxu0 0
    %2402 = vmatpush2.bf16.msra.mxu0 %v2169
    %2403 = vmatprep.subr.bf16.mxu0 0
    %2404 = vmatpush2.bf16.msra.mxu0 %v2168
    %2405 = vmatprep.subr.bf16.mxu0 0
    %2406 = vmatpush2.bf16.msra.mxu0 %v2167
    %2407 = vmatprep.subr.bf16.mxu0 0
    %2408 = vmatpush2.bf16.msra.mxu0 %v2166
    %2409 = vmatprep.subr.bf16.mxu0 0
    %2410 = vmatpush2.bf16.msra.mxu0 %v2165
    %2411 = vmatprep.subr.bf16.mxu0 0
    %2412 = vmatpush2.bf16.msra.mxu0 %v2164
    %2413 = vmatprep.subr.bf16.mxu0 0
    %2414 = vmatpush2.bf16.msra.mxu0 %v2163
    %2415 = vmatprep.subr.bf16.mxu0 0
    %2416 = vmatpush2.bf16.msra.mxu0 %v2162
    %2417 = vmatprep.mubr.bf16.mxu0 %v1723
    %2418 = vmatmul.mubr.bf16.gmra.mxu0 %v1722
    %v2419 = vpop.f32.mrf.mxu0
    %v2420 = vadd.f32 %v2365, %v2419
    %v2421 = vpop.f32.mrf.mxu0
    %v2422 = vpop.f32.mrf.mxu0
    %v2423 = vadd.f32 %v2368, %v2422
    %v2424 = vpop.f32.mrf.mxu0
    %2425 = vmatprep.mubr.bf16.mxu0 %v1729
    %2426 = vmatmul.mubr.bf16.gmra.mxu0 %v1728
    %v2427 = vpop.f32.mrf.mxu0
    %v2428 = vpop.f32.mrf.mxu0
    %v2429 = vpop.f32.mrf.mxu0
    %v2430 = vpop.f32.mrf.mxu0
    %2431 = vmatprep.mubr.bf16.mxu0 %v1739
    %2432 = vmatmul.mubr.bf16.gmra.mxu0 %v1738
    %v2433 = vpop.f32.mrf.mxu0
    %v2434 = vadd.f32 %v2379, %v2433
    %v2435 = vpop.f32.mrf.mxu0
    %v2436 = vpop.f32.mrf.mxu0
    %v2437 = vadd.f32 %v2382, %v2436
    %v2438 = vpop.f32.mrf.mxu0
    %2439 = vdwg.mxu0
    %2440 = vmatprep.subr.bf16.mxu0 0
    %2441 = vmatpush1.bf16.msra.mxu0 %v2177
    %2442 = vmatprep.subr.bf16.mxu0 0
    %2443 = vmatpush1.bf16.msra.mxu0 %v2176
    %2444 = vmatprep.subr.bf16.mxu0 0
    %2445 = vmatpush1.bf16.msra.mxu0 %v2175
    %2446 = vmatprep.subr.bf16.mxu0 0
    %2447 = vmatpush1.bf16.msra.mxu0 %v2174
    %2448 = vmatprep.subr.bf16.mxu0 0
    %2449 = vmatpush1.bf16.msra.mxu0 %v2173
    %2450 = vmatprep.subr.bf16.mxu0 0
    %2451 = vmatpush1.bf16.msra.mxu0 %v2172
    %2452 = vmatprep.subr.bf16.mxu0 0
    %2453 = vmatpush1.bf16.msra.mxu0 %v2171
    %2454 = vmatprep.subr.bf16.mxu0 0
    %2455 = vmatpush1.bf16.msra.mxu0 %v2170
    %2456 = vmatprep.subr.bf16.mxu0 0
    %2457 = vmatpush2.bf16.msra.mxu0 %v2185
    %2458 = vmatprep.subr.bf16.mxu0 0
    %2459 = vmatpush2.bf16.msra.mxu0 %v2184
    %2460 = vmatprep.subr.bf16.mxu0 0
    %2461 = vmatpush2.bf16.msra.mxu0 %v2183
    %2462 = vmatprep.subr.bf16.mxu0 0
    %2463 = vmatpush2.bf16.msra.mxu0 %v2182
    %2464 = vmatprep.subr.bf16.mxu0 0
    %2465 = vmatpush2.bf16.msra.mxu0 %v2181
    %2466 = vmatprep.subr.bf16.mxu0 0
    %2467 = vmatpush2.bf16.msra.mxu0 %v2180
    %2468 = vmatprep.subr.bf16.mxu0 0
    %2469 = vmatpush2.bf16.msra.mxu0 %v2179
    %2470 = vmatprep.subr.bf16.mxu0 0
    %2471 = vmatpush2.bf16.msra.mxu0 %v2178
    %2472 = vmatprep.mubr.bf16.mxu0 %v1725
    %2473 = vmatmul.mubr.bf16.gmra.mxu0 %v1724
    %v2474 = vpop.f32.mrf.mxu0
    %v2475 = vadd.f32 %v2420, %v2474
    %v2476 = vpop.f32.mrf.mxu0
    %v2477 = vpop.f32.mrf.mxu0
    %v2478 = vadd.f32 %v2423, %v2477
    %v2479 = vpop.f32.mrf.mxu0
    %2480 = vmatprep.mubr.bf16.mxu0 %v1731
    %2481 = vmatmul.mubr.bf16.gmra.mxu0 %v1730
    %v2482 = vpop.f32.mrf.mxu0
    %v2483 = vpop.f32.mrf.mxu0
    %v2484 = vpop.f32.mrf.mxu0
    %v2485 = vpop.f32.mrf.mxu0
    %2486 = vmatprep.mubr.bf16.mxu0 %v1741
    %2487 = vmatmul.mubr.bf16.gmra.mxu0 %v1740
    %v2488 = vpop.f32.mrf.mxu0
    %v2489 = vadd.f32 %v2434, %v2488
    %v2490 = vpop.f32.mrf.mxu0
    %v2491 = vpop.f32.mrf.mxu0
    %v2492 = vadd.f32 %v2437, %v2491
    %v2493 = vpop.f32.mrf.mxu0
    %2494 = vdwg.mxu0
    %2495 = vmatprep.subr.bf16.mxu0 0
    %2496 = vmatpush1.bf16.msra.mxu0 %v2193
    %2497 = vmatprep.subr.bf16.mxu0 0
    %2498 = vmatpush1.bf16.msra.mxu0 %v2192
    %2499 = vmatprep.subr.bf16.mxu0 0
    %2500 = vmatpush1.bf16.msra.mxu0 %v2191
    %2501 = vmatprep.subr.bf16.mxu0 0
    %2502 = vmatpush1.bf16.msra.mxu0 %v2190
    %2503 = vmatprep.subr.bf16.mxu0 0
    %2504 = vmatpush1.bf16.msra.mxu0 %v2189
    %2505 = vmatprep.subr.bf16.mxu0 0
    %2506 = vmatpush1.bf16.msra.mxu0 %v2188
    %2507 = vmatprep.subr.bf16.mxu0 0
    %2508 = vmatpush1.bf16.msra.mxu0 %v2187
    %2509 = vmatprep.subr.bf16.mxu0 0
    %2510 = vmatpush1.bf16.msra.mxu0 %v2186
    %2511 = vmatprep.subr.bf16.mxu0 0
    %2512 = vmatpush2.bf16.msra.mxu0 %v2201
    %2513 = vmatprep.subr.bf16.mxu0 0
    %2514 = vmatpush2.bf16.msra.mxu0 %v2200
    %2515 = vmatprep.subr.bf16.mxu0 0
    %2516 = vmatpush2.bf16.msra.mxu0 %v2199
    %2517 = vmatprep.subr.bf16.mxu0 0
    %2518 = vmatpush2.bf16.msra.mxu0 %v2198
    %2519 = vmatprep.subr.bf16.mxu0 0
    %2520 = vmatpush2.bf16.msra.mxu0 %v2197
    %2521 = vmatprep.subr.bf16.mxu0 0
    %2522 = vmatpush2.bf16.msra.mxu0 %v2196
    %2523 = vmatprep.subr.bf16.mxu0 0
    %2524 = vmatpush2.bf16.msra.mxu0 %v2195
    %2525 = vmatprep.subr.bf16.mxu0 0
    %2526 = vmatpush2.bf16.msra.mxu0 %v2194
    %2527 = vmatprep.mubr.bf16.mxu0 %v1727
    %2528 = vmatmul.mubr.bf16.gmra.mxu0 %v1726
    %v2529 = vpop.f32.mrf.mxu0
    %v2530 = vadd.f32 %v2475, %v2529
    %v2531 = vpop.f32.mrf.mxu0
    %v2532 = vpop.f32.mrf.mxu0
    %v2533 = vadd.f32 %v2478, %v2532
    %v2534 = vpop.f32.mrf.mxu0
    %2535 = vmatprep.mubr.bf16.mxu0 %v1733
    %2536 = vmatmul.mubr.bf16.gmra.mxu0 %v1732
    %v2537 = vpop.f32.mrf.mxu0
    %v2538 = vpop.f32.mrf.mxu0
    %v2539 = vpop.f32.mrf.mxu0
    %v2540 = vpop.f32.mrf.mxu0
    %2541 = vmatprep.mubr.bf16.mxu0 %v1743
    %2542 = vmatmul.mubr.bf16.gmra.mxu0 %v1742
    %v2543 = vpop.f32.mrf.mxu0
    %v2544 = vadd.f32 %v2489, %v2543
    %v2545 = vpop.f32.mrf.mxu0
    %v2546 = vpop.f32.mrf.mxu0
    %v2547 = vadd.f32 %v2492, %v2546
    %v2548 = vpop.f32.mrf.mxu0
    %2549 = vdwg.mxu0
    %2550 = vmatprep.subr.bf16.mxu0 0
    %2551 = vmatpush1.bf16.msra.mxu0 %v2209
    %2552 = vmatprep.subr.bf16.mxu0 0
    %2553 = vmatpush1.bf16.msra.mxu0 %v2208
    %2554 = vmatprep.subr.bf16.mxu0 0
    %2555 = vmatpush1.bf16.msra.mxu0 %v2207
    %2556 = vmatprep.subr.bf16.mxu0 0
    %2557 = vmatpush1.bf16.msra.mxu0 %v2206
    %2558 = vmatprep.subr.bf16.mxu0 0
    %2559 = vmatpush1.bf16.msra.mxu0 %v2205
    %2560 = vmatprep.subr.bf16.mxu0 0
    %2561 = vmatpush1.bf16.msra.mxu0 %v2204
    %2562 = vmatprep.subr.bf16.mxu0 0
    %2563 = vmatpush1.bf16.msra.mxu0 %v2203
    %2564 = vmatprep.subr.bf16.mxu0 0
    %2565 = vmatpush1.bf16.msra.mxu0 %v2202
    %2566 = vmatprep.subr.bf16.mxu0 0
    %2567 = vmatpush2.bf16.msra.mxu0 %v2217
    %2568 = vmatprep.subr.bf16.mxu0 0
    %2569 = vmatpush2.bf16.msra.mxu0 %v2216
    %2570 = vmatprep.subr.bf16.mxu0 0
    %2571 = vmatpush2.bf16.msra.mxu0 %v2215
    %2572 = vmatprep.subr.bf16.mxu0 0
    %2573 = vmatpush2.bf16.msra.mxu0 %v2214
    %2574 = vmatprep.subr.bf16.mxu0 0
    %2575 = vmatpush2.bf16.msra.mxu0 %v2213
    %2576 = vmatprep.subr.bf16.mxu0 0
    %2577 = vmatpush2.bf16.msra.mxu0 %v2212
    %2578 = vmatprep.subr.bf16.mxu0 0
    %2579 = vmatpush2.bf16.msra.mxu0 %v2211
    %2580 = vmatprep.subr.bf16.mxu0 0
    %2581 = vmatpush2.bf16.msra.mxu0 %v2210
    %2582 = vmatprep.mubr.bf16.mxu0 %v1729
    %2583 = vmatmul.mubr.bf16.gmra.mxu0 %v1728
    %v2584 = vpop.f32.mrf.mxu0
    %v2585 = vadd.f32 %v2530, %v2584
    %v2586 = vpop.f32.mrf.mxu0
    %v2587 = vpop.f32.mrf.mxu0
    %v2588 = vadd.f32 %v2533, %v2587
    %v2589 = vpop.f32.mrf.mxu0
    %2590 = vmatprep.mubr.bf16.mxu0 %v1735
    %2591 = vmatmul.mubr.bf16.gmra.mxu0 %v1734
    %v2592 = vpop.f32.mrf.mxu0
    %v2593 = vpop.f32.mrf.mxu0
    %v2594 = vpop.f32.mrf.mxu0
    %v2595 = vpop.f32.mrf.mxu0
    %2596 = vmatprep.mubr.bf16.mxu0 %v1745
    %2597 = vmatmul.mubr.bf16.gmra.mxu0 %v1744
    %v2598 = vpop.f32.mrf.mxu0
    %v2599 = vadd.f32 %v2544, %v2598
    %v2600 = vpop.f32.mrf.mxu0
    %v2601 = vpop.f32.mrf.mxu0
    %v2602 = vadd.f32 %v2547, %v2601
    %v2603 = vpop.f32.mrf.mxu0
    %2604 = vdwg.mxu0
    %2605 = vmatprep.subr.bf16.mxu0 0
    %2606 = vmatpush1.bf16.msra.mxu0 %v2225
    %2607 = vmatprep.subr.bf16.mxu0 0
    %2608 = vmatpush1.bf16.msra.mxu0 %v2224
    %2609 = vmatprep.subr.bf16.mxu0 0
    %2610 = vmatpush1.bf16.msra.mxu0 %v2223
    %2611 = vmatprep.subr.bf16.mxu0 0
    %2612 = vmatpush1.bf16.msra.mxu0 %v2222
    %2613 = vmatprep.subr.bf16.mxu0 0
    %2614 = vmatpush1.bf16.msra.mxu0 %v2221
    %2615 = vmatprep.subr.bf16.mxu0 0
    %2616 = vmatpush1.bf16.msra.mxu0 %v2220
    %2617 = vmatprep.subr.bf16.mxu0 0
    %2618 = vmatpush1.bf16.msra.mxu0 %v2219
    %2619 = vmatprep.subr.bf16.mxu0 0
    %2620 = vmatpush1.bf16.msra.mxu0 %v2218
    %2621 = vmatprep.subr.bf16.mxu0 0
    %2622 = vmatpush2.bf16.msra.mxu0 %v2233
    %2623 = vmatprep.subr.bf16.mxu0 0
    %2624 = vmatpush2.bf16.msra.mxu0 %v2232
    %2625 = vmatprep.subr.bf16.mxu0 0
    %2626 = vmatpush2.bf16.msra.mxu0 %v2231
    %2627 = vmatprep.subr.bf16.mxu0 0
    %2628 = vmatpush2.bf16.msra.mxu0 %v2230
    %2629 = vmatprep.subr.bf16.mxu0 0
    %2630 = vmatpush2.bf16.msra.mxu0 %v2229
    %2631 = vmatprep.subr.bf16.mxu0 0
    %2632 = vmatpush2.bf16.msra.mxu0 %v2228
    %2633 = vmatprep.subr.bf16.mxu0 0
    %2634 = vmatpush2.bf16.msra.mxu0 %v2227
    %2635 = vmatprep.subr.bf16.mxu0 0
    %2636 = vmatpush2.bf16.msra.mxu0 %v2226
    %2637 = vmatprep.mubr.bf16.mxu0 %v1731
    %2638 = vmatmul.mubr.bf16.gmra.mxu0 %v1730
    %v2639 = vpop.f32.mrf.mxu0
    %v2640 = vadd.f32 %v2585, %v2639
    %v2641 = vpop.f32.mrf.mxu0
    %v2642 = vpop.f32.mrf.mxu0
    %v2643 = vadd.f32 %v2588, %v2642
    %v2644 = vpop.f32.mrf.mxu0
    %2645 = vmatprep.mubr.bf16.mxu0 %v1737
    %2646 = vmatmul.mubr.bf16.gmra.mxu0 %v1736
    %v2647 = vpop.f32.mrf.mxu0
    %v2648 = vpop.f32.mrf.mxu0
    %v2649 = vpop.f32.mrf.mxu0
    %v2650 = vpop.f32.mrf.mxu0
    %2651 = vmatprep.mubr.bf16.mxu0 %v1747
    %2652 = vmatmul.mubr.bf16.gmra.mxu0 %v1746
    %v2653 = vpop.f32.mrf.mxu0
    %v2654 = vadd.f32 %v2599, %v2653
    %v2655 = vpop.f32.mrf.mxu0
    %v2656 = vpop.f32.mrf.mxu0
    %v2657 = vadd.f32 %v2602, %v2656
    %v2658 = vpop.f32.mrf.mxu0
    %2659 = vdwg.mxu0
    %v2660 = vmax.f32 %v2640, 0.0
    %v2661 = vmax.f32 %v2643, 0.0
    %v2662 = vmax.f32 %v2654, 0.0
    %v2663 = vmax.f32 %v2657, 0.0
    %v2664 = vld [vmem:[%s1] sm:$0xff]
    %v2665 = vld [vmem:[%s1 + $0x8] sm:$0xff]
    %v2666 = vld [vmem:[%s1 + $0x10] sm:$0xff]
    %v2667 = vld [vmem:[%s1 + $0x18] sm:$0xff]
    %v2668 = vld [vmem:[%s1 + $0x20] sm:$0xff]
    %v2669 = vld [vmem:[%s1 + $0x28] sm:$0xff]
    %v2670 = vld [vmem:[%s1 + $0x30] sm:$0xff]
    %v2671 = vld [vmem:[%s1 + $0x38] sm:$0xff]
    %v2672 = vld [vmem:[%s8] sm:$0x77]
    %v2673 = vld [vmem:[%s9] sm:$0x3]
    %v2674 = vld [vmem:[#allocation6] sm:$0xff]
    %v2675 = vld [vmem:[#allocation6 + $0x8] sm:$0xff]
    %v2676 = vld [vmem:[#allocation6 + $0x10] sm:$0xff]
    %v2677 = vld [vmem:[#allocation6 + $0x18] sm:$0xff]
    %v2678 = vld [vmem:[#allocation6 + $0x20] sm:$0xff]
    %v2679 = vld [vmem:[#allocation6 + $0x28] sm:$0xff]
    %v2680 = vld [vmem:[#allocation6 + $0x30] sm:$0xff]
    %v2681 = vld [vmem:[#allocation6 + $0x38] sm:$0xff]
    %v2682 = vld [vmem:[#allocation6 + $0x40] sm:$0xff]
    %v2683 = vld [vmem:[#allocation6 + $0x48] sm:$0xff]
    %v2684 = vld [vmem:[#allocation6 + $0x50] sm:$0xff]
    %v2685 = vld [vmem:[#allocation6 + $0x58] sm:$0xff]
    %v2686 = vld [vmem:[#allocation6 + $0x60] sm:$0xff]
    %v2687 = vld [vmem:[#allocation6 + $0x68] sm:$0xff]
    %v2688 = vld [vmem:[#allocation6 + $0x70] sm:$0xff]
    %v2689 = vld [vmem:[#allocation6 + $0x78] sm:$0xff]
    %v2690 = vld [vmem:[#allocation6 + $0x80] sm:$0xff]
    %v2691 = vld [vmem:[#allocation6 + $0x88] sm:$0xff]
    %v2692 = vld [vmem:[#allocation6 + $0x90] sm:$0xff]
    %v2693 = vld [vmem:[#allocation6 + $0x98] sm:$0xff]
    %v2694 = vld [vmem:[#allocation6 + $0xa0] sm:$0xff]
    %v2695 = vld [vmem:[#allocation6 + $0xa8] sm:$0xff]
    %v2696 = vld [vmem:[#allocation6 + $0xb0] sm:$0xff]
    %v2697 = vld [vmem:[#allocation6 + $0xb8] sm:$0xff]
    %v2698 = vld [vmem:[#allocation6 + $0xc0] sm:$0xff]
    %v2699 = vld [vmem:[#allocation6 + $0xc8] sm:$0xff]
    %v2700 = vld [vmem:[#allocation6 + $0xd0] sm:$0xff]
    %v2701 = vld [vmem:[#allocation6 + $0xd8] sm:$0xff]
    %v2702 = vld [vmem:[#allocation6 + $0xe0] sm:$0xff]
    %v2703 = vld [vmem:[#allocation6 + $0xe8] sm:$0xff]
    %v2704 = vld [vmem:[#allocation6 + $0xf0] sm:$0xff]
    %v2705 = vld [vmem:[#allocation6 + $0xf8] sm:$0xff]
    %v2706 = vld [vmem:[#allocation6 + $0x100] sm:$0xff]
    %v2707 = vld [vmem:[#allocation6 + $0x108] sm:$0xff]
    %v2708 = vld [vmem:[#allocation6 + $0x110] sm:$0xff]
    %v2709 = vld [vmem:[#allocation6 + $0x118] sm:$0xff]
    %v2710 = vld [vmem:[#allocation6 + $0x120] sm:$0xff]
    %v2711 = vld [vmem:[#allocation6 + $0x128] sm:$0xff]
    %v2712 = vld [vmem:[#allocation6 + $0x130] sm:$0xff]
    %v2713 = vld [vmem:[#allocation6 + $0x138] sm:$0xff]
    %v2714 = vld [vmem:[#allocation6 + $0x140] sm:$0xff]
    %v2715 = vld [vmem:[#allocation6 + $0x148] sm:$0xff]
    %v2716 = vld [vmem:[#allocation6 + $0x150] sm:$0xff]
    %v2717 = vld [vmem:[#allocation6 + $0x158] sm:$0xff]
    %v2718 = vld [vmem:[#allocation6 + $0x160] sm:$0xff]
    %v2719 = vld [vmem:[#allocation6 + $0x168] sm:$0xff]
    %v2720 = vld [vmem:[#allocation6 + $0x170] sm:$0xff]
    %v2721 = vld [vmem:[#allocation6 + $0x178] sm:$0xff]
    %v2722 = vld [vmem:[#allocation6 + $0x180] sm:$0xff]
    %v2723 = vld [vmem:[#allocation6 + $0x188] sm:$0xff]
    %v2724 = vld [vmem:[#allocation6 + $0x190] sm:$0xff]
    %v2725 = vld [vmem:[#allocation6 + $0x198] sm:$0xff]
    %v2726 = vld [vmem:[#allocation6 + $0x1a0] sm:$0xff]
    %v2727 = vld [vmem:[#allocation6 + $0x1a8] sm:$0xff]
    %v2728 = vld [vmem:[#allocation6 + $0x1b0] sm:$0xff]
    %v2729 = vld [vmem:[#allocation6 + $0x1b8] sm:$0xff]
    %v2730 = vld [vmem:[#allocation6 + $0x1c0] sm:$0xff]
    %v2731 = vld [vmem:[#allocation6 + $0x1c8] sm:$0xff]
    %v2732 = vld [vmem:[#allocation6 + $0x1d0] sm:$0xff]
    %v2733 = vld [vmem:[#allocation6 + $0x1d8] sm:$0xff]
    %v2734 = vld [vmem:[#allocation6 + $0x1e0] sm:$0xff]
    %v2735 = vld [vmem:[#allocation6 + $0x1e8] sm:$0xff]
    %v2736 = vld [vmem:[#allocation6 + $0x1f0] sm:$0xff]
    %v2737 = vld [vmem:[#allocation6 + $0x1f8] sm:$0xff]
    %v2738 = vld [vmem:[#allocation6 + $0x200] sm:$0xff]
    %v2739 = vld [vmem:[#allocation6 + $0x208] sm:$0xff]
    %v2740 = vld [vmem:[#allocation6 + $0x210] sm:$0xff]
    %v2741 = vld [vmem:[#allocation6 + $0x218] sm:$0xff]
    %v2742 = vld [vmem:[#allocation6 + $0x220] sm:$0xff]
    %v2743 = vld [vmem:[#allocation6 + $0x228] sm:$0xff]
    %v2744 = vld [vmem:[#allocation6 + $0x230] sm:$0xff]
    %v2745 = vld [vmem:[#allocation6 + $0x238] sm:$0xff]
    %v2746 = vld [vmem:[#allocation6 + $0x240] sm:$0xff]
    %v2747 = vld [vmem:[#allocation6 + $0x248] sm:$0xff]
    %v2748 = vld [vmem:[#allocation6 + $0x250] sm:$0xff]
    %v2749 = vld [vmem:[#allocation6 + $0x258] sm:$0xff]
    %v2750 = vld [vmem:[#allocation6 + $0x260] sm:$0xff]
    %v2751 = vld [vmem:[#allocation6 + $0x268] sm:$0xff]
    %v2752 = vld [vmem:[#allocation6 + $0x270] sm:$0xff]
    %v2753 = vld [vmem:[#allocation6 + $0x278] sm:$0xff]
    %v2754 = vld [vmem:[#allocation6 + $0x280] sm:$0xff]
    %v2755 = vld [vmem:[#allocation6 + $0x288] sm:$0xff]
    %v2756 = vld [vmem:[#allocation6 + $0x290] sm:$0xff]
    %v2757 = vld [vmem:[#allocation6 + $0x298] sm:$0xff]
    %v2758 = vld [vmem:[#allocation6 + $0x2a0] sm:$0xff]
    %v2759 = vld [vmem:[#allocation6 + $0x2a8] sm:$0xff]
    %v2760 = vld [vmem:[#allocation6 + $0x2b0] sm:$0xff]
    %v2761 = vld [vmem:[#allocation6 + $0x2b8] sm:$0xff]
    %v2762 = vld [vmem:[#allocation6 + $0x2c0] sm:$0xff]
    %v2763 = vld [vmem:[#allocation6 + $0x2c8] sm:$0xff]
    %v2764 = vld [vmem:[#allocation6 + $0x2d0] sm:$0xff]
    %v2765 = vld [vmem:[#allocation6 + $0x2d8] sm:$0xff]
    %v2766 = vld [vmem:[#allocation6 + $0x2e0] sm:$0xff]
    %v2767 = vld [vmem:[#allocation6 + $0x2e8] sm:$0xff]
    %v2768 = vld [vmem:[#allocation6 + $0x2f0] sm:$0xff]
    %v2769 = vld [vmem:[#allocation6 + $0x2f8] sm:$0xff]
    %v2770 = vld [vmem:[%s11] sm:$0x3]
    %v2771 = vld [vmem:[#allocation7] sm:$0xf]
    %v2772 = vld [vmem:[#allocation7 + $0x4] sm:$0xf]
    %v2773 = vld [vmem:[#allocation7 + $0x8] sm:$0xf]
    %v2774 = vld [vmem:[#allocation7 + $0xc] sm:$0xf]
    %v2775 = vld [vmem:[#allocation7 + $0x10] sm:$0xf]
    %v2776 = vld [vmem:[#allocation7 + $0x14] sm:$0xf]
    %v2777 = vld [vmem:[#allocation7 + $0x18] sm:$0xf]
    %v2778 = vld [vmem:[#allocation7 + $0x1c] sm:$0xf]
    %v2779 = vld [vmem:[#allocation7 + $0x20] sm:$0xf]
    %v2780 = vld [vmem:[#allocation7 + $0x24] sm:$0xf]
    %v2781 = vld [vmem:[#allocation7 + $0x28] sm:$0xf]
    %v2782 = vld [vmem:[#allocation7 + $0x2c] sm:$0xf]
    %v2783 = vld [vmem:[#allocation7 + $0x30] sm:$0xf]
    %v2784 = vld [vmem:[#allocation7 + $0x34] sm:$0xf]
    %v2785 = vld [vmem:[#allocation7 + $0x38] sm:$0xf]
    %v2786 = vld [vmem:[#allocation7 + $0x3c] sm:$0xf]
    %v2787 = vld [vmem:[#allocation7 + $0x40] sm:$0xf]
    %v2788 = vld [vmem:[#allocation7 + $0x44] sm:$0xf]
    %v2789 = vld [vmem:[#allocation7 + $0x48] sm:$0xf]
    %v2790 = vld [vmem:[#allocation7 + $0x4c] sm:$0xf]
    %v2791 = vld [vmem:[#allocation7 + $0x50] sm:$0xf]
    %v2792 = vld [vmem:[#allocation7 + $0x54] sm:$0xf]
    %v2793 = vld [vmem:[#allocation7 + $0x58] sm:$0xf]
    %v2794 = vld [vmem:[#allocation7 + $0x5c] sm:$0xf]
    %v2795 = vld [vmem:[#allocation7 + $0x60] sm:$0xf]
    %v2796 = vld [vmem:[#allocation7 + $0x64] sm:$0xf]
    %v2797 = vld [vmem:[#allocation7 + $0x68] sm:$0xf]
    %v2798 = vld [vmem:[#allocation7 + $0x6c] sm:$0xf]
    %v2799 = vld [vmem:[#allocation7 + $0x70] sm:$0xf]
    %v2800 = vld [vmem:[#allocation7 + $0x74] sm:$0xf]
    %v2801 = vld [vmem:[#allocation7 + $0x78] sm:$0xf]
    %v2802 = vld [vmem:[#allocation7 + $0x7c] sm:$0xf]
    %v2803 = vld [vmem:[#allocation7 + $0x80] sm:$0xf]
    %v2804 = vld [vmem:[#allocation7 + $0x84] sm:$0xf]
    %v2805 = vld [vmem:[#allocation7 + $0x88] sm:$0xf]
    %v2806 = vld [vmem:[#allocation7 + $0x8c] sm:$0xf]
    %v2807 = vld [vmem:[#allocation7 + $0x90] sm:$0xf]
    %v2808 = vld [vmem:[#allocation7 + $0x94] sm:$0xf]
    %v2809 = vld [vmem:[#allocation7 + $0x98] sm:$0xf]
    %v2810 = vld [vmem:[#allocation7 + $0x9c] sm:$0xf]
    %v2811 = vld [vmem:[#allocation7 + $0xa0] sm:$0xf]
    %v2812 = vld [vmem:[#allocation7 + $0xa4] sm:$0xf]
    %v2813 = vld [vmem:[#allocation7 + $0xa8] sm:$0xf]
    %v2814 = vld [vmem:[#allocation7 + $0xac] sm:$0xf]
    %v2815 = vld [vmem:[#allocation7 + $0xb0] sm:$0xf]
    %v2816 = vld [vmem:[#allocation7 + $0xb4] sm:$0xf]
    %v2817 = vld [vmem:[#allocation7 + $0xb8] sm:$0xf]
    %v2818 = vld [vmem:[#allocation7 + $0xbc] sm:$0xf]
    %v2819 = vld [vmem:[#allocation7 + $0xc0] sm:$0xf]
    %v2820 = vld [vmem:[#allocation7 + $0xc4] sm:$0xf]
    %v2821 = vld [vmem:[#allocation7 + $0xc8] sm:$0xf]
    %v2822 = vld [vmem:[#allocation7 + $0xcc] sm:$0xf]
    %v2823 = vld [vmem:[#allocation7 + $0xd0] sm:$0xf]
    %v2824 = vld [vmem:[#allocation7 + $0xd4] sm:$0xf]
    %v2825 = vld [vmem:[#allocation7 + $0xd8] sm:$0xf]
    %v2826 = vld [vmem:[#allocation7 + $0xdc] sm:$0xf]
    %v2827 = vld [vmem:[#allocation7 + $0xe0] sm:$0xf]
    %v2828 = vld [vmem:[#allocation7 + $0xe4] sm:$0xf]
    %v2829 = vld [vmem:[#allocation7 + $0xe8] sm:$0xf]
    %v2830 = vld [vmem:[#allocation7 + $0xec] sm:$0xf]
    %v2831 = vld [vmem:[#allocation7 + $0xf0] sm:$0xf]
    %v2832 = vld [vmem:[#allocation7 + $0xf4] sm:$0xf]
    %v2833 = vld [vmem:[#allocation7 + $0xf8] sm:$0xf]
    %v2834 = vld [vmem:[#allocation7 + $0xfc] sm:$0xf]
    %v2835 = vld [vmem:[#allocation7 + $0x100] sm:$0xf]
    %v2836 = vld [vmem:[#allocation7 + $0x104] sm:$0xf]
    %v2837 = vld [vmem:[#allocation7 + $0x108] sm:$0xf]
    %v2838 = vld [vmem:[#allocation7 + $0x10c] sm:$0xf]
    %v2839 = vld [vmem:[#allocation7 + $0x110] sm:$0xf]
    %v2840 = vld [vmem:[#allocation7 + $0x114] sm:$0xf]
    %v2841 = vld [vmem:[#allocation7 + $0x118] sm:$0xf]
    %v2842 = vld [vmem:[#allocation7 + $0x11c] sm:$0xf]
    %v2843 = vld [vmem:[#allocation7 + $0x120] sm:$0xf]
    %v2844 = vld [vmem:[#allocation7 + $0x124] sm:$0xf]
    %v2845 = vld [vmem:[#allocation7 + $0x128] sm:$0xf]
    %v2846 = vld [vmem:[#allocation7 + $0x12c] sm:$0xf]
    %v2847 = vld [vmem:[#allocation7 + $0x130] sm:$0xf]
    %v2848 = vld [vmem:[#allocation7 + $0x134] sm:$0xf]
    %v2849 = vld [vmem:[#allocation7 + $0x138] sm:$0xf]
    %v2850 = vld [vmem:[#allocation7 + $0x13c] sm:$0xf]
    %v2851 = vld [vmem:[#allocation7 + $0x140] sm:$0xf]
    %v2852 = vld [vmem:[#allocation7 + $0x144] sm:$0xf]
    %v2853 = vld [vmem:[#allocation7 + $0x148] sm:$0xf]
    %v2854 = vld [vmem:[#allocation7 + $0x14c] sm:$0xf]
    %v2855 = vld [vmem:[#allocation7 + $0x150] sm:$0xf]
    %v2856 = vld [vmem:[#allocation7 + $0x154] sm:$0xf]
    %v2857 = vld [vmem:[#allocation7 + $0x158] sm:$0xf]
    %v2858 = vld [vmem:[#allocation7 + $0x15c] sm:$0xf]
    %v2859 = vld [vmem:[#allocation7 + $0x160] sm:$0xf]
    %v2860 = vld [vmem:[#allocation7 + $0x164] sm:$0xf]
    %v2861 = vld [vmem:[#allocation7 + $0x168] sm:$0xf]
    %v2862 = vld [vmem:[#allocation7 + $0x16c] sm:$0xf]
    %v2863 = vld [vmem:[#allocation7 + $0x170] sm:$0xf]
    %v2864 = vld [vmem:[#allocation7 + $0x174] sm:$0xf]
    %v2865 = vld [vmem:[#allocation7 + $0x178] sm:$0xf]
    %v2866 = vld [vmem:[#allocation7 + $0x17c] sm:$0xf]
    %v2867 = vld [vmem:[#allocation7 + $0x180] sm:$0xf]
    %v2868 = vld [vmem:[#allocation7 + $0x184] sm:$0xf]
    %v2869 = vld [vmem:[#allocation7 + $0x188] sm:$0xf]
    %v2870 = vld [vmem:[#allocation7 + $0x18c] sm:$0xf]
    %v2871 = vld [vmem:[#allocation7 + $0x190] sm:$0xf]
    %v2872 = vld [vmem:[#allocation7 + $0x194] sm:$0xf]
    %v2873 = vld [vmem:[#allocation7 + $0x198] sm:$0xf]
    %v2874 = vld [vmem:[#allocation7 + $0x19c] sm:$0xf]
    %v2875 = vld [vmem:[#allocation7 + $0x1a0] sm:$0xf]
    %v2876 = vld [vmem:[#allocation7 + $0x1a4] sm:$0xf]
    %v2877 = vld [vmem:[#allocation7 + $0x1a8] sm:$0xf]
    %v2878 = vld [vmem:[#allocation7 + $0x1ac] sm:$0xf]
    %v2879 = vld [vmem:[#allocation7 + $0x1b0] sm:$0xf]
    %v2880 = vld [vmem:[#allocation7 + $0x1b4] sm:$0xf]
    %v2881 = vld [vmem:[#allocation7 + $0x1b8] sm:$0xf]
    %v2882 = vld [vmem:[#allocation7 + $0x1bc] sm:$0xf]
    %v2883 = vld [vmem:[#allocation7 + $0x1c0] sm:$0xf]
    %v2884 = vld [vmem:[#allocation7 + $0x1c4] sm:$0xf]
    %v2885 = vld [vmem:[#allocation7 + $0x1c8] sm:$0xf]
    %v2886 = vld [vmem:[#allocation7 + $0x1cc] sm:$0xf]
    %v2887 = vld [vmem:[#allocation7 + $0x1d0] sm:$0xf]
    %v2888 = vld [vmem:[#allocation7 + $0x1d4] sm:$0xf]
    %v2889 = vld [vmem:[#allocation7 + $0x1d8] sm:$0xf]
    %v2890 = vld [vmem:[#allocation7 + $0x1dc] sm:$0xf]
    %v2891 = vld [vmem:[#allocation7 + $0x1e0] sm:$0xf]
    %v2892 = vld [vmem:[#allocation7 + $0x1e4] sm:$0xf]
    %v2893 = vld [vmem:[#allocation7 + $0x1e8] sm:$0xf]
    %v2894 = vld [vmem:[#allocation7 + $0x1ec] sm:$0xf]
    %v2895 = vld [vmem:[#allocation7 + $0x1f0] sm:$0xf]
    %v2896 = vld [vmem:[#allocation7 + $0x1f4] sm:$0xf]
    %v2897 = vld [vmem:[#allocation7 + $0x1f8] sm:$0xf]
    %v2898 = vld [vmem:[#allocation7 + $0x1fc] sm:$0xf]
    %v2899 = vld [vmem:[#allocation7 + $0x200] sm:$0xf]
    %v2900 = vld [vmem:[#allocation7 + $0x204] sm:$0xf]
    %v2901 = vld [vmem:[#allocation7 + $0x208] sm:$0xf]
    %v2902 = vld [vmem:[#allocation7 + $0x20c] sm:$0xf]
    %v2903 = vld [vmem:[#allocation7 + $0x210] sm:$0xf]
    %v2904 = vld [vmem:[#allocation7 + $0x214] sm:$0xf]
    %v2905 = vld [vmem:[#allocation7 + $0x218] sm:$0xf]
    %v2906 = vld [vmem:[#allocation7 + $0x21c] sm:$0xf]
    %v2907 = vld [vmem:[#allocation7 + $0x220] sm:$0xf]
    %v2908 = vld [vmem:[#allocation7 + $0x224] sm:$0xf]
    %v2909 = vld [vmem:[#allocation7 + $0x228] sm:$0xf]
    %v2910 = vld [vmem:[#allocation7 + $0x22c] sm:$0xf]
    %v2911 = vld [vmem:[#allocation7 + $0x230] sm:$0xf]
    %v2912 = vld [vmem:[#allocation7 + $0x234] sm:$0xf]
    %v2913 = vld [vmem:[#allocation7 + $0x238] sm:$0xf]
    %v2914 = vld [vmem:[#allocation7 + $0x23c] sm:$0xf]
    %v2915 = vld [vmem:[#allocation7 + $0x240] sm:$0xf]
    %v2916 = vld [vmem:[#allocation7 + $0x244] sm:$0xf]
    %v2917 = vld [vmem:[#allocation7 + $0x248] sm:$0xf]
    %v2918 = vld [vmem:[#allocation7 + $0x24c] sm:$0xf]
    %v2919 = vld [vmem:[#allocation7 + $0x250] sm:$0xf]
    %v2920 = vld [vmem:[#allocation7 + $0x254] sm:$0xf]
    %v2921 = vld [vmem:[#allocation7 + $0x258] sm:$0xf]
    %v2922 = vld [vmem:[#allocation7 + $0x25c] sm:$0xf]
    %v2923 = vld [vmem:[#allocation7 + $0x260] sm:$0xf]
    %v2924 = vld [vmem:[#allocation7 + $0x264] sm:$0xf]
    %v2925 = vld [vmem:[#allocation7 + $0x268] sm:$0xf]
    %v2926 = vld [vmem:[#allocation7 + $0x26c] sm:$0xf]
    %v2927 = vld [vmem:[#allocation7 + $0x270] sm:$0xf]
    %v2928 = vld [vmem:[#allocation7 + $0x274] sm:$0xf]
    %v2929 = vld [vmem:[#allocation7 + $0x278] sm:$0xf]
    %v2930 = vld [vmem:[#allocation7 + $0x27c] sm:$0xf]
    %v2931 = vld [vmem:[#allocation7 + $0x280] sm:$0xf]
    %v2932 = vld [vmem:[#allocation7 + $0x284] sm:$0xf]
    %v2933 = vld [vmem:[#allocation7 + $0x288] sm:$0xf]
    %v2934 = vld [vmem:[#allocation7 + $0x28c] sm:$0xf]
    %v2935 = vld [vmem:[#allocation7 + $0x290] sm:$0xf]
    %v2936 = vld [vmem:[#allocation7 + $0x294] sm:$0xf]
    %v2937 = vld [vmem:[#allocation7 + $0x298] sm:$0xf]
    %v2938 = vld [vmem:[#allocation7 + $0x29c] sm:$0xf]
    %v2939 = vld [vmem:[#allocation7 + $0x2a0] sm:$0xf]
    %v2940 = vld [vmem:[#allocation7 + $0x2a4] sm:$0xf]
    %v2941 = vld [vmem:[#allocation7 + $0x2a8] sm:$0xf]
    %v2942 = vld [vmem:[#allocation7 + $0x2ac] sm:$0xf]
    %v2943 = vld [vmem:[#allocation7 + $0x2b0] sm:$0xf]
    %v2944 = vld [vmem:[#allocation7 + $0x2b4] sm:$0xf]
    %v2945 = vld [vmem:[#allocation7 + $0x2b8] sm:$0xf]
    %v2946 = vld [vmem:[#allocation7 + $0x2bc] sm:$0xf]
    %v2947 = vld [vmem:[#allocation7 + $0x2c0] sm:$0xf]
    %v2948 = vld [vmem:[#allocation7 + $0x2c4] sm:$0xf]
    %v2949 = vld [vmem:[#allocation7 + $0x2c8] sm:$0xf]
    %v2950 = vld [vmem:[#allocation7 + $0x2cc] sm:$0xf]
    %v2951 = vld [vmem:[#allocation7 + $0x2d0] sm:$0xf]
    %v2952 = vld [vmem:[#allocation7 + $0x2d4] sm:$0xf]
    %v2953 = vld [vmem:[#allocation7 + $0x2d8] sm:$0xf]
    %v2954 = vld [vmem:[#allocation7 + $0x2dc] sm:$0xf]
    %v2955 = vld [vmem:[#allocation7 + $0x2e0] sm:$0xf]
    %v2956 = vld [vmem:[#allocation7 + $0x2e4] sm:$0xf]
    %v2957 = vld [vmem:[#allocation7 + $0x2e8] sm:$0xf]
    %v2958 = vld [vmem:[#allocation7 + $0x2ec] sm:$0xf]
    %v2959 = vld [vmem:[#allocation7 + $0x2f0] sm:$0xf]
    %v2960 = vld [vmem:[#allocation7 + $0x2f4] sm:$0xf]
    %v2961 = vld [vmem:[#allocation7 + $0x2f8] sm:$0xf]
    %v2962 = vld [vmem:[#allocation7 + $0x2fc] sm:$0xf]
    %v2963 = vld [vmem:[%s13] sm:$0x1]
    %2965 = vset.pattern.permute.xlu0 0
    %2966 = vperm.xlu0 %2965, %v2664
    %v2967 = vpop.permute.xlu0 %2966
    %2970 = vset.pattern.permute.xlu0 0
    %2971 = vperm.xlu0 %2970, %v2665
    %v2972 = vpop.permute.xlu0 %2971
    %2975 = vset.pattern.permute.xlu0 0
    %2976 = vperm.xlu0 %2975, %v2666
    %v2977 = vpop.permute.xlu0 %2976
    %2980 = vset.pattern.permute.xlu0 0
    %2981 = vperm.xlu0 %2980, %v2667
    %v2982 = vpop.permute.xlu0 %2981
    %2985 = vset.pattern.permute.xlu0 0
    %2986 = vperm.xlu0 %2985, %v2668
    %v2987 = vpop.permute.xlu0 %2986
    %2990 = vset.pattern.permute.xlu0 0
    %2991 = vperm.xlu0 %2990, %v2669
    %v2992 = vpop.permute.xlu0 %2991
    %2995 = vset.pattern.permute.xlu0 0
    %2996 = vperm.xlu0 %2995, %v2670
    %v2997 = vpop.permute.xlu0 %2996
    %3000 = vset.pattern.permute.xlu0 0
    %3001 = vperm.xlu0 %3000, %v2671
    %v3002 = vpop.permute.xlu0 %3001
    %v3005 = vlaneseq
    %v3006 = vshrl.u32 %v3005, 7
    %v3007 = vsub.s32 0, %v3006
    %v3008 = vrot.slane %v2672, %v3007
    %v3009 = vlaneseq
    %v3010 = vshrl.u32 %v3009, 7
    %v3011 = vsub.s32 4, %v3010
    %v3012 = vrot.slane %v2672, %v3011
    %v3015 = vlaneseq
    %v3016 = vshrl.u32 %v3015, 7
    %v3017 = vsub.s32 0, %v3016
    %v3018 = vrot.slane %v3008, %v3017
    %v3019 = vlaneseq
    %v3020 = vshrl.u32 %v3019, 7
    %v3021 = vsub.s32 0, %v3020
    %v3022 = vrot.slane %v3012, %v3021
    %v3023 = vmul.f32 %v2967, %v3018
    %v3024 = vmul.f32 %v2967, %v3022
    %v3025 = vmul.f32 %v2972, %v3018
    %v3026 = vmul.f32 %v2972, %v3022
    %v3027 = vmul.f32 %v2977, %v3018
    %v3028 = vmul.f32 %v2977, %v3022
    %v3029 = vmul.f32 %v2982, %v3018
    %v3030 = vmul.f32 %v2982, %v3022
    %v3031 = vmul.f32 %v2987, %v3018
    %v3032 = vmul.f32 %v2987, %v3022
    %v3033 = vmul.f32 %v2992, %v3018
    %v3034 = vmul.f32 %v2992, %v3022
    %v3035 = vmul.f32 %v2997, %v3018
    %v3036 = vmul.f32 %v2997, %v3022
    %v3037 = vmul.f32 %v3002, %v3018
    %v3038 = vmul.f32 %v3002, %v3022
    %v3039 = vlaneseq
    %v3040 = vshrl.u32 %v3039, 7
    %v3041 = vsub.s32 1, %v3040
    %v3042 = vrot.slane %v2672, %v3041
    %v3043 = vlaneseq
    %v3044 = vshrl.u32 %v3043, 7
    %v3045 = vsub.s32 5, %v3044
    %v3046 = vrot.slane %v2672, %v3045
    %v3049 = vlaneseq
    %v3050 = vshrl.u32 %v3049, 7
    %v3051 = vsub.s32 1, %v3050
    %v3052 = vrot.slane %v3042, %v3051
    %v3053 = vlaneseq
    %v3054 = vshrl.u32 %v3053, 7
    %v3055 = vsub.s32 1, %v3054
    %v3056 = vrot.slane %v3046, %v3055
    %v3057 = vmul.f32 %v2967, %v3052
    %v3058 = vmul.f32 %v2967, %v3056
    %v3059 = vmul.f32 %v2972, %v3052
    %v3060 = vmul.f32 %v2972, %v3056
    %v3061 = vmul.f32 %v2977, %v3052
    %v3062 = vmul.f32 %v2977, %v3056
    %v3063 = vmul.f32 %v2982, %v3052
    %v3064 = vmul.f32 %v2982, %v3056
    %v3065 = vmul.f32 %v2987, %v3052
    %v3066 = vmul.f32 %v2987, %v3056
    %v3067 = vmul.f32 %v2992, %v3052
    %v3068 = vmul.f32 %v2992, %v3056
    %v3069 = vmul.f32 %v2997, %v3052
    %v3070 = vmul.f32 %v2997, %v3056
    %v3071 = vmul.f32 %v3002, %v3052
    %v3072 = vmul.f32 %v3002, %v3056
    %v3089 = vrot.slane %v3057, 1
    %v3090 = vrot.slane %v3059, 1
    %v3091 = vsel %vm531, %v3089, %v3090
    %v3092 = vrot.slane %v3058, 1
    %v3093 = vrot.slane %v3060, 1
    %v3094 = vsel %vm531, %v3092, %v3093
    %v3095 = vrot.slane %v3061, 1
    %v3096 = vsel %vm531, %v3090, %v3095
    %v3097 = vrot.slane %v3062, 1
    %v3098 = vsel %vm531, %v3093, %v3097
    %v3099 = vrot.slane %v3063, 1
    %v3100 = vsel %vm531, %v3095, %v3099
    %v3101 = vrot.slane %v3064, 1
    %v3102 = vsel %vm531, %v3097, %v3101
    %v3103 = vrot.slane %v3065, 1
    %v3104 = vsel %vm531, %v3099, %v3103
    %v3105 = vrot.slane %v3066, 1
    %v3106 = vsel %vm531, %v3101, %v3105
    %v3107 = vrot.slane %v3067, 1
    %v3108 = vsel %vm531, %v3103, %v3107
    %v3109 = vrot.slane %v3068, 1
    %v3110 = vsel %vm531, %v3105, %v3109
    %v3111 = vrot.slane %v3069, 1
    %v3112 = vsel %vm531, %v3107, %v3111
    %v3113 = vrot.slane %v3070, 1
    %v3114 = vsel %vm531, %v3109, %v3113
    %v3115 = vrot.slane %v3071, 1
    %v3116 = vsel %vm531, %v3111, %v3115
    %v3117 = vrot.slane %v3072, 1
    %v3118 = vsel %vm531, %v3113, %v3117
    %v3135 = vadd.f32 %v3023, %v3091
    %v3136 = vadd.f32 %v3024, %v3094
    %v3137 = vadd.f32 %v3025, %v3096
    %v3138 = vadd.f32 %v3026, %v3098
    %v3139 = vadd.f32 %v3027, %v3100
    %v3140 = vadd.f32 %v3028, %v3102
    %v3141 = vadd.f32 %v3029, %v3104
    %v3142 = vadd.f32 %v3030, %v3106
    %v3143 = vadd.f32 %v3031, %v3108
    %v3144 = vadd.f32 %v3032, %v3110
    %v3145 = vadd.f32 %v3033, %v3112
    %v3146 = vadd.f32 %v3034, %v3114
    %v3147 = vadd.f32 %v3035, %v3116
    %v3148 = vadd.f32 %v3036, %v3118
    %v3149 = vadd.f32 %v3037, %v3115
    %v3150 = vadd.f32 %v3038, %v3117
    %v3151 = vlaneseq
    %v3152 = vshrl.u32 %v3151, 7
    %v3153 = vsub.s32 2, %v3152
    %v3154 = vrot.slane %v2672, %v3153
    %v3155 = vlaneseq
    %v3156 = vshrl.u32 %v3155, 7
    %v3157 = vsub.s32 6, %v3156
    %v3158 = vrot.slane %v2672, %v3157
    %v3161 = vlaneseq
    %v3162 = vshrl.u32 %v3161, 7
    %v3163 = vsub.s32 2, %v3162
    %v3164 = vrot.slane %v3154, %v3163
    %v3165 = vlaneseq
    %v3166 = vshrl.u32 %v3165, 7
    %v3167 = vsub.s32 2, %v3166
    %v3168 = vrot.slane %v3158, %v3167
    %v3169 = vmul.f32 %v2967, %v3164
    %v3170 = vmul.f32 %v2967, %v3168
    %v3171 = vmul.f32 %v2972, %v3164
    %v3172 = vmul.f32 %v2972, %v3168
    %v3173 = vmul.f32 %v2977, %v3164
    %v3174 = vmul.f32 %v2977, %v3168
    %v3175 = vmul.f32 %v2982, %v3164
    %v3176 = vmul.f32 %v2982, %v3168
    %v3177 = vmul.f32 %v2987, %v3164
    %v3178 = vmul.f32 %v2987, %v3168
    %v3179 = vmul.f32 %v2992, %v3164
    %v3180 = vmul.f32 %v2992, %v3168
    %v3181 = vmul.f32 %v2997, %v3164
    %v3182 = vmul.f32 %v2997, %v3168
    %v3183 = vmul.f32 %v3002, %v3164
    %v3184 = vmul.f32 %v3002, %v3168
    %v3201 = vrot.slane %v3169, 2
    %v3202 = vrot.slane %v3171, 2
    %v3203 = vsel %vm644, %v3201, %v3202
    %v3204 = vrot.slane %v3170, 2
    %v3205 = vrot.slane %v3172, 2
    %v3206 = vsel %vm644, %v3204, %v3205
    %v3207 = vrot.slane %v3173, 2
    %v3208 = vsel %vm644, %v3202, %v3207
    %v3209 = vrot.slane %v3174, 2
    %v3210 = vsel %vm644, %v3205, %v3209
    %v3211 = vrot.slane %v3175, 2
    %v3212 = vsel %vm644, %v3207, %v3211
    %v3213 = vrot.slane %v3176, 2
    %v3214 = vsel %vm644, %v3209, %v3213
    %v3215 = vrot.slane %v3177, 2
    %v3216 = vsel %vm644, %v3211, %v3215
    %v3217 = vrot.slane %v3178, 2
    %v3218 = vsel %vm644, %v3213, %v3217
    %v3219 = vrot.slane %v3179, 2
    %v3220 = vsel %vm644, %v3215, %v3219
    %v3221 = vrot.slane %v3180, 2
    %v3222 = vsel %vm644, %v3217, %v3221
    %v3223 = vrot.slane %v3181, 2
    %v3224 = vsel %vm644, %v3219, %v3223
    %v3225 = vrot.slane %v3182, 2
    %v3226 = vsel %vm644, %v3221, %v3225
    %v3227 = vrot.slane %v3183, 2
    %v3228 = vsel %vm644, %v3223, %v3227
    %v3229 = vrot.slane %v3184, 2
    %v3230 = vsel %vm644, %v3225, %v3229
    %v3247 = vadd.f32 %v3135, %v3203
    %v3248 = vadd.f32 %v3136, %v3206
    %v3249 = vadd.f32 %v3137, %v3208
    %v3250 = vadd.f32 %v3138, %v3210
    %v3251 = vadd.f32 %v3139, %v3212
    %v3252 = vadd.f32 %v3140, %v3214
    %v3253 = vadd.f32 %v3141, %v3216
    %v3254 = vadd.f32 %v3142, %v3218
    %v3255 = vadd.f32 %v3143, %v3220
    %v3256 = vadd.f32 %v3144, %v3222
    %v3257 = vadd.f32 %v3145, %v3224
    %v3258 = vadd.f32 %v3146, %v3226
    %v3259 = vadd.f32 %v3147, %v3228
    %v3260 = vadd.f32 %v3148, %v3230
    %v3261 = vadd.f32 %v3149, %v3227
    %v3262 = vadd.f32 %v3150, %v3229
    %v3264 = vlaneseq
    %v3265 = vshrl.u32 %v3264, 7
    %v3266 = vsub.s32 0, %v3265
    %v3267 = vrot.slane %v2673, %v3266
    %v3268 = vlaneseq
    %v3269 = vshrl.u32 %v3268, 7
    %v3270 = vsub.s32 1, %v3269
    %v3271 = vrot.slane %v2673, %v3270
    %v3274 = vadd.f32 %v3247, %v3267
    %v3275 = vadd.f32 %v3248, %v3271
    %v3276 = vadd.f32 %v3249, %v3267
    %v3277 = vadd.f32 %v3250, %v3271
    %v3278 = vadd.f32 %v3251, %v3267
    %v3279 = vadd.f32 %v3252, %v3271
    %v3280 = vadd.f32 %v3253, %v3267
    %v3281 = vadd.f32 %v3254, %v3271
    %v3282 = vadd.f32 %v3255, %v3267
    %v3283 = vadd.f32 %v3256, %v3271
    %v3284 = vadd.f32 %v3257, %v3267
    %v3285 = vadd.f32 %v3258, %v3271
    %v3286 = vadd.f32 %v3259, %v3267
    %v3287 = vadd.f32 %v3260, %v3271
    %v3288 = vadd.f32 %v3261, %v3267
    %v3289 = vadd.f32 %v3262, %v3271
    %v3290 = vmax.f32 %v3274, 0.0
    %v3291 = vmax.f32 %v3275, 0.0
    %v3292 = vmax.f32 %v3276, 0.0
    %v3293 = vmax.f32 %v3277, 0.0
    %v3294 = vmax.f32 %v3278, 0.0
    %v3295 = vmax.f32 %v3279, 0.0
    %v3296 = vmax.f32 %v3280, 0.0
    %v3297 = vmax.f32 %v3281, 0.0
    %v3298 = vmax.f32 %v3282, 0.0
    %v3299 = vmax.f32 %v3283, 0.0
    %v3300 = vmax.f32 %v3284, 0.0
    %v3301 = vmax.f32 %v3285, 0.0
    %v3302 = vmax.f32 %v3286, 0.0
    %v3303 = vmax.f32 %v3287, 0.0
    %v3304 = vmax.f32 %v3288, 0.0
    %v3305 = vmax.f32 %v3289, 0.0
    %v3322 = vrot.slane %v3290, 1
    %v3323 = vrot.slane %v3292, 1
    %v3324 = vsel %vm531, %v3322, %v3323
    %v3325 = vrot.slane %v3291, 1
    %v3326 = vrot.slane %v3293, 1
    %v3327 = vsel %vm531, %v3325, %v3326
    %v3328 = vrot.slane %v3294, 1
    %v3329 = vsel %vm531, %v3323, %v3328
    %v3330 = vrot.slane %v3295, 1
    %v3331 = vsel %vm531, %v3326, %v3330
    %v3332 = vrot.slane %v3296, 1
    %v3333 = vsel %vm531, %v3328, %v3332
    %v3334 = vrot.slane %v3297, 1
    %v3335 = vsel %vm531, %v3330, %v3334
    %v3336 = vrot.slane %v3298, 1
    %v3337 = vsel %vm531, %v3332, %v3336
    %v3338 = vrot.slane %v3299, 1
    %v3339 = vsel %vm531, %v3334, %v3338
    %v3340 = vrot.slane %v3300, 1
    %v3341 = vsel %vm531, %v3336, %v3340
    %v3342 = vrot.slane %v3301, 1
    %v3343 = vsel %vm531, %v3338, %v3342
    %v3344 = vrot.slane %v3302, 1
    %v3345 = vsel %vm531, %v3340, %v3344
    %v3346 = vrot.slane %v3303, 1
    %v3347 = vsel %vm531, %v3342, %v3346
    %v3348 = vrot.slane %v3304, 1
    %v3349 = vsel %vm531, %v3344, %v3348
    %v3350 = vrot.slane %v3305, 1
    %v3351 = vsel %vm531, %v3346, %v3350
    %v3368 = vrot.slane %v3290, 2
    %v3369 = vrot.slane %v3292, 2
    %v3370 = vsel %vm644, %v3368, %v3369
    %v3371 = vrot.slane %v3291, 2
    %v3372 = vrot.slane %v3293, 2
    %v3373 = vsel %vm644, %v3371, %v3372
    %v3374 = vrot.slane %v3294, 2
    %v3375 = vsel %vm644, %v3369, %v3374
    %v3376 = vrot.slane %v3295, 2
    %v3377 = vsel %vm644, %v3372, %v3376
    %v3378 = vrot.slane %v3296, 2
    %v3379 = vsel %vm644, %v3374, %v3378
    %v3380 = vrot.slane %v3297, 2
    %v3381 = vsel %vm644, %v3376, %v3380
    %v3382 = vrot.slane %v3298, 2
    %v3383 = vsel %vm644, %v3378, %v3382
    %v3384 = vrot.slane %v3299, 2
    %v3385 = vsel %vm644, %v3380, %v3384
    %v3386 = vrot.slane %v3300, 2
    %v3387 = vsel %vm644, %v3382, %v3386
    %v3388 = vrot.slane %v3301, 2
    %v3389 = vsel %vm644, %v3384, %v3388
    %v3390 = vrot.slane %v3302, 2
    %v3391 = vsel %vm644, %v3386, %v3390
    %v3392 = vrot.slane %v3303, 2
    %v3393 = vsel %vm644, %v3388, %v3392
    %v3394 = vrot.slane %v3304, 2
    %v3395 = vsel %vm644, %v3390, %v3394
    %v3396 = vrot.slane %v3305, 2
    %v3397 = vsel %vm644, %v3392, %v3396
    %v3414 = vpack.c.bf16 %v3292, %v3290
    %v3415 = vpack.c.bf16 %v3293, %v3291
    %v3416 = vpack.c.bf16 %v3329, %v3324
    %v3417 = vpack.c.bf16 %v3331, %v3327
    %v3418 = vpack.c.bf16 %v3375, %v3370
    %v3419 = vpack.c.bf16 %v3377, %v3373
    %v3420 = vpack.c.bf16 %v3296, %v3294
    %v3421 = vpack.c.bf16 %v3297, %v3295
    %v3422 = vpack.c.bf16 %v3337, %v3333
    %v3423 = vpack.c.bf16 %v3339, %v3335
    %v3424 = vpack.c.bf16 %v3383, %v3379
    %v3425 = vpack.c.bf16 %v3385, %v3381
    %v3426 = vpack.c.bf16 %v3300, %v3298
    %v3427 = vpack.c.bf16 %v3301, %v3299
    %v3428 = vpack.c.bf16 %v3345, %v3341
    %v3429 = vpack.c.bf16 %v3347, %v3343
    %v3430 = vpack.c.bf16 %v3391, %v3387
    %v3431 = vpack.c.bf16 %v3393, %v3389
    %v3432 = vpack.c.bf16 %v3304, %v3302
    %v3433 = vpack.c.bf16 %v3305, %v3303
    %v3434 = vpack.c.bf16 %v3348, %v3349
    %v3435 = vpack.c.bf16 %v3350, %v3351
    %v3436 = vpack.c.bf16 %v3394, %v3395
    %v3437 = vpack.c.bf16 %v3396, %v3397
    %v3439 = vlaneseq
    %v3440 = vshrl.u32 %v3439, 7
    %v3441 = vsub.s32 0, %v3440
    %v3442 = vrot.slane %v2770, %v3441
    %v3443 = vlaneseq
    %v3444 = vshrl.u32 %v3443, 7
    %v3445 = vsub.s32 1, %v3444
    %v3446 = vrot.slane %v2770, %v3445
    %v3545 = vunpack.c.l.b16 %v2674
    %v3546 = vunpack.c.h.b16 %v2674
    %v3547 = vunpack.c.l.b16 %v2675
    %v3548 = vunpack.c.h.b16 %v2675
    %v3549 = vunpack.c.l.b16 %v2676
    %v3550 = vunpack.c.h.b16 %v2676
    %v3551 = vunpack.c.l.b16 %v2677
    %v3552 = vunpack.c.h.b16 %v2677
    %v3553 = vunpack.c.l.b16 %v2678
    %v3554 = vunpack.c.h.b16 %v2678
    %v3555 = vunpack.c.l.b16 %v2679
    %v3556 = vunpack.c.h.b16 %v2679
    %v3557 = vunpack.c.l.b16 %v2680
    %v3558 = vunpack.c.h.b16 %v2680
    %v3559 = vunpack.c.l.b16 %v2681
    %v3560 = vunpack.c.h.b16 %v2681
    %v3561 = vunpack.c.l.b16 %v2682
    %v3562 = vunpack.c.h.b16 %v2682
    %v3563 = vunpack.c.l.b16 %v2683
    %v3564 = vunpack.c.h.b16 %v2683
    %v3565 = vunpack.c.l.b16 %v2684
    %v3566 = vunpack.c.h.b16 %v2684
    %v3567 = vunpack.c.l.b16 %v2685
    %v3568 = vunpack.c.h.b16 %v2685
    %v3569 = vunpack.c.l.b16 %v2686
    %v3570 = vunpack.c.h.b16 %v2686
    %v3571 = vunpack.c.l.b16 %v2687
    %v3572 = vunpack.c.h.b16 %v2687
    %v3573 = vunpack.c.l.b16 %v2688
    %v3574 = vunpack.c.h.b16 %v2688
    %v3575 = vunpack.c.l.b16 %v2689
    %v3576 = vunpack.c.h.b16 %v2689
    %v3577 = vunpack.c.l.b16 %v2690
    %v3578 = vunpack.c.h.b16 %v2690
    %v3579 = vunpack.c.l.b16 %v2691
    %v3580 = vunpack.c.h.b16 %v2691
    %v3581 = vunpack.c.l.b16 %v2692
    %v3582 = vunpack.c.h.b16 %v2692
    %v3583 = vunpack.c.l.b16 %v2693
    %v3584 = vunpack.c.h.b16 %v2693
    %v3585 = vunpack.c.l.b16 %v2694
    %v3586 = vunpack.c.h.b16 %v2694
    %v3587 = vunpack.c.l.b16 %v2695
    %v3588 = vunpack.c.h.b16 %v2695
    %v3589 = vunpack.c.l.b16 %v2696
    %v3590 = vunpack.c.h.b16 %v2696
    %v3591 = vunpack.c.l.b16 %v2697
    %v3592 = vunpack.c.h.b16 %v2697
    %v3593 = vunpack.c.l.b16 %v2698
    %v3594 = vunpack.c.h.b16 %v2698
    %v3595 = vunpack.c.l.b16 %v2699
    %v3596 = vunpack.c.h.b16 %v2699
    %v3597 = vunpack.c.l.b16 %v2700
    %v3598 = vunpack.c.h.b16 %v2700
    %v3599 = vunpack.c.l.b16 %v2701
    %v3600 = vunpack.c.h.b16 %v2701
    %v3601 = vunpack.c.l.b16 %v2702
    %v3602 = vunpack.c.h.b16 %v2702
    %v3603 = vunpack.c.l.b16 %v2703
    %v3604 = vunpack.c.h.b16 %v2703
    %v3605 = vunpack.c.l.b16 %v2704
    %v3606 = vunpack.c.h.b16 %v2704
    %v3607 = vunpack.c.l.b16 %v2705
    %v3608 = vunpack.c.h.b16 %v2705
    %v3609 = vunpack.c.l.b16 %v2706
    %v3610 = vunpack.c.h.b16 %v2706
    %v3611 = vunpack.c.l.b16 %v2707
    %v3612 = vunpack.c.h.b16 %v2707
    %v3613 = vunpack.c.l.b16 %v2708
    %v3614 = vunpack.c.h.b16 %v2708
    %v3615 = vunpack.c.l.b16 %v2709
    %v3616 = vunpack.c.h.b16 %v2709
    %v3617 = vunpack.c.l.b16 %v2710
    %v3618 = vunpack.c.h.b16 %v2710
    %v3619 = vunpack.c.l.b16 %v2711
    %v3620 = vunpack.c.h.b16 %v2711
    %v3621 = vunpack.c.l.b16 %v2712
    %v3622 = vunpack.c.h.b16 %v2712
    %v3623 = vunpack.c.l.b16 %v2713
    %v3624 = vunpack.c.h.b16 %v2713
    %v3625 = vunpack.c.l.b16 %v2714
    %v3626 = vunpack.c.h.b16 %v2714
    %v3627 = vunpack.c.l.b16 %v2715
    %v3628 = vunpack.c.h.b16 %v2715
    %v3629 = vunpack.c.l.b16 %v2716
    %v3630 = vunpack.c.h.b16 %v2716
    %v3631 = vunpack.c.l.b16 %v2717
    %v3632 = vunpack.c.h.b16 %v2717
    %v3633 = vunpack.c.l.b16 %v2718
    %v3634 = vunpack.c.h.b16 %v2718
    %v3635 = vunpack.c.l.b16 %v2719
    %v3636 = vunpack.c.h.b16 %v2719
    %v3637 = vunpack.c.l.b16 %v2720
    %v3638 = vunpack.c.h.b16 %v2720
    %v3639 = vunpack.c.l.b16 %v2721
    %v3640 = vunpack.c.h.b16 %v2721
    %v3641 = vunpack.c.l.b16 %v2722
    %v3642 = vunpack.c.h.b16 %v2722
    %v3643 = vunpack.c.l.b16 %v2723
    %v3644 = vunpack.c.h.b16 %v2723
    %v3645 = vunpack.c.l.b16 %v2724
    %v3646 = vunpack.c.h.b16 %v2724
    %v3647 = vunpack.c.l.b16 %v2725
    %v3648 = vunpack.c.h.b16 %v2725
    %v3649 = vunpack.c.l.b16 %v2726
    %v3650 = vunpack.c.h.b16 %v2726
    %v3651 = vunpack.c.l.b16 %v2727
    %v3652 = vunpack.c.h.b16 %v2727
    %v3653 = vunpack.c.l.b16 %v2728
    %v3654 = vunpack.c.h.b16 %v2728
    %v3655 = vunpack.c.l.b16 %v2729
    %v3656 = vunpack.c.h.b16 %v2729
    %v3657 = vunpack.c.l.b16 %v2730
    %v3658 = vunpack.c.h.b16 %v2730
    %v3659 = vunpack.c.l.b16 %v2731
    %v3660 = vunpack.c.h.b16 %v2731
    %v3661 = vunpack.c.l.b16 %v2732
    %v3662 = vunpack.c.h.b16 %v2732
    %v3663 = vunpack.c.l.b16 %v2733
    %v3664 = vunpack.c.h.b16 %v2733
    %v3665 = vunpack.c.l.b16 %v2734
    %v3666 = vunpack.c.h.b16 %v2734
    %v3667 = vunpack.c.l.b16 %v2735
    %v3668 = vunpack.c.h.b16 %v2735
    %v3669 = vunpack.c.l.b16 %v2736
    %v3670 = vunpack.c.h.b16 %v2736
    %v3671 = vunpack.c.l.b16 %v2737
    %v3672 = vunpack.c.h.b16 %v2737
    %v3673 = vunpack.c.l.b16 %v2738
    %v3674 = vunpack.c.h.b16 %v2738
    %v3675 = vunpack.c.l.b16 %v2739
    %v3676 = vunpack.c.h.b16 %v2739
    %v3677 = vunpack.c.l.b16 %v2740
    %v3678 = vunpack.c.h.b16 %v2740
    %v3679 = vunpack.c.l.b16 %v2741
    %v3680 = vunpack.c.h.b16 %v2741
    %v3681 = vunpack.c.l.b16 %v2742
    %v3682 = vunpack.c.h.b16 %v2742
    %v3683 = vunpack.c.l.b16 %v2743
    %v3684 = vunpack.c.h.b16 %v2743
    %v3685 = vunpack.c.l.b16 %v2744
    %v3686 = vunpack.c.h.b16 %v2744
    %v3687 = vunpack.c.l.b16 %v2745
    %v3688 = vunpack.c.h.b16 %v2745
    %v3689 = vunpack.c.l.b16 %v2746
    %v3690 = vunpack.c.h.b16 %v2746
    %v3691 = vunpack.c.l.b16 %v2747
    %v3692 = vunpack.c.h.b16 %v2747
    %v3693 = vunpack.c.l.b16 %v2748
    %v3694 = vunpack.c.h.b16 %v2748
    %v3695 = vunpack.c.l.b16 %v2749
    %v3696 = vunpack.c.h.b16 %v2749
    %v3697 = vunpack.c.l.b16 %v2750
    %v3698 = vunpack.c.h.b16 %v2750
    %v3699 = vunpack.c.l.b16 %v2751
    %v3700 = vunpack.c.h.b16 %v2751
    %v3701 = vunpack.c.l.b16 %v2752
    %v3702 = vunpack.c.h.b16 %v2752
    %v3703 = vunpack.c.l.b16 %v2753
    %v3704 = vunpack.c.h.b16 %v2753
    %v3705 = vunpack.c.l.b16 %v2754
    %v3706 = vunpack.c.h.b16 %v2754
    %v3707 = vunpack.c.l.b16 %v2755
    %v3708 = vunpack.c.h.b16 %v2755
    %v3709 = vunpack.c.l.b16 %v2756
    %v3710 = vunpack.c.h.b16 %v2756
    %v3711 = vunpack.c.l.b16 %v2757
    %v3712 = vunpack.c.h.b16 %v2757
    %v3713 = vunpack.c.l.b16 %v2758
    %v3714 = vunpack.c.h.b16 %v2758
    %v3715 = vunpack.c.l.b16 %v2759
    %v3716 = vunpack.c.h.b16 %v2759
    %v3717 = vunpack.c.l.b16 %v2760
    %v3718 = vunpack.c.h.b16 %v2760
    %v3719 = vunpack.c.l.b16 %v2761
    %v3720 = vunpack.c.h.b16 %v2761
    %v3721 = vunpack.c.l.b16 %v2762
    %v3722 = vunpack.c.h.b16 %v2762
    %v3723 = vunpack.c.l.b16 %v2763
    %v3724 = vunpack.c.h.b16 %v2763
    %v3725 = vunpack.c.l.b16 %v2764
    %v3726 = vunpack.c.h.b16 %v2764
    %v3727 = vunpack.c.l.b16 %v2765
    %v3728 = vunpack.c.h.b16 %v2765
    %v3729 = vunpack.c.l.b16 %v2766
    %v3730 = vunpack.c.h.b16 %v2766
    %v3731 = vunpack.c.l.b16 %v2767
    %v3732 = vunpack.c.h.b16 %v2767
    %v3733 = vunpack.c.l.b16 %v2768
    %v3734 = vunpack.c.h.b16 %v2768
    %v3735 = vunpack.c.l.b16 %v2769
    %v3736 = vunpack.c.h.b16 %v2769
    %v3737 = vpack.c.b16 %v3547, %v3545
    %v3738 = vpack.c.b16 %v3548, %v3546
    %v3739 = vpack.c.b16 %v3551, %v3549
    %v3740 = vpack.c.b16 %v3552, %v3550
    %v3741 = vpack.c.b16 %v3555, %v3553
    %v3742 = vpack.c.b16 %v3556, %v3554
    %v3743 = vpack.c.b16 %v3559, %v3557
    %v3744 = vpack.c.b16 %v3560, %v3558
    %v3745 = vpack.c.b16 %v3563, %v3561
    %v3746 = vpack.c.b16 %v3564, %v3562
    %v3747 = vpack.c.b16 %v3567, %v3565
    %v3748 = vpack.c.b16 %v3568, %v3566
    %v3749 = vpack.c.b16 %v3571, %v3569
    %v3750 = vpack.c.b16 %v3572, %v3570
    %v3751 = vpack.c.b16 %v3575, %v3573
    %v3752 = vpack.c.b16 %v3576, %v3574
    %v3753 = vpack.c.b16 %v3579, %v3577
    %v3754 = vpack.c.b16 %v3580, %v3578
    %v3755 = vpack.c.b16 %v3583, %v3581
    %v3756 = vpack.c.b16 %v3584, %v3582
    %v3757 = vpack.c.b16 %v3587, %v3585
    %v3758 = vpack.c.b16 %v3588, %v3586
    %v3759 = vpack.c.b16 %v3591, %v3589
    %v3760 = vpack.c.b16 %v3592, %v3590
    %v3761 = vpack.c.b16 %v3595, %v3593
    %v3762 = vpack.c.b16 %v3596, %v3594
    %v3763 = vpack.c.b16 %v3599, %v3597
    %v3764 = vpack.c.b16 %v3600, %v3598
    %v3765 = vpack.c.b16 %v3603, %v3601
    %v3766 = vpack.c.b16 %v3604, %v3602
    %v3767 = vpack.c.b16 %v3607, %v3605
    %v3768 = vpack.c.b16 %v3608, %v3606
    %v3769 = vpack.c.b16 %v3611, %v3609
    %v3770 = vpack.c.b16 %v3612, %v3610
    %v3771 = vpack.c.b16 %v3615, %v3613
    %v3772 = vpack.c.b16 %v3616, %v3614
    %v3773 = vpack.c.b16 %v3619, %v3617
    %v3774 = vpack.c.b16 %v3620, %v3618
    %v3775 = vpack.c.b16 %v3623, %v3621
    %v3776 = vpack.c.b16 %v3624, %v3622
    %v3777 = vpack.c.b16 %v3627, %v3625
    %v3778 = vpack.c.b16 %v3628, %v3626
    %v3779 = vpack.c.b16 %v3631, %v3629
    %v3780 = vpack.c.b16 %v3632, %v3630
    %v3781 = vpack.c.b16 %v3635, %v3633
    %v3782 = vpack.c.b16 %v3636, %v3634
    %v3783 = vpack.c.b16 %v3639, %v3637
    %v3784 = vpack.c.b16 %v3640, %v3638
    %v3785 = vpack.c.b16 %v3643, %v3641
    %v3786 = vpack.c.b16 %v3644, %v3642
    %v3787 = vpack.c.b16 %v3647, %v3645
    %v3788 = vpack.c.b16 %v3648, %v3646
    %v3789 = vpack.c.b16 %v3651, %v3649
    %v3790 = vpack.c.b16 %v3652, %v3650
    %v3791 = vpack.c.b16 %v3655, %v3653
    %v3792 = vpack.c.b16 %v3656, %v3654
    %v3793 = vpack.c.b16 %v3659, %v3657
    %v3794 = vpack.c.b16 %v3660, %v3658
    %v3795 = vpack.c.b16 %v3663, %v3661
    %v3796 = vpack.c.b16 %v3664, %v3662
    %v3797 = vpack.c.b16 %v3667, %v3665
    %v3798 = vpack.c.b16 %v3668, %v3666
    %v3799 = vpack.c.b16 %v3671, %v3669
    %v3800 = vpack.c.b16 %v3672, %v3670
    %v3801 = vpack.c.b16 %v3675, %v3673
    %v3802 = vpack.c.b16 %v3676, %v3674
    %v3803 = vpack.c.b16 %v3679, %v3677
    %v3804 = vpack.c.b16 %v3680, %v3678
    %v3805 = vpack.c.b16 %v3683, %v3681
    %v3806 = vpack.c.b16 %v3684, %v3682
    %v3807 = vpack.c.b16 %v3687, %v3685
    %v3808 = vpack.c.b16 %v3688, %v3686
    %v3809 = vpack.c.b16 %v3691, %v3689
    %v3810 = vpack.c.b16 %v3692, %v3690
    %v3811 = vpack.c.b16 %v3695, %v3693
    %v3812 = vpack.c.b16 %v3696, %v3694
    %v3813 = vpack.c.b16 %v3699, %v3697
    %v3814 = vpack.c.b16 %v3700, %v3698
    %v3815 = vpack.c.b16 %v3703, %v3701
    %v3816 = vpack.c.b16 %v3704, %v3702
    %v3817 = vpack.c.b16 %v3707, %v3705
    %v3818 = vpack.c.b16 %v3708, %v3706
    %v3819 = vpack.c.b16 %v3711, %v3709
    %v3820 = vpack.c.b16 %v3712, %v3710
    %v3821 = vpack.c.b16 %v3715, %v3713
    %v3822 = vpack.c.b16 %v3716, %v3714
    %v3823 = vpack.c.b16 %v3719, %v3717
    %v3824 = vpack.c.b16 %v3720, %v3718
    %v3825 = vpack.c.b16 %v3723, %v3721
    %v3826 = vpack.c.b16 %v3724, %v3722
    %v3827 = vpack.c.b16 %v3727, %v3725
    %v3828 = vpack.c.b16 %v3728, %v3726
    %v3829 = vpack.c.b16 %v3731, %v3729
    %v3830 = vpack.c.b16 %v3732, %v3730
    %v3831 = vpack.c.b16 %v3735, %v3733
    %v3832 = vpack.c.b16 %v3736, %v3734
    %3929 = vmatprep.subr.bf16.mxu0 %v3752
    %3930 = vmatpush1.bf16.msra.mxu0 %v3751
    %3931 = vmatprep.subr.bf16.mxu0 %v3750
    %3932 = vmatpush1.bf16.msra.mxu0 %v3749
    %3933 = vmatprep.subr.bf16.mxu0 %v3748
    %3934 = vmatpush1.bf16.msra.mxu0 %v3747
    %3935 = vmatprep.subr.bf16.mxu0 %v3746
    %3936 = vmatpush1.bf16.msra.mxu0 %v3745
    %3937 = vmatprep.subr.bf16.mxu0 %v3744
    %3938 = vmatpush1.bf16.msra.mxu0 %v3743
    %3939 = vmatprep.subr.bf16.mxu0 %v3742
    %3940 = vmatpush1.bf16.msra.mxu0 %v3741
    %3941 = vmatprep.subr.bf16.mxu0 %v3740
    %3942 = vmatpush1.bf16.msra.mxu0 %v3739
    %3943 = vmatprep.subr.bf16.mxu0 %v3738
    %3944 = vmatpush1.bf16.msra.mxu0 %v3737
    %3945 = vmatprep.subr.bf16.mxu0 %v3768
    %3946 = vmatpush2.bf16.msra.mxu0 %v3767
    %3947 = vmatprep.subr.bf16.mxu0 %v3766
    %3948 = vmatpush2.bf16.msra.mxu0 %v3765
    %3949 = vmatprep.subr.bf16.mxu0 %v3764
    %3950 = vmatpush2.bf16.msra.mxu0 %v3763
    %3951 = vmatprep.subr.bf16.mxu0 %v3762
    %3952 = vmatpush2.bf16.msra.mxu0 %v3761
    %3953 = vmatprep.subr.bf16.mxu0 %v3760
    %3954 = vmatpush2.bf16.msra.mxu0 %v3759
    %3955 = vmatprep.subr.bf16.mxu0 %v3758
    %3956 = vmatpush2.bf16.msra.mxu0 %v3757
    %3957 = vmatprep.subr.bf16.mxu0 %v3756
    %3958 = vmatpush2.bf16.msra.mxu0 %v3755
    %3959 = vmatprep.subr.bf16.mxu0 %v3754
    %3960 = vmatpush2.bf16.msra.mxu0 %v3753
    %3961 = vmatprep.mubr.bf16.mxu0 %v3415
    %3962 = vmatmul.mubr.bf16.gmra.mxu0 %v3414
    %v3963 = vpop.f32.mrf.mxu0
    %v3964 = vadd.f32 %v3442, %v3963
    %v3965 = vpop.f32.mrf.mxu0
    %v3966 = vadd.f32 %v3446, %v3965
    %v3967 = vpop.f32.mrf.mxu0
    %v3968 = vadd.f32 %v3442, %v3967
    %v3969 = vpop.f32.mrf.mxu0
    %v3970 = vadd.f32 %v3446, %v3969
    %3971 = vmatprep.mubr.bf16.mxu0 %v3421
    %3972 = vmatmul.mubr.bf16.gmra.mxu0 %v3420
    %v3973 = vpop.f32.mrf.mxu0
    %v3974 = vadd.f32 %v3442, %v3973
    %v3975 = vpop.f32.mrf.mxu0
    %v3976 = vadd.f32 %v3446, %v3975
    %v3977 = vpop.f32.mrf.mxu0
    %v3978 = vadd.f32 %v3442, %v3977
    %v3979 = vpop.f32.mrf.mxu0
    %v3980 = vadd.f32 %v3446, %v3979
    %3981 = vmatprep.mubr.bf16.mxu0 %v3427
    %3982 = vmatmul.mubr.bf16.gmra.mxu0 %v3426
    %v3983 = vpop.f32.mrf.mxu0
    %v3984 = vadd.f32 %v3442, %v3983
    %v3985 = vpop.f32.mrf.mxu0
    %v3986 = vadd.f32 %v3446, %v3985
    %v3987 = vpop.f32.mrf.mxu0
    %v3988 = vadd.f32 %v3442, %v3987
    %v3989 = vpop.f32.mrf.mxu0
    %v3990 = vadd.f32 %v3446, %v3989
    %3991 = vmatprep.mubr.bf16.mxu0 %v3433
    %3992 = vmatmul.mubr.bf16.gmra.mxu0 %v3432
    %v3993 = vpop.f32.mrf.mxu0
    %v3994 = vadd.f32 %v3442, %v3993
    %v3995 = vpop.f32.mrf.mxu0
    %v3996 = vadd.f32 %v3446, %v3995
    %v3997 = vpop.f32.mrf.mxu0
    %v3998 = vadd.f32 %v3442, %v3997
    %v3999 = vpop.f32.mrf.mxu0
    %v4000 = vadd.f32 %v3446, %v3999
    %4001 = vdwg.mxu0
    %4002 = vmatprep.subr.bf16.mxu0 %v3784
    %4003 = vmatpush1.bf16.msra.mxu0 %v3783
    %4004 = vmatprep.subr.bf16.mxu0 %v3782
    %4005 = vmatpush1.bf16.msra.mxu0 %v3781
    %4006 = vmatprep.subr.bf16.mxu0 %v3780
    %4007 = vmatpush1.bf16.msra.mxu0 %v3779
    %4008 = vmatprep.subr.bf16.mxu0 %v3778
    %4009 = vmatpush1.bf16.msra.mxu0 %v3777
    %4010 = vmatprep.subr.bf16.mxu0 %v3776
    %4011 = vmatpush1.bf16.msra.mxu0 %v3775
    %4012 = vmatprep.subr.bf16.mxu0 %v3774
    %4013 = vmatpush1.bf16.msra.mxu0 %v3773
    %4014 = vmatprep.subr.bf16.mxu0 %v3772
    %4015 = vmatpush1.bf16.msra.mxu0 %v3771
    %4016 = vmatprep.subr.bf16.mxu0 %v3770
    %4017 = vmatpush1.bf16.msra.mxu0 %v3769
    %4018 = vmatprep.subr.bf16.mxu0 %v3800
    %4019 = vmatpush2.bf16.msra.mxu0 %v3799
    %4020 = vmatprep.subr.bf16.mxu0 %v3798
    %4021 = vmatpush2.bf16.msra.mxu0 %v3797
    %4022 = vmatprep.subr.bf16.mxu0 %v3796
    %4023 = vmatpush2.bf16.msra.mxu0 %v3795
    %4024 = vmatprep.subr.bf16.mxu0 %v3794
    %4025 = vmatpush2.bf16.msra.mxu0 %v3793
    %4026 = vmatprep.subr.bf16.mxu0 %v3792
    %4027 = vmatpush2.bf16.msra.mxu0 %v3791
    %4028 = vmatprep.subr.bf16.mxu0 %v3790
    %4029 = vmatpush2.bf16.msra.mxu0 %v3789
    %4030 = vmatprep.subr.bf16.mxu0 %v3788
    %4031 = vmatpush2.bf16.msra.mxu0 %v3787
    %4032 = vmatprep.subr.bf16.mxu0 %v3786
    %4033 = vmatpush2.bf16.msra.mxu0 %v3785
    %4034 = vmatprep.mubr.bf16.mxu0 %v3417
    %4035 = vmatmul.mubr.bf16.gmra.mxu0 %v3416
    %v4036 = vpop.f32.mrf.mxu0
    %v4037 = vadd.f32 %v3964, %v4036
    %v4038 = vpop.f32.mrf.mxu0
    %v4039 = vadd.f32 %v3966, %v4038
    %v4040 = vpop.f32.mrf.mxu0
    %v4041 = vadd.f32 %v3968, %v4040
    %v4042 = vpop.f32.mrf.mxu0
    %v4043 = vadd.f32 %v3970, %v4042
    %4044 = vmatprep.mubr.bf16.mxu0 %v3423
    %4045 = vmatmul.mubr.bf16.gmra.mxu0 %v3422
    %v4046 = vpop.f32.mrf.mxu0
    %v4047 = vadd.f32 %v3974, %v4046
    %v4048 = vpop.f32.mrf.mxu0
    %v4049 = vadd.f32 %v3976, %v4048
    %v4050 = vpop.f32.mrf.mxu0
    %v4051 = vadd.f32 %v3978, %v4050
    %v4052 = vpop.f32.mrf.mxu0
    %v4053 = vadd.f32 %v3980, %v4052
    %4054 = vmatprep.mubr.bf16.mxu0 %v3429
    %4055 = vmatmul.mubr.bf16.gmra.mxu0 %v3428
    %v4056 = vpop.f32.mrf.mxu0
    %v4057 = vadd.f32 %v3984, %v4056
    %v4058 = vpop.f32.mrf.mxu0
    %v4059 = vadd.f32 %v3986, %v4058
    %v4060 = vpop.f32.mrf.mxu0
    %v4061 = vadd.f32 %v3988, %v4060
    %v4062 = vpop.f32.mrf.mxu0
    %v4063 = vadd.f32 %v3990, %v4062
    %4064 = vmatprep.mubr.bf16.mxu0 %v3435
    %4065 = vmatmul.mubr.bf16.gmra.mxu0 %v3434
    %v4066 = vpop.f32.mrf.mxu0
    %v4067 = vadd.f32 %v3994, %v4066
    %v4068 = vpop.f32.mrf.mxu0
    %v4069 = vadd.f32 %v3996, %v4068
    %v4070 = vpop.f32.mrf.mxu0
    %v4071 = vadd.f32 %v3998, %v4070
    %v4072 = vpop.f32.mrf.mxu0
    %v4073 = vadd.f32 %v4000, %v4072
    %4074 = vdwg.mxu0
    %4075 = vmatprep.subr.bf16.mxu0 %v3816
    %4076 = vmatpush1.bf16.msra.mxu0 %v3815
    %4077 = vmatprep.subr.bf16.mxu0 %v3814
    %4078 = vmatpush1.bf16.msra.mxu0 %v3813
    %4079 = vmatprep.subr.bf16.mxu0 %v3812
    %4080 = vmatpush1.bf16.msra.mxu0 %v3811
    %4081 = vmatprep.subr.bf16.mxu0 %v3810
    %4082 = vmatpush1.bf16.msra.mxu0 %v3809
    %4083 = vmatprep.subr.bf16.mxu0 %v3808
    %4084 = vmatpush1.bf16.msra.mxu0 %v3807
    %4085 = vmatprep.subr.bf16.mxu0 %v3806
    %4086 = vmatpush1.bf16.msra.mxu0 %v3805
    %4087 = vmatprep.subr.bf16.mxu0 %v3804
    %4088 = vmatpush1.bf16.msra.mxu0 %v3803
    %4089 = vmatprep.subr.bf16.mxu0 %v3802
    %4090 = vmatpush1.bf16.msra.mxu0 %v3801
    %4091 = vmatprep.subr.bf16.mxu0 %v3832
    %4092 = vmatpush2.bf16.msra.mxu0 %v3831
    %4093 = vmatprep.subr.bf16.mxu0 %v3830
    %4094 = vmatpush2.bf16.msra.mxu0 %v3829
    %4095 = vmatprep.subr.bf16.mxu0 %v3828
    %4096 = vmatpush2.bf16.msra.mxu0 %v3827
    %4097 = vmatprep.subr.bf16.mxu0 %v3826
    %4098 = vmatpush2.bf16.msra.mxu0 %v3825
    %4099 = vmatprep.subr.bf16.mxu0 %v3824
    %4100 = vmatpush2.bf16.msra.mxu0 %v3823
    %4101 = vmatprep.subr.bf16.mxu0 %v3822
    %4102 = vmatpush2.bf16.msra.mxu0 %v3821
    %4103 = vmatprep.subr.bf16.mxu0 %v3820
    %4104 = vmatpush2.bf16.msra.mxu0 %v3819
    %4105 = vmatprep.subr.bf16.mxu0 %v3818
    %4106 = vmatpush2.bf16.msra.mxu0 %v3817
    %4107 = vmatprep.mubr.bf16.mxu0 %v3419
    %4108 = vmatmul.mubr.bf16.gmra.mxu0 %v3418
    %v4109 = vpop.f32.mrf.mxu0
    %v4110 = vadd.f32 %v4037, %v4109
    %v4111 = vpop.f32.mrf.mxu0
    %v4112 = vadd.f32 %v4039, %v4111
    %v4113 = vpop.f32.mrf.mxu0
    %v4114 = vadd.f32 %v4041, %v4113
    %v4115 = vpop.f32.mrf.mxu0
    %v4116 = vadd.f32 %v4043, %v4115
    %4117 = vmatprep.mubr.bf16.mxu0 %v3425
    %4118 = vmatmul.mubr.bf16.gmra.mxu0 %v3424
    %v4119 = vpop.f32.mrf.mxu0
    %v4120 = vadd.f32 %v4047, %v4119
    %v4121 = vpop.f32.mrf.mxu0
    %v4122 = vadd.f32 %v4049, %v4121
    %v4123 = vpop.f32.mrf.mxu0
    %v4124 = vadd.f32 %v4051, %v4123
    %v4125 = vpop.f32.mrf.mxu0
    %v4126 = vadd.f32 %v4053, %v4125
    %4127 = vmatprep.mubr.bf16.mxu0 %v3431
    %4128 = vmatmul.mubr.bf16.gmra.mxu0 %v3430
    %v4129 = vpop.f32.mrf.mxu0
    %v4130 = vadd.f32 %v4057, %v4129
    %v4131 = vpop.f32.mrf.mxu0
    %v4132 = vadd.f32 %v4059, %v4131
    %v4133 = vpop.f32.mrf.mxu0
    %v4134 = vadd.f32 %v4061, %v4133
    %v4135 = vpop.f32.mrf.mxu0
    %v4136 = vadd.f32 %v4063, %v4135
    %4137 = vmatprep.mubr.bf16.mxu0 %v3437
    %4138 = vmatmul.mubr.bf16.gmra.mxu0 %v3436
    %v4139 = vpop.f32.mrf.mxu0
    %v4140 = vadd.f32 %v4067, %v4139
    %v4141 = vpop.f32.mrf.mxu0
    %v4142 = vadd.f32 %v4069, %v4141
    %v4143 = vpop.f32.mrf.mxu0
    %v4144 = vadd.f32 %v4071, %v4143
    %v4145 = vpop.f32.mrf.mxu0
    %v4146 = vadd.f32 %v4073, %v4145
    %4147 = vdwg.mxu0
    %v4148 = vmax.f32 %v4110, 0.0
    %v4149 = vmax.f32 %v4112, 0.0
    %v4150 = vmax.f32 %v4114, 0.0
    %v4151 = vmax.f32 %v4116, 0.0
    %v4152 = vmax.f32 %v4120, 0.0
    %v4153 = vmax.f32 %v4122, 0.0
    %v4154 = vmax.f32 %v4124, 0.0
    %v4155 = vmax.f32 %v4126, 0.0
    %v4156 = vmax.f32 %v4130, 0.0
    %v4157 = vmax.f32 %v4132, 0.0
    %v4158 = vmax.f32 %v4134, 0.0
    %v4159 = vmax.f32 %v4136, 0.0
    %v4160 = vmax.f32 %v4140, 0.0
    %v4161 = vmax.f32 %v4142, 0.0
    %v4162 = vmax.f32 %v4144, 0.0
    %v4163 = vmax.f32 %v4146, 0.0
    %v4176 = vrot.slane %v4148, 1
    %v4177 = vrot.slane %v4150, 1
    %v4178 = vsel %vm531, %v4176, %v4177
    %v4179 = vrot.slane %v4149, 1
    %v4180 = vrot.slane %v4151, 1
    %v4181 = vsel %vm531, %v4179, %v4180
    %v4182 = vrot.slane %v4152, 1
    %v4183 = vsel %vm531, %v4177, %v4182
    %v4184 = vrot.slane %v4153, 1
    %v4185 = vsel %vm531, %v4180, %v4184
    %v4186 = vrot.slane %v4154, 1
    %v4187 = vsel %vm531, %v4182, %v4186
    %v4188 = vrot.slane %v4155, 1
    %v4189 = vsel %vm531, %v4184, %v4188
    %v4190 = vrot.slane %v4156, 1
    %v4191 = vsel %vm531, %v4186, %v4190
    %v4192 = vrot.slane %v4157, 1
    %v4193 = vsel %vm531, %v4188, %v4192
    %v4194 = vrot.slane %v4158, 1
    %v4195 = vsel %vm531, %v4190, %v4194
    %v4196 = vrot.slane %v4159, 1
    %v4197 = vsel %vm531, %v4192, %v4196
    %v4210 = vrot.slane %v4148, 2
    %v4211 = vrot.slane %v4150, 2
    %v4212 = vsel %vm644, %v4210, %v4211
    %v4213 = vrot.slane %v4149, 2
    %v4214 = vrot.slane %v4151, 2
    %v4215 = vsel %vm644, %v4213, %v4214
    %v4216 = vrot.slane %v4152, 2
    %v4217 = vsel %vm644, %v4211, %v4216
    %v4218 = vrot.slane %v4153, 2
    %v4219 = vsel %vm644, %v4214, %v4218
    %v4220 = vrot.slane %v4154, 2
    %v4221 = vsel %vm644, %v4216, %v4220
    %v4222 = vrot.slane %v4155, 2
    %v4223 = vsel %vm644, %v4218, %v4222
    %v4224 = vrot.slane %v4156, 2
    %v4225 = vsel %vm644, %v4220, %v4224
    %v4226 = vrot.slane %v4157, 2
    %v4227 = vsel %vm644, %v4222, %v4226
    %v4228 = vrot.slane %v4158, 2
    %v4229 = vsel %vm644, %v4224, %v4228
    %v4230 = vrot.slane %v4159, 2
    %v4231 = vsel %vm644, %v4226, %v4230
    %v4248 = vrot.slane %v4160, 1
    %v4249 = vsel %vm531, %v4194, %v4248
    %v4250 = vrot.slane %v4161, 1
    %v4251 = vsel %vm531, %v4196, %v4250
    %v4252 = vrot.slane %v4162, 1
    %v4253 = vsel %vm531, %v4248, %v4252
    %v4254 = vrot.slane %v4163, 1
    %v4255 = vsel %vm531, %v4250, %v4254
    %v4262 = vrot.slane %v4160, 2
    %v4263 = vsel %vm644, %v4228, %v4262
    %v4264 = vrot.slane %v4161, 2
    %v4265 = vsel %vm644, %v4230, %v4264
    %v4266 = vrot.slane %v4162, 2
    %v4267 = vsel %vm644, %v4262, %v4266
    %v4268 = vrot.slane %v4163, 2
    %v4269 = vsel %vm644, %v4264, %v4268
    %v4276 = vpack.c.bf16 %v4150, %v4148
    %v4277 = vpack.c.bf16 %v4151, %v4149
    %v4278 = vpack.c.bf16 %v4183, %v4178
    %v4279 = vpack.c.bf16 %v4185, %v4181
    %v4280 = vpack.c.bf16 %v4217, %v4212
    %v4281 = vpack.c.bf16 %v4219, %v4215
    %v4282 = vpack.c.bf16 %v4154, %v4152
    %v4283 = vpack.c.bf16 %v4155, %v4153
    %v4284 = vpack.c.bf16 %v4191, %v4187
    %v4285 = vpack.c.bf16 %v4193, %v4189
    %v4286 = vpack.c.bf16 %v4225, %v4221
    %v4287 = vpack.c.bf16 %v4227, %v4223
    %v4288 = vpack.c.bf16 %v4158, %v4156
    %v4289 = vpack.c.bf16 %v4159, %v4157
    %v4290 = vpack.c.bf16 %v4249, %v4195
    %v4291 = vpack.c.bf16 %v4251, %v4197
    %v4292 = vpack.c.bf16 %v4263, %v4229
    %v4293 = vpack.c.bf16 %v4265, %v4231
    %v4294 = vpack.c.bf16 %v4194, %v4195
    %v4295 = vpack.c.bf16 %v4196, %v4197
    %v4296 = vpack.c.bf16 %v4228, %v4229
    %v4297 = vpack.c.bf16 %v4230, %v4231
    %v4298 = vpack.c.bf16 %v4162, %v4160
    %v4299 = vpack.c.bf16 %v4163, %v4161
    %v4300 = vpack.c.bf16 %v4252, %v4253
    %v4301 = vpack.c.bf16 %v4254, %v4255
    %v4302 = vpack.c.bf16 %v4266, %v4267
    %v4303 = vpack.c.bf16 %v4268, %v4269
    %v4305 = vlaneseq
    %v4306 = vshrl.u32 %v4305, 7
    %v4307 = vsub.s32 0, %v4306
    %v4308 = vrot.slane %v2963, %v4307
    %v4502 = vunpack.c.l.b16 %v2771
    %v4503 = vunpack.c.l.b16 %v2772
    %v4504 = vunpack.c.l.b16 %v2773
    %v4505 = vunpack.c.l.b16 %v2774
    %v4506 = vunpack.c.l.b16 %v2775
    %v4507 = vunpack.c.l.b16 %v2776
    %v4508 = vunpack.c.l.b16 %v2777
    %v4509 = vunpack.c.l.b16 %v2778
    %v4510 = vunpack.c.l.b16 %v2779
    %v4511 = vunpack.c.l.b16 %v2780
    %v4512 = vunpack.c.l.b16 %v2781
    %v4513 = vunpack.c.l.b16 %v2782
    %v4514 = vunpack.c.l.b16 %v2783
    %v4515 = vunpack.c.l.b16 %v2784
    %v4516 = vunpack.c.l.b16 %v2785
    %v4517 = vunpack.c.l.b16 %v2786
    %v4518 = vunpack.c.l.b16 %v2787
    %v4519 = vunpack.c.l.b16 %v2788
    %v4520 = vunpack.c.l.b16 %v2789
    %v4521 = vunpack.c.l.b16 %v2790
    %v4522 = vunpack.c.l.b16 %v2791
    %v4523 = vunpack.c.l.b16 %v2792
    %v4524 = vunpack.c.l.b16 %v2793
    %v4525 = vunpack.c.l.b16 %v2794
    %v4526 = vunpack.c.l.b16 %v2795
    %v4527 = vunpack.c.l.b16 %v2796
    %v4528 = vunpack.c.l.b16 %v2797
    %v4529 = vunpack.c.l.b16 %v2798
    %v4530 = vunpack.c.l.b16 %v2799
    %v4531 = vunpack.c.l.b16 %v2800
    %v4532 = vunpack.c.l.b16 %v2801
    %v4533 = vunpack.c.l.b16 %v2802
    %v4534 = vunpack.c.l.b16 %v2803
    %v4535 = vunpack.c.l.b16 %v2804
    %v4536 = vunpack.c.l.b16 %v2805
    %v4537 = vunpack.c.l.b16 %v2806
    %v4538 = vunpack.c.l.b16 %v2807
    %v4539 = vunpack.c.l.b16 %v2808
    %v4540 = vunpack.c.l.b16 %v2809
    %v4541 = vunpack.c.l.b16 %v2810
    %v4542 = vunpack.c.l.b16 %v2811
    %v4543 = vunpack.c.l.b16 %v2812
    %v4544 = vunpack.c.l.b16 %v2813
    %v4545 = vunpack.c.l.b16 %v2814
    %v4546 = vunpack.c.l.b16 %v2815
    %v4547 = vunpack.c.l.b16 %v2816
    %v4548 = vunpack.c.l.b16 %v2817
    %v4549 = vunpack.c.l.b16 %v2818
    %v4550 = vunpack.c.l.b16 %v2819
    %v4551 = vunpack.c.l.b16 %v2820
    %v4552 = vunpack.c.l.b16 %v2821
    %v4553 = vunpack.c.l.b16 %v2822
    %v4554 = vunpack.c.l.b16 %v2823
    %v4555 = vunpack.c.l.b16 %v2824
    %v4556 = vunpack.c.l.b16 %v2825
    %v4557 = vunpack.c.l.b16 %v2826
    %v4558 = vunpack.c.l.b16 %v2827
    %v4559 = vunpack.c.l.b16 %v2828
    %v4560 = vunpack.c.l.b16 %v2829
    %v4561 = vunpack.c.l.b16 %v2830
    %v4562 = vunpack.c.l.b16 %v2831
    %v4563 = vunpack.c.l.b16 %v2832
    %v4564 = vunpack.c.l.b16 %v2833
    %v4565 = vunpack.c.l.b16 %v2834
    %v4566 = vunpack.c.l.b16 %v2835
    %v4567 = vunpack.c.l.b16 %v2836
    %v4568 = vunpack.c.l.b16 %v2837
    %v4569 = vunpack.c.l.b16 %v2838
    %v4570 = vunpack.c.l.b16 %v2839
    %v4571 = vunpack.c.l.b16 %v2840
    %v4572 = vunpack.c.l.b16 %v2841
    %v4573 = vunpack.c.l.b16 %v2842
    %v4574 = vunpack.c.l.b16 %v2843
    %v4575 = vunpack.c.l.b16 %v2844
    %v4576 = vunpack.c.l.b16 %v2845
    %v4577 = vunpack.c.l.b16 %v2846
    %v4578 = vunpack.c.l.b16 %v2847
    %v4579 = vunpack.c.l.b16 %v2848
    %v4580 = vunpack.c.l.b16 %v2849
    %v4581 = vunpack.c.l.b16 %v2850
    %v4582 = vunpack.c.l.b16 %v2851
    %v4583 = vunpack.c.l.b16 %v2852
    %v4584 = vunpack.c.l.b16 %v2853
    %v4585 = vunpack.c.l.b16 %v2854
    %v4586 = vunpack.c.l.b16 %v2855
    %v4587 = vunpack.c.l.b16 %v2856
    %v4588 = vunpack.c.l.b16 %v2857
    %v4589 = vunpack.c.l.b16 %v2858
    %v4590 = vunpack.c.l.b16 %v2859
    %v4591 = vunpack.c.l.b16 %v2860
    %v4592 = vunpack.c.l.b16 %v2861
    %v4593 = vunpack.c.l.b16 %v2862
    %v4594 = vunpack.c.l.b16 %v2863
    %v4595 = vunpack.c.l.b16 %v2864
    %v4596 = vunpack.c.l.b16 %v2865
    %v4597 = vunpack.c.l.b16 %v2866
    %v4598 = vunpack.c.l.b16 %v2867
    %v4599 = vunpack.c.l.b16 %v2868
    %v4600 = vunpack.c.l.b16 %v2869
    %v4601 = vunpack.c.l.b16 %v2870
    %v4602 = vunpack.c.l.b16 %v2871
    %v4603 = vunpack.c.l.b16 %v2872
    %v4604 = vunpack.c.l.b16 %v2873
    %v4605 = vunpack.c.l.b16 %v2874
    %v4606 = vunpack.c.l.b16 %v2875
    %v4607 = vunpack.c.l.b16 %v2876
    %v4608 = vunpack.c.l.b16 %v2877
    %v4609 = vunpack.c.l.b16 %v2878
    %v4610 = vunpack.c.l.b16 %v2879
    %v4611 = vunpack.c.l.b16 %v2880
    %v4612 = vunpack.c.l.b16 %v2881
    %v4613 = vunpack.c.l.b16 %v2882
    %v4614 = vunpack.c.l.b16 %v2883
    %v4615 = vunpack.c.l.b16 %v2884
    %v4616 = vunpack.c.l.b16 %v2885
    %v4617 = vunpack.c.l.b16 %v2886
    %v4618 = vunpack.c.l.b16 %v2887
    %v4619 = vunpack.c.l.b16 %v2888
    %v4620 = vunpack.c.l.b16 %v2889
    %v4621 = vunpack.c.l.b16 %v2890
    %v4622 = vunpack.c.l.b16 %v2891
    %v4623 = vunpack.c.l.b16 %v2892
    %v4624 = vunpack.c.l.b16 %v2893
    %v4625 = vunpack.c.l.b16 %v2894
    %v4626 = vunpack.c.l.b16 %v2895
    %v4627 = vunpack.c.l.b16 %v2896
    %v4628 = vunpack.c.l.b16 %v2897
    %v4629 = vunpack.c.l.b16 %v2898
    %v4630 = vunpack.c.l.b16 %v2899
    %v4631 = vunpack.c.l.b16 %v2900
    %v4632 = vunpack.c.l.b16 %v2901
    %v4633 = vunpack.c.l.b16 %v2902
    %v4634 = vunpack.c.l.b16 %v2903
    %v4635 = vunpack.c.l.b16 %v2904
    %v4636 = vunpack.c.l.b16 %v2905
    %v4637 = vunpack.c.l.b16 %v2906
    %v4638 = vunpack.c.l.b16 %v2907
    %v4639 = vunpack.c.l.b16 %v2908
    %v4640 = vunpack.c.l.b16 %v2909
    %v4641 = vunpack.c.l.b16 %v2910
    %v4642 = vunpack.c.l.b16 %v2911
    %v4643 = vunpack.c.l.b16 %v2912
    %v4644 = vunpack.c.l.b16 %v2913
    %v4645 = vunpack.c.l.b16 %v2914
    %v4646 = vunpack.c.l.b16 %v2915
    %v4647 = vunpack.c.l.b16 %v2916
    %v4648 = vunpack.c.l.b16 %v2917
    %v4649 = vunpack.c.l.b16 %v2918
    %v4650 = vunpack.c.l.b16 %v2919
    %v4651 = vunpack.c.l.b16 %v2920
    %v4652 = vunpack.c.l.b16 %v2921
    %v4653 = vunpack.c.l.b16 %v2922
    %v4654 = vunpack.c.l.b16 %v2923
    %v4655 = vunpack.c.l.b16 %v2924
    %v4656 = vunpack.c.l.b16 %v2925
    %v4657 = vunpack.c.l.b16 %v2926
    %v4658 = vunpack.c.l.b16 %v2927
    %v4659 = vunpack.c.l.b16 %v2928
    %v4660 = vunpack.c.l.b16 %v2929
    %v4661 = vunpack.c.l.b16 %v2930
    %v4662 = vunpack.c.l.b16 %v2931
    %v4663 = vunpack.c.l.b16 %v2932
    %v4664 = vunpack.c.l.b16 %v2933
    %v4665 = vunpack.c.l.b16 %v2934
    %v4666 = vunpack.c.l.b16 %v2935
    %v4667 = vunpack.c.l.b16 %v2936
    %v4668 = vunpack.c.l.b16 %v2937
    %v4669 = vunpack.c.l.b16 %v2938
    %v4670 = vunpack.c.l.b16 %v2939
    %v4671 = vunpack.c.l.b16 %v2940
    %v4672 = vunpack.c.l.b16 %v2941
    %v4673 = vunpack.c.l.b16 %v2942
    %v4674 = vunpack.c.l.b16 %v2943
    %v4675 = vunpack.c.l.b16 %v2944
    %v4676 = vunpack.c.l.b16 %v2945
    %v4677 = vunpack.c.l.b16 %v2946
    %v4678 = vunpack.c.l.b16 %v2947
    %v4679 = vunpack.c.l.b16 %v2948
    %v4680 = vunpack.c.l.b16 %v2949
    %v4681 = vunpack.c.l.b16 %v2950
    %v4682 = vunpack.c.l.b16 %v2951
    %v4683 = vunpack.c.l.b16 %v2952
    %v4684 = vunpack.c.l.b16 %v2953
    %v4685 = vunpack.c.l.b16 %v2954
    %v4686 = vunpack.c.l.b16 %v2955
    %v4687 = vunpack.c.l.b16 %v2956
    %v4688 = vunpack.c.l.b16 %v2957
    %v4689 = vunpack.c.l.b16 %v2958
    %v4690 = vunpack.c.l.b16 %v2959
    %v4691 = vunpack.c.l.b16 %v2960
    %v4692 = vunpack.c.l.b16 %v2961
    %v4693 = vunpack.c.l.b16 %v2962
    %v4694 = vpack.c.b16 %v4503, %v4502
    %v4695 = vpack.c.b16 %v4505, %v4504
    %v4696 = vpack.c.b16 %v4507, %v4506
    %v4697 = vpack.c.b16 %v4509, %v4508
    %v4698 = vpack.c.b16 %v4511, %v4510
    %v4699 = vpack.c.b16 %v4513, %v4512
    %v4700 = vpack.c.b16 %v4515, %v4514
    %v4701 = vpack.c.b16 %v4517, %v4516
    %v4702 = vpack.c.b16 %v4519, %v4518
    %v4703 = vpack.c.b16 %v4521, %v4520
    %v4704 = vpack.c.b16 %v4523, %v4522
    %v4705 = vpack.c.b16 %v4525, %v4524
    %v4706 = vpack.c.b16 %v4527, %v4526
    %v4707 = vpack.c.b16 %v4529, %v4528
    %v4708 = vpack.c.b16 %v4531, %v4530
    %v4709 = vpack.c.b16 %v4533, %v4532
    %v4710 = vpack.c.b16 %v4535, %v4534
    %v4711 = vpack.c.b16 %v4537, %v4536
    %v4712 = vpack.c.b16 %v4539, %v4538
    %v4713 = vpack.c.b16 %v4541, %v4540
    %v4714 = vpack.c.b16 %v4543, %v4542
    %v4715 = vpack.c.b16 %v4545, %v4544
    %v4716 = vpack.c.b16 %v4547, %v4546
    %v4717 = vpack.c.b16 %v4549, %v4548
    %v4718 = vpack.c.b16 %v4551, %v4550
    %v4719 = vpack.c.b16 %v4553, %v4552
    %v4720 = vpack.c.b16 %v4555, %v4554
    %v4721 = vpack.c.b16 %v4557, %v4556
    %v4722 = vpack.c.b16 %v4559, %v4558
    %v4723 = vpack.c.b16 %v4561, %v4560
    %v4724 = vpack.c.b16 %v4563, %v4562
    %v4725 = vpack.c.b16 %v4565, %v4564
    %v4726 = vpack.c.b16 %v4567, %v4566
    %v4727 = vpack.c.b16 %v4569, %v4568
    %v4728 = vpack.c.b16 %v4571, %v4570
    %v4729 = vpack.c.b16 %v4573, %v4572
    %v4730 = vpack.c.b16 %v4575, %v4574
    %v4731 = vpack.c.b16 %v4577, %v4576
    %v4732 = vpack.c.b16 %v4579, %v4578
    %v4733 = vpack.c.b16 %v4581, %v4580
    %v4734 = vpack.c.b16 %v4583, %v4582
    %v4735 = vpack.c.b16 %v4585, %v4584
    %v4736 = vpack.c.b16 %v4587, %v4586
    %v4737 = vpack.c.b16 %v4589, %v4588
    %v4738 = vpack.c.b16 %v4591, %v4590
    %v4739 = vpack.c.b16 %v4593, %v4592
    %v4740 = vpack.c.b16 %v4595, %v4594
    %v4741 = vpack.c.b16 %v4597, %v4596
    %v4742 = vpack.c.b16 %v4599, %v4598
    %v4743 = vpack.c.b16 %v4601, %v4600
    %v4744 = vpack.c.b16 %v4603, %v4602
    %v4745 = vpack.c.b16 %v4605, %v4604
    %v4746 = vpack.c.b16 %v4607, %v4606
    %v4747 = vpack.c.b16 %v4609, %v4608
    %v4748 = vpack.c.b16 %v4611, %v4610
    %v4749 = vpack.c.b16 %v4613, %v4612
    %v4750 = vpack.c.b16 %v4615, %v4614
    %v4751 = vpack.c.b16 %v4617, %v4616
    %v4752 = vpack.c.b16 %v4619, %v4618
    %v4753 = vpack.c.b16 %v4621, %v4620
    %v4754 = vpack.c.b16 %v4623, %v4622
    %v4755 = vpack.c.b16 %v4625, %v4624
    %v4756 = vpack.c.b16 %v4627, %v4626
    %v4757 = vpack.c.b16 %v4629, %v4628
    %v4758 = vpack.c.b16 %v4631, %v4630
    %v4759 = vpack.c.b16 %v4633, %v4632
    %v4760 = vpack.c.b16 %v4635, %v4634
    %v4761 = vpack.c.b16 %v4637, %v4636
    %v4762 = vpack.c.b16 %v4639, %v4638
    %v4763 = vpack.c.b16 %v4641, %v4640
    %v4764 = vpack.c.b16 %v4643, %v4642
    %v4765 = vpack.c.b16 %v4645, %v4644
    %v4766 = vpack.c.b16 %v4647, %v4646
    %v4767 = vpack.c.b16 %v4649, %v4648
    %v4768 = vpack.c.b16 %v4651, %v4650
    %v4769 = vpack.c.b16 %v4653, %v4652
    %v4770 = vpack.c.b16 %v4655, %v4654
    %v4771 = vpack.c.b16 %v4657, %v4656
    %v4772 = vpack.c.b16 %v4659, %v4658
    %v4773 = vpack.c.b16 %v4661, %v4660
    %v4774 = vpack.c.b16 %v4663, %v4662
    %v4775 = vpack.c.b16 %v4665, %v4664
    %v4776 = vpack.c.b16 %v4667, %v4666
    %v4777 = vpack.c.b16 %v4669, %v4668
    %v4778 = vpack.c.b16 %v4671, %v4670
    %v4779 = vpack.c.b16 %v4673, %v4672
    %v4780 = vpack.c.b16 %v4675, %v4674
    %v4781 = vpack.c.b16 %v4677, %v4676
    %v4782 = vpack.c.b16 %v4679, %v4678
    %v4783 = vpack.c.b16 %v4681, %v4680
    %v4784 = vpack.c.b16 %v4683, %v4682
    %v4785 = vpack.c.b16 %v4685, %v4684
    %v4786 = vpack.c.b16 %v4687, %v4686
    %v4787 = vpack.c.b16 %v4689, %v4688
    %v4788 = vpack.c.b16 %v4691, %v4690
    %v4789 = vpack.c.b16 %v4693, %v4692
    %4886 = vmatprep.subr.bf16.mxu0 0
    %4887 = vmatpush1.bf16.msra.mxu0 %v4701
    %4888 = vmatprep.subr.bf16.mxu0 0
    %4889 = vmatpush1.bf16.msra.mxu0 %v4700
    %4890 = vmatprep.subr.bf16.mxu0 0
    %4891 = vmatpush1.bf16.msra.mxu0 %v4699
    %4892 = vmatprep.subr.bf16.mxu0 0
    %4893 = vmatpush1.bf16.msra.mxu0 %v4698
    %4894 = vmatprep.subr.bf16.mxu0 0
    %4895 = vmatpush1.bf16.msra.mxu0 %v4697
    %4896 = vmatprep.subr.bf16.mxu0 0
    %4897 = vmatpush1.bf16.msra.mxu0 %v4696
    %4898 = vmatprep.subr.bf16.mxu0 0
    %4899 = vmatpush1.bf16.msra.mxu0 %v4695
    %4900 = vmatprep.subr.bf16.mxu0 0
    %4901 = vmatpush1.bf16.msra.mxu0 %v4694
    %4902 = vmatprep.subr.bf16.mxu0 0
    %4903 = vmatpush2.bf16.msra.mxu0 %v4709
    %4904 = vmatprep.subr.bf16.mxu0 0
    %4905 = vmatpush2.bf16.msra.mxu0 %v4708
    %4906 = vmatprep.subr.bf16.mxu0 0
    %4907 = vmatpush2.bf16.msra.mxu0 %v4707
    %4908 = vmatprep.subr.bf16.mxu0 0
    %4909 = vmatpush2.bf16.msra.mxu0 %v4706
    %4910 = vmatprep.subr.bf16.mxu0 0
    %4911 = vmatpush2.bf16.msra.mxu0 %v4705
    %4912 = vmatprep.subr.bf16.mxu0 0
    %4913 = vmatpush2.bf16.msra.mxu0 %v4704
    %4914 = vmatprep.subr.bf16.mxu0 0
    %4915 = vmatpush2.bf16.msra.mxu0 %v4703
    %4916 = vmatprep.subr.bf16.mxu0 0
    %4917 = vmatpush2.bf16.msra.mxu0 %v4702
    %4918 = vmatprep.mubr.bf16.mxu0 %v4277
    %4919 = vmatmul.mubr.bf16.gmra.mxu0 %v4276
    %v4920 = vpop.f32.mrf.mxu0
    %v4921 = vadd.f32 %v4308, %v4920
    %v4922 = vpop.f32.mrf.mxu0
    %v4923 = vpop.f32.mrf.mxu0
    %v4924 = vadd.f32 %v4308, %v4923
    %v4925 = vpop.f32.mrf.mxu0
    %4926 = vmatprep.mubr.bf16.mxu0 %v4283
    %4927 = vmatmul.mubr.bf16.gmra.mxu0 %v4282
    %v4928 = vpop.f32.mrf.mxu0
    %v4929 = vpop.f32.mrf.mxu0
    %v4930 = vpop.f32.mrf.mxu0
    %v4931 = vpop.f32.mrf.mxu0
    %4932 = vmatprep.mubr.bf16.mxu0 %v4289
    %4933 = vmatmul.mubr.bf16.gmra.mxu0 %v4288
    %v4934 = vpop.f32.mrf.mxu0
    %v4935 = vadd.f32 %v4308, %v4934
    %v4936 = vpop.f32.mrf.mxu0
    %v4937 = vpop.f32.mrf.mxu0
    %v4938 = vadd.f32 %v4308, %v4937
    %v4939 = vpop.f32.mrf.mxu0
    %4940 = vdwg.mxu0
    %4941 = vmatprep.subr.bf16.mxu0 0
    %4942 = vmatpush1.bf16.msra.mxu0 %v4717
    %4943 = vmatprep.subr.bf16.mxu0 0
    %4944 = vmatpush1.bf16.msra.mxu0 %v4716
    %4945 = vmatprep.subr.bf16.mxu0 0
    %4946 = vmatpush1.bf16.msra.mxu0 %v4715
    %4947 = vmatprep.subr.bf16.mxu0 0
    %4948 = vmatpush1.bf16.msra.mxu0 %v4714
    %4949 = vmatprep.subr.bf16.mxu0 0
    %4950 = vmatpush1.bf16.msra.mxu0 %v4713
    %4951 = vmatprep.subr.bf16.mxu0 0
    %4952 = vmatpush1.bf16.msra.mxu0 %v4712
    %4953 = vmatprep.subr.bf16.mxu0 0
    %4954 = vmatpush1.bf16.msra.mxu0 %v4711
    %4955 = vmatprep.subr.bf16.mxu0 0
    %4956 = vmatpush1.bf16.msra.mxu0 %v4710
    %4957 = vmatprep.subr.bf16.mxu0 0
    %4958 = vmatpush2.bf16.msra.mxu0 %v4725
    %4959 = vmatprep.subr.bf16.mxu0 0
    %4960 = vmatpush2.bf16.msra.mxu0 %v4724
    %4961 = vmatprep.subr.bf16.mxu0 0
    %4962 = vmatpush2.bf16.msra.mxu0 %v4723
    %4963 = vmatprep.subr.bf16.mxu0 0
    %4964 = vmatpush2.bf16.msra.mxu0 %v4722
    %4965 = vmatprep.subr.bf16.mxu0 0
    %4966 = vmatpush2.bf16.msra.mxu0 %v4721
    %4967 = vmatprep.subr.bf16.mxu0 0
    %4968 = vmatpush2.bf16.msra.mxu0 %v4720
    %4969 = vmatprep.subr.bf16.mxu0 0
    %4970 = vmatpush2.bf16.msra.mxu0 %v4719
    %4971 = vmatprep.subr.bf16.mxu0 0
    %4972 = vmatpush2.bf16.msra.mxu0 %v4718
    %4973 = vmatprep.mubr.bf16.mxu0 %v4279
    %4974 = vmatmul.mubr.bf16.gmra.mxu0 %v4278
    %v4975 = vpop.f32.mrf.mxu0
    %v4976 = vadd.f32 %v4921, %v4975
    %v4977 = vpop.f32.mrf.mxu0
    %v4978 = vpop.f32.mrf.mxu0
    %v4979 = vadd.f32 %v4924, %v4978
    %v4980 = vpop.f32.mrf.mxu0
    %4981 = vmatprep.mubr.bf16.mxu0 %v4285
    %4982 = vmatmul.mubr.bf16.gmra.mxu0 %v4284
    %v4983 = vpop.f32.mrf.mxu0
    %v4984 = vpop.f32.mrf.mxu0
    %v4985 = vpop.f32.mrf.mxu0
    %v4986 = vpop.f32.mrf.mxu0
    %4987 = vmatprep.mubr.bf16.mxu0 %v4295
    %4988 = vmatmul.mubr.bf16.gmra.mxu0 %v4294
    %v4989 = vpop.f32.mrf.mxu0
    %v4990 = vadd.f32 %v4935, %v4989
    %v4991 = vpop.f32.mrf.mxu0
    %v4992 = vpop.f32.mrf.mxu0
    %v4993 = vadd.f32 %v4938, %v4992
    %v4994 = vpop.f32.mrf.mxu0
    %4995 = vdwg.mxu0
    %4996 = vmatprep.subr.bf16.mxu0 0
    %4997 = vmatpush1.bf16.msra.mxu0 %v4733
    %4998 = vmatprep.subr.bf16.mxu0 0
    %4999 = vmatpush1.bf16.msra.mxu0 %v4732
    %5000 = vmatprep.subr.bf16.mxu0 0
    %5001 = vmatpush1.bf16.msra.mxu0 %v4731
    %5002 = vmatprep.subr.bf16.mxu0 0
    %5003 = vmatpush1.bf16.msra.mxu0 %v4730
    %5004 = vmatprep.subr.bf16.mxu0 0
    %5005 = vmatpush1.bf16.msra.mxu0 %v4729
    %5006 = vmatprep.subr.bf16.mxu0 0
    %5007 = vmatpush1.bf16.msra.mxu0 %v4728
    %5008 = vmatprep.subr.bf16.mxu0 0
    %5009 = vmatpush1.bf16.msra.mxu0 %v4727
    %5010 = vmatprep.subr.bf16.mxu0 0
    %5011 = vmatpush1.bf16.msra.mxu0 %v4726
    %5012 = vmatprep.subr.bf16.mxu0 0
    %5013 = vmatpush2.bf16.msra.mxu0 %v4741
    %5014 = vmatprep.subr.bf16.mxu0 0
    %5015 = vmatpush2.bf16.msra.mxu0 %v4740
    %5016 = vmatprep.subr.bf16.mxu0 0
    %5017 = vmatpush2.bf16.msra.mxu0 %v4739
    %5018 = vmatprep.subr.bf16.mxu0 0
    %5019 = vmatpush2.bf16.msra.mxu0 %v4738
    %5020 = vmatprep.subr.bf16.mxu0 0
    %5021 = vmatpush2.bf16.msra.mxu0 %v4737
    %5022 = vmatprep.subr.bf16.mxu0 0
    %5023 = vmatpush2.bf16.msra.mxu0 %v4736
    %5024 = vmatprep.subr.bf16.mxu0 0
    %5025 = vmatpush2.bf16.msra.mxu0 %v4735
    %5026 = vmatprep.subr.bf16.mxu0 0
    %5027 = vmatpush2.bf16.msra.mxu0 %v4734
    %5028 = vmatprep.mubr.bf16.mxu0 %v4281
    %5029 = vmatmul.mubr.bf16.gmra.mxu0 %v4280
    %v5030 = vpop.f32.mrf.mxu0
    %v5031 = vadd.f32 %v4976, %v5030
    %v5032 = vpop.f32.mrf.mxu0
    %v5033 = vpop.f32.mrf.mxu0
    %v5034 = vadd.f32 %v4979, %v5033
    %v5035 = vpop.f32.mrf.mxu0
    %5036 = vmatprep.mubr.bf16.mxu0 %v4287
    %5037 = vmatmul.mubr.bf16.gmra.mxu0 %v4286
    %v5038 = vpop.f32.mrf.mxu0
    %v5039 = vpop.f32.mrf.mxu0
    %v5040 = vpop.f32.mrf.mxu0
    %v5041 = vpop.f32.mrf.mxu0
    %5042 = vmatprep.mubr.bf16.mxu0 %v4297
    %5043 = vmatmul.mubr.bf16.gmra.mxu0 %v4296
    %v5044 = vpop.f32.mrf.mxu0
    %v5045 = vadd.f32 %v4990, %v5044
    %v5046 = vpop.f32.mrf.mxu0
    %v5047 = vpop.f32.mrf.mxu0
    %v5048 = vadd.f32 %v4993, %v5047
    %v5049 = vpop.f32.mrf.mxu0
    %5050 = vdwg.mxu0
    %5051 = vmatprep.subr.bf16.mxu0 0
    %5052 = vmatpush1.bf16.msra.mxu0 %v4749
    %5053 = vmatprep.subr.bf16.mxu0 0
    %5054 = vmatpush1.bf16.msra.mxu0 %v4748
    %5055 = vmatprep.subr.bf16.mxu0 0
    %5056 = vmatpush1.bf16.msra.mxu0 %v4747
    %5057 = vmatprep.subr.bf16.mxu0 0
    %5058 = vmatpush1.bf16.msra.mxu0 %v4746
    %5059 = vmatprep.subr.bf16.mxu0 0
    %5060 = vmatpush1.bf16.msra.mxu0 %v4745
    %5061 = vmatprep.subr.bf16.mxu0 0
    %5062 = vmatpush1.bf16.msra.mxu0 %v4744
    %5063 = vmatprep.subr.bf16.mxu0 0
    %5064 = vmatpush1.bf16.msra.mxu0 %v4743
    %5065 = vmatprep.subr.bf16.mxu0 0
    %5066 = vmatpush1.bf16.msra.mxu0 %v4742
    %5067 = vmatprep.subr.bf16.mxu0 0
    %5068 = vmatpush2.bf16.msra.mxu0 %v4757
    %5069 = vmatprep.subr.bf16.mxu0 0
    %5070 = vmatpush2.bf16.msra.mxu0 %v4756
    %5071 = vmatprep.subr.bf16.mxu0 0
    %5072 = vmatpush2.bf16.msra.mxu0 %v4755
    %5073 = vmatprep.subr.bf16.mxu0 0
    %5074 = vmatpush2.bf16.msra.mxu0 %v4754
    %5075 = vmatprep.subr.bf16.mxu0 0
    %5076 = vmatpush2.bf16.msra.mxu0 %v4753
    %5077 = vmatprep.subr.bf16.mxu0 0
    %5078 = vmatpush2.bf16.msra.mxu0 %v4752
    %5079 = vmatprep.subr.bf16.mxu0 0
    %5080 = vmatpush2.bf16.msra.mxu0 %v4751
    %5081 = vmatprep.subr.bf16.mxu0 0
    %5082 = vmatpush2.bf16.msra.mxu0 %v4750
    %5083 = vmatprep.mubr.bf16.mxu0 %v4283
    %5084 = vmatmul.mubr.bf16.gmra.mxu0 %v4282
    %v5085 = vpop.f32.mrf.mxu0
    %v5086 = vadd.f32 %v5031, %v5085
    %v5087 = vpop.f32.mrf.mxu0
    %v5088 = vpop.f32.mrf.mxu0
    %v5089 = vadd.f32 %v5034, %v5088
    %v5090 = vpop.f32.mrf.mxu0
    %5091 = vmatprep.mubr.bf16.mxu0 %v4289
    %5092 = vmatmul.mubr.bf16.gmra.mxu0 %v4288
    %v5093 = vpop.f32.mrf.mxu0
    %v5094 = vpop.f32.mrf.mxu0
    %v5095 = vpop.f32.mrf.mxu0
    %v5096 = vpop.f32.mrf.mxu0
    %5097 = vmatprep.mubr.bf16.mxu0 %v4299
    %5098 = vmatmul.mubr.bf16.gmra.mxu0 %v4298
    %v5099 = vpop.f32.mrf.mxu0
    %v5100 = vadd.f32 %v5045, %v5099
    %v5101 = vpop.f32.mrf.mxu0
    %v5102 = vpop.f32.mrf.mxu0
    %v5103 = vadd.f32 %v5048, %v5102
    %v5104 = vpop.f32.mrf.mxu0
    %5105 = vdwg.mxu0
    %5106 = vmatprep.subr.bf16.mxu0 0
    %5107 = vmatpush1.bf16.msra.mxu0 %v4765
    %5108 = vmatprep.subr.bf16.mxu0 0
    %5109 = vmatpush1.bf16.msra.mxu0 %v4764
    %5110 = vmatprep.subr.bf16.mxu0 0
    %5111 = vmatpush1.bf16.msra.mxu0 %v4763
    %5112 = vmatprep.subr.bf16.mxu0 0
    %5113 = vmatpush1.bf16.msra.mxu0 %v4762
    %5114 = vmatprep.subr.bf16.mxu0 0
    %5115 = vmatpush1.bf16.msra.mxu0 %v4761
    %5116 = vmatprep.subr.bf16.mxu0 0
    %5117 = vmatpush1.bf16.msra.mxu0 %v4760
    %5118 = vmatprep.subr.bf16.mxu0 0
    %5119 = vmatpush1.bf16.msra.mxu0 %v4759
    %5120 = vmatprep.subr.bf16.mxu0 0
    %5121 = vmatpush1.bf16.msra.mxu0 %v4758
    %5122 = vmatprep.subr.bf16.mxu0 0
    %5123 = vmatpush2.bf16.msra.mxu0 %v4773
    %5124 = vmatprep.subr.bf16.mxu0 0
    %5125 = vmatpush2.bf16.msra.mxu0 %v4772
    %5126 = vmatprep.subr.bf16.mxu0 0
    %5127 = vmatpush2.bf16.msra.mxu0 %v4771
    %5128 = vmatprep.subr.bf16.mxu0 0
    %5129 = vmatpush2.bf16.msra.mxu0 %v4770
    %5130 = vmatprep.subr.bf16.mxu0 0
    %5131 = vmatpush2.bf16.msra.mxu0 %v4769
    %5132 = vmatprep.subr.bf16.mxu0 0
    %5133 = vmatpush2.bf16.msra.mxu0 %v4768
    %5134 = vmatprep.subr.bf16.mxu0 0
    %5135 = vmatpush2.bf16.msra.mxu0 %v4767
    %5136 = vmatprep.subr.bf16.mxu0 0
    %5137 = vmatpush2.bf16.msra.mxu0 %v4766
    %5138 = vmatprep.mubr.bf16.mxu0 %v4285
    %5139 = vmatmul.mubr.bf16.gmra.mxu0 %v4284
    %v5140 = vpop.f32.mrf.mxu0
    %v5141 = vadd.f32 %v5086, %v5140
    %v5142 = vpop.f32.mrf.mxu0
    %v5143 = vpop.f32.mrf.mxu0
    %v5144 = vadd.f32 %v5089, %v5143
    %v5145 = vpop.f32.mrf.mxu0
    %5146 = vmatprep.mubr.bf16.mxu0 %v4291
    %5147 = vmatmul.mubr.bf16.gmra.mxu0 %v4290
    %v5148 = vpop.f32.mrf.mxu0
    %v5149 = vpop.f32.mrf.mxu0
    %v5150 = vpop.f32.mrf.mxu0
    %v5151 = vpop.f32.mrf.mxu0
    %5152 = vmatprep.mubr.bf16.mxu0 %v4301
    %5153 = vmatmul.mubr.bf16.gmra.mxu0 %v4300
    %v5154 = vpop.f32.mrf.mxu0
    %v5155 = vadd.f32 %v5100, %v5154
    %v5156 = vpop.f32.mrf.mxu0
    %v5157 = vpop.f32.mrf.mxu0
    %v5158 = vadd.f32 %v5103, %v5157
    %v5159 = vpop.f32.mrf.mxu0
    %5160 = vdwg.mxu0
    %5161 = vmatprep.subr.bf16.mxu0 0
    %5162 = vmatpush1.bf16.msra.mxu0 %v4781
    %5163 = vmatprep.subr.bf16.mxu0 0
    %5164 = vmatpush1.bf16.msra.mxu0 %v4780
    %5165 = vmatprep.subr.bf16.mxu0 0
    %5166 = vmatpush1.bf16.msra.mxu0 %v4779
    %5167 = vmatprep.subr.bf16.mxu0 0
    %5168 = vmatpush1.bf16.msra.mxu0 %v4778
    %5169 = vmatprep.subr.bf16.mxu0 0
    %5170 = vmatpush1.bf16.msra.mxu0 %v4777
    %5171 = vmatprep.subr.bf16.mxu0 0
    %5172 = vmatpush1.bf16.msra.mxu0 %v4776
    %5173 = vmatprep.subr.bf16.mxu0 0
    %5174 = vmatpush1.bf16.msra.mxu0 %v4775
    %5175 = vmatprep.subr.bf16.mxu0 0
    %5176 = vmatpush1.bf16.msra.mxu0 %v4774
    %5177 = vmatprep.subr.bf16.mxu0 0
    %5178 = vmatpush2.bf16.msra.mxu0 %v4789
    %5179 = vmatprep.subr.bf16.mxu0 0
    %5180 = vmatpush2.bf16.msra.mxu0 %v4788
    %5181 = vmatprep.subr.bf16.mxu0 0
    %5182 = vmatpush2.bf16.msra.mxu0 %v4787
    %5183 = vmatprep.subr.bf16.mxu0 0
    %5184 = vmatpush2.bf16.msra.mxu0 %v4786
    %5185 = vmatprep.subr.bf16.mxu0 0
    %5186 = vmatpush2.bf16.msra.mxu0 %v4785
    %5187 = vmatprep.subr.bf16.mxu0 0
    %5188 = vmatpush2.bf16.msra.mxu0 %v4784
    %5189 = vmatprep.subr.bf16.mxu0 0
    %5190 = vmatpush2.bf16.msra.mxu0 %v4783
    %5191 = vmatprep.subr.bf16.mxu0 0
    %5192 = vmatpush2.bf16.msra.mxu0 %v4782
    %5193 = vmatprep.mubr.bf16.mxu0 %v4287
    %5194 = vmatmul.mubr.bf16.gmra.mxu0 %v4286
    %v5195 = vpop.f32.mrf.mxu0
    %v5196 = vadd.f32 %v5141, %v5195
    %v5197 = vpop.f32.mrf.mxu0
    %v5198 = vpop.f32.mrf.mxu0
    %v5199 = vadd.f32 %v5144, %v5198
    %v5200 = vpop.f32.mrf.mxu0
    %5201 = vmatprep.mubr.bf16.mxu0 %v4293
    %5202 = vmatmul.mubr.bf16.gmra.mxu0 %v4292
    %v5203 = vpop.f32.mrf.mxu0
    %v5204 = vpop.f32.mrf.mxu0
    %v5205 = vpop.f32.mrf.mxu0
    %v5206 = vpop.f32.mrf.mxu0
    %5207 = vmatprep.mubr.bf16.mxu0 %v4303
    %5208 = vmatmul.mubr.bf16.gmra.mxu0 %v4302
    %v5209 = vpop.f32.mrf.mxu0
    %v5210 = vadd.f32 %v5155, %v5209
    %v5211 = vpop.f32.mrf.mxu0
    %v5212 = vpop.f32.mrf.mxu0
    %v5213 = vadd.f32 %v5158, %v5212
    %v5214 = vpop.f32.mrf.mxu0
    %5215 = vdwg.mxu0
    %v5216 = vmax.f32 %v5196, 0.0
    %v5217 = vmax.f32 %v5199, 0.0
    %v5218 = vmax.f32 %v5210, 0.0
    %v5219 = vmax.f32 %v5213, 0.0
    %v5220 = vadd.f32 %v2660, %v5216
    %v5221 = vadd.f32 %v2661, %v5217
    %v5222 = vadd.f32 %v2662, %v5218
    %v5223 = vadd.f32 %v2663, %v5219
    %5224 = vst [vmem:[%s15] sm:$0xff] %v2660
    %5225 = vst [vmem:[%s15 + $0x8] sm:$0x3] %v2661
    %5226 = vst [vmem:[%s16] sm:$0xff] %v5216
    %5227 = vst [vmem:[%s16 + $0x8] sm:$0x3] %v5217
    %5228 = vst [vmem:[%s14] sm:$0xff] %v5220
    %5229 = vst [vmem:[%s14 + $0x8] sm:$0x3] %v5221
    %s5230 = scalar_lea.vmem %s15, 16
    %5231 = vst [vmem:[%s5230] sm:$0xff] %v2662
    %5232 = vst [vmem:[%s5230 + $0x8] sm:$0x3] %v2663
    %s5233 = scalar_lea.vmem %s16, 16
    %5234 = vst [vmem:[%s5233] sm:$0xff] %v5218
    %5235 = vst [vmem:[%s5233 + $0x8] sm:$0x3] %v5219
    %s5236 = scalar_lea.vmem %s14, 16
    %5237 = vst [vmem:[%s5236] sm:$0xff] %v5222
    %5238 = vst [vmem:[%s5236 + $0x8] sm:$0x3] %v5223
    // Predicated region
    $region74: #{mlnet_forward.1} parent=1 // pred_check
      _
    $region75: #{mlnet_forward.1} parent=1 // pred_check_branch
      %5240 = sbr.rel (0) target = $region77
    $region76: #{mlnet_forward.1} parent=1 // pred_region
      _
    $region77: #{mlnet_forward.1} parent=1 // pred_fallthru
      _
    // Predicated region
    $region78: #{mlnet_forward.1} parent=1 // pred_check
      _
    $region79: #{mlnet_forward.1} parent=1 // pred_check_branch
      %5242 = sbr.rel (0) target = $region81
    $region80: #{mlnet_forward.1} parent=1 // pred_region
      _
    $region81: #{mlnet_forward.1} parent=1 // pred_fallthru
      _
    // Predicated region
    $region82: #{mlnet_forward.1} parent=1 // pred_check
      _
    $region83: #{mlnet_forward.1} parent=1 // pred_check_branch
      %5244 = sbr.rel (0) target = $region85
    $region84: #{mlnet_forward.1} parent=1 // pred_region
      _
    $region85: #{mlnet_forward.1} parent=1 // pred_fallthru
      _
    // Predicated region
    $region86: #{mlnet_forward.1} parent=1 // pred_check
      _
    $region87: #{mlnet_forward.1} parent=1 // pred_check_branch
      %5246 = sbr.rel (0) target = $region89
    $region88: #{mlnet_forward.1} parent=1 // pred_region
      _
    $region89: #{mlnet_forward.1} parent=1 // pred_fallthru
      _
    // Predicated region
    $region90: #{mlnet_forward.1} parent=1 // pred_check
      _
    $region91: #{mlnet_forward.1} parent=1 // pred_check_branch
      %5248 = sbr.rel (0) target = $region93
    $region92: #{mlnet_forward.1} parent=1 // pred_region
      _
    $region93: #{mlnet_forward.1} parent=1 // pred_fallthru
      _
    // Predicated region
    $region94: #{mlnet_forward.1} parent=1 // pred_check
      _
    $region95: #{mlnet_forward.1} parent=1 // pred_check_branch
      %5250 = sbr.rel (0) target = $region97
    $region96: #{mlnet_forward.1} parent=1 // pred_region
      _
    $region97: #{mlnet_forward.1} parent=1 // pred_fallthru
      _
    %5251 = vsyncpa [#allocation3], 1
    %5252 = vsyncpa [#allocation5], 1
    %5253 = vsyncpa [#allocation8], 1

</llo_original>
